<compile_context>
chip_gen: v7x
topology: tpu7x:2x2x1
jax: 0.10.0
libtpu: 0.0.40
codegen_flags: <defaults>
</compile_context>

<pallas_src>
import numpy as np
import jax
import jax.numpy as jnp
from jax.experimental import pallas as pl
from jax.experimental.pallas import tpu as pltpu

NEG_SLOPE = 0.01   # nn.LeakyReLU default negative_slope
BN_EPS = 1e-5      # nn.BatchNorm2d default eps
EXPANSION = 4
LANE = 128


def _round_up(x, m):
    return (x + m - 1) // m * m


def _leaky(y):
    return jnp.where(y > 0, y, NEG_SLOPE * y)


# ----------------------------- Pallas kernel --------------------------------

def _bottleneck_kernel(x_ref, w1_ref, b1_ref, w2_ref, b2_ref, w3_ref, b3_ref,
                       o_ref, cat_ref):
    """One grid step: Bt images, conv1+bn1+act -> conv2+bn2+act -> conv3+bn3
    + residual + act, everything VMEM/vreg resident."""
    Bt, H, W, Cin = x_ref.shape
    wp = w1_ref.shape[1]            # lane-padded bottleneck width
    Cout = w3_ref.shape[1]
    HP = H + 2
    M = Bt * H * W

    x = x_ref[...]                                     # (Bt,H,W,Cin) bf16
    x2d = x.reshape(M, Cin)

    # ---- conv1 (1x1) + folded bn1 + LeakyReLU; single bf16 cast of out1 ----
    y1 = jnp.dot(x2d, w1_ref[...],
                 preferred_element_type=jnp.float32) + b1_ref[...]
    out1 = _leaky(y1).astype(w2_ref.dtype).reshape(Bt, H, W, wp)

    # ---- assemble conv2 operand in VMEM scratch -----------------------------
    # cat_ref[b, r, w, dx*wp + c] = zero-padded out1[b, r-1, w+dx-1, c]
    # so each dy tap is a cheap outer-dim slice and the three dx shifts become
    # one deep-K (3*wp) contraction.  Frame rows / corner columns are re-zeroed
    # every step (cheap) so the grid axis stays safely "parallel".
    zrow = jnp.zeros((Bt, 1, W, 3 * wp), cat_ref.dtype)
    cat_ref[:, 0:1, :, :] = zrow
    cat_ref[:, HP - 1:HP, :, :] = zrow
    zcol = jnp.zeros((Bt, HP, 1, wp), cat_ref.dtype)
    cat_ref[:, :, 0:1, 0:wp] = zcol                       # dx=0 block, col 0
    cat_ref[:, :, W - 1:W, 2 * wp:3 * wp] = zcol          # dx=2 block, col W-1
    cat_ref[:, 1:1 + H, 1:W, 0:wp] = out1[:, :, 0:W - 1, :]       # dx = 0
    cat_ref[:, 1:1 + H, :, wp:2 * wp] = out1                       # dx = 1
    cat_ref[:, 1:1 + H, 0:W - 1, 2 * wp:3 * wp] = out1[:, :, 1:W, :]  # dx = 2

    # ---- conv2 (3x3, stride=1, pad=1) + folded bn2 + LeakyReLU --------------
    # 3 deep matmuls (K = 3*wp) with f32 accumulation; b2 folded into the first.
    y2 = jnp.dot(cat_ref[:, 0:H, :, :].reshape(M, 3 * wp), w2_ref[0],
                 preferred_element_type=jnp.float32) + b2_ref[...]
    for dy in (1, 2):
        y2 = y2 + jnp.dot(cat_ref[:, dy:dy + H, :, :].reshape(M, 3 * wp),
                          w2_ref[dy], preferred_element_type=jnp.float32)
    out2 = _leaky(y2).astype(w3_ref.dtype)

    # ---- conv3 (1x1) + folded bn3 + identity residual + LeakyReLU -----------
    y3 = jnp.dot(out2, w3_ref[...],
                 preferred_element_type=jnp.float32) + b3_ref[...]
    y3 = y3 + x2d.astype(jnp.float32)          # identity (unshifted block)
    o_ref[...] = _leaky(y3).reshape(Bt, H, W, Cout).astype(o_ref.dtype)


# ------------------------------- JAX glue ------------------------------------

def _fold_bn(gamma, beta, mean, var):
    scale = gamma / jnp.sqrt(var + BN_EPS)
    bias = beta - mean * scale
    return scale, bias


def _pick_images_per_step(n, hw, target_rows=256, max_rows=4096):
    """Smallest divisor of n giving >= target_rows MXU rows per grid step."""
    best = 1
    for d in range(1, n + 1):
        if n % d:
            continue
        if d * hw > max_rows:
            break
        best = d
        if d * hw >= target_rows:
            break
    return best


def _vmem_limit_bytes(bt, h, w, cin, cout, wp, compute_dtype, out_dtype):
    cb = jnp.dtype(compute_dtype).itemsize
    ob = jnp.dtype(out_dtype).itemsize
    m = bt * h * w
    dma = 2 * (m * cin * cb + m * cout * ob)                       # in/out blocks (dbl-buffered)
    dma += 2 * ((cin * wp + 9 * wp * wp + wp * cout) * cb
                + (2 * wp + cout) * 4)                             # weights + biases
    scratch = bt * (h + 2) * w * 3 * wp * cb                       # cat buffer
    temps = m * (wp * 4 + wp * cb + 3 * wp * cb + max(cin, cout) * 4 + cin * cb)
    est = int(1.5 * (dma + scratch + temps))
    return max(32 * 1024 * 1024, min(est, 64 * 1024 * 1024))


def bottleneck_forward_nhwc(x_nhwc, params, *, compute_dtype=jnp.bfloat16,
                            out_dtype=None, images_per_step=None,
                            vmem_limit_bytes=None):
    """Fused Bottleneck forward on an NHWC tensor (channels on TPU lanes).

    Matmul operands are bf16 (f32 accumulation); the residual is added from
    the bf16-cast input, so expect ~1e-2-level deviation from a pure-f32
    reference.  Set out_dtype=jnp.bfloat16 to halve the output writeback bytes
    (useful on v5e, which is memory-bound for this block).
    """
    N, H, W, Cin = x_nhwc.shape
    out_dtype = x_nhwc.dtype if out_dtype is None else out_dtype

    # ---- host-side prep: fold BN into conv weights, lane-pad internal width -
    s1, b1 = _fold_bn(*params["bn1"])
    s2, b2 = _fold_bn(*params["bn2"])
    s3, b3 = _fold_bn(*params["bn3"])

    width = params["w1"].shape[0]
    Cout = params["w3"].shape[0]
    assert Cout == Cin, "identity residual requires inplanes == planes*expansion"

    # Zero-padding the internal width is an exact numerical no-op (padded out1
    # / out2 channels are exactly 0 and their w2/w3 rows are 0).
    wp = width if width >= LANE else _round_up(width, LANE)
    pad = wp - width

    w1f = params["w1"][:, :, 0, 0].T * s1[None, :]                   # (Cin, width)
    w1f = jnp.pad(w1f, ((0, 0), (0, pad))).astype(compute_dtype)     # (Cin, wp)
    b1p = jnp.pad(b1, (0, pad)).reshape(1, wp).astype(jnp.float32)

    w2f = jnp.transpose(params["w2"], (2, 3, 1, 0)) * s2[None, None, None, :]
    w2f = jnp.pad(w2f, ((0, 0), (0, 0), (0, pad), (0, pad)))         # (3,3,wp,wp)
    w2c = w2f.reshape(3, 3 * wp, wp).astype(compute_dtype)           # K-concat over dx
    b2p = jnp.pad(b2, (0, pad)).reshape(1, wp).astype(jnp.float32)

    w3f = params["w3"][:, :, 0, 0].T * s3[None, :]                   # (width, Cout)
    w3f = jnp.pad(w3f, ((0, pad), (0, 0))).astype(compute_dtype)     # (wp, Cout)
    b3p = b3.reshape(1, Cout).astype(jnp.float32)

    Bt = images_per_step or _pick_images_per_step(N, H * W)
    assert N % Bt == 0, "images_per_step must divide the batch"

    if vmem_limit_bytes is None:
        vmem_limit_bytes = _vmem_limit_bytes(Bt, H, W, Cin, Cout, wp,
                                             compute_dtype, out_dtype)

    xc = x_nhwc.astype(compute_dtype)   # no host-side spatial pad anymore

    return pl.pallas_call(
        _bottleneck_kernel,
        out_shape=jax.ShapeDtypeStruct((N, H, W, Cout), out_dtype),
        grid_spec=pltpu.PrefetchScalarGridSpec(
            num_scalar_prefetch=0,
            grid=(N // Bt,),                           # Bt images per step
            in_specs=[
                pl.BlockSpec((Bt, H, W, Cin), lambda n: (n, 0, 0, 0)),
                pl.BlockSpec((Cin, wp), lambda n: (0, 0)),            # w1'
                pl.BlockSpec((1, wp), lambda n: (0, 0)),              # b1
                pl.BlockSpec((3, 3 * wp, wp), lambda n: (0, 0, 0)),   # w2' (dx-concat)
                pl.BlockSpec((1, wp), lambda n: (0, 0)),              # b2
                pl.BlockSpec((wp, Cout), lambda n: (0, 0)),           # w3'
                pl.BlockSpec((1, Cout), lambda n: (0, 0)),            # b3
            ],
            out_specs=pl.BlockSpec((Bt, H, W, Cout), lambda n: (n, 0, 0, 0)),
            scratch_shapes=[
                pltpu.VMEM((Bt, H + 2, W, 3 * wp), compute_dtype),    # haloed taps
            ],
        ),
        compiler_params=pltpu.CompilerParams(
            dimension_semantics=("parallel",),          # shard batch over TCs
            vmem_limit_bytes=vmem_limit_bytes),
    )(xc, w1f, b1p, w2c, b2p, w3f, b3p)


def bottleneck_forward(x_nchw, params, **kw):
    # NCHW boundary to match the PyTorch module.  NHWC callers should use
    # bottleneck_forward_nhwc directly and skip both full-tensor transposes.
    x_nhwc = jnp.transpose(x_nchw, (0, 2, 3, 1))
    out = bottleneck_forward_nhwc(x_nhwc, params, **kw)
    return jnp.transpose(out, (0, 3, 1, 2))


def init_bottleneck_params(key, inplanes, planes, base_width=64, groups=1):
    width = int(planes * (base_width / 64.0)) * groups
    cout = planes * EXPANSION
    ks = jax.random.split(key, 6)

    def bn_params(k, c):
        k1, k2, k3 = jax.random.split(k, 3)
        gamma = 1.0 + 0.1 * jax.random.normal(k1, (c,), jnp.float32)
        beta = 0.1 * jax.random.normal(k2, (c,), jnp.float32)
        mean = 0.1 * jax.random.normal(k3, (c,), jnp.float32)
        var = jnp.ones((c,), jnp.float32)
        return (gamma, beta, mean, var)

    return {
        # PyTorch conv weight layout: (Cout, Cin, kH, kW)
        "w1": 0.1 * jax.random.normal(ks[0], (width, inplanes, 1, 1), jnp.float32),
        "bn1": bn_params(ks[1], width),
        "w2": 0.1 * jax.random.normal(ks[2], (width, width, 3, 3), jnp.float32),
        "bn2": bn_params(ks[3], width),
        "w3": 0.1 * jax.random.normal(ks[4], (cout, width, 1, 1), jnp.float32),
        "bn3": bn_params(ks[5], cout),
    }


# ------------------------- pure-JAX reference check --------------------------

def bottleneck_reference(x, params):
    def conv(h, w, pad):
        return jax.lax.conv_general_dilated(
            h, w, window_strides=(1, 1), padding=pad,
            dimension_numbers=("NCHW", "OIHW", "NCHW"),
            precision=jax.lax.Precision.HIGHEST)

    def bn(h, prm):
        gamma, beta, mean, var = prm
        s = gamma / jnp.sqrt(var + BN_EPS)
        b = beta - mean * s
        return h * s[None, :, None, None] + b[None, :, None, None]

    def act(h):
        return jnp.where(h > 0, h, NEG_SLOPE * h)

    out = act(bn(conv(x, params["w1"], [(0, 0), (0, 0)]), params["bn1"]))
    out = act(bn(conv(out, params["w2"], [(1, 1), (1, 1)]), params["bn2"]))
    out = bn(conv(out, params["w3"], [(0, 0), (0, 0)]), params["bn3"])
    return act(out + x)


if __name__ == "__main__":
    key = jax.random.PRNGKey(0)
    kx, kp = jax.random.split(key)

    # inplanes must equal planes * expansion because downsample=None (identity add).
    N, inplanes, planes, H, W = 2, 16, 4, 16, 16
    x = jax.random.normal(kx, (N, inplanes, H, W), jnp.float32)
    params = init_bottleneck_params(kp, inplanes, planes)

    out = jax.block_until_ready(bottleneck_forward(x, params))
    assert out.shape == (N, planes * EXPANSION, H, W)

    ref = jax.block_until_ready(bottleneck_reference(x, params))
    # bf16 MXU operands / bf16 residual (f32 accumulation) vs f32 HIGHEST reference.
    np.testing.assert_allclose(np.asarray(out), np.asarray(ref), rtol=5e-2, atol=5e-2)

    print("KERNEL_OK")
</pallas_src>

<mosaic_0001>
module attributes {stable_mosaic.version = 11 : i64} {
  func.func @_bottleneck_kernel(%arg0: i32, %arg1: memref<1x16x16x16xbf16, #tpu.memory_space<vmem>>, %arg2: memref<16x128xbf16, #tpu.memory_space<vmem>>, %arg3: memref<1x128xf32, #tpu.memory_space<vmem>>, %arg4: memref<3x384x128xbf16, #tpu.memory_space<vmem>>, %arg5: memref<1x128xf32, #tpu.memory_space<vmem>>, %arg6: memref<128x16xbf16, #tpu.memory_space<vmem>>, %arg7: memref<1x16xf32, #tpu.memory_space<vmem>>, %arg8: memref<1x16x16x16xf32, #tpu.memory_space<vmem>>, %arg9: memref<1x18x16x384xbf16, #tpu.memory_space<vmem>>) attributes {dimension_semantics = [#tpu.dimension_semantics<parallel>], iteration_bounds = array<i64: 2>, scalar_prefetch = 0 : i64, scratch_operands = 1 : i64, tpu.core_type = #tpu.core_type<tc>, window_params = [{transform_indices = @transform_0, window_bounds = array<i64: 1, 16, 16, 16>}, {pipeline_mode = #tpu.pipeline_mode<synchronous>, transform_indices = @transform_1, window_bounds = array<i64: 16, 128>}, {pipeline_mode = #tpu.pipeline_mode<synchronous>, transform_indices = @transform_2, window_bounds = array<i64: 1, 128>}, {pipeline_mode = #tpu.pipeline_mode<synchronous>, transform_indices = @transform_3, window_bounds = array<i64: 3, 384, 128>}, {pipeline_mode = #tpu.pipeline_mode<synchronous>, transform_indices = @transform_4, window_bounds = array<i64: 1, 128>}, {pipeline_mode = #tpu.pipeline_mode<synchronous>, transform_indices = @transform_5, window_bounds = array<i64: 128, 16>}, {pipeline_mode = #tpu.pipeline_mode<synchronous>, transform_indices = @transform_6, window_bounds = array<i64: 1, 16>}, {transform_indices = @transform_7, window_bounds = array<i64: 1, 16, 16, 16>}]} {
    %c0 = arith.constant 0 : index
    %c0_0 = arith.constant 0 : index
    %c0_1 = arith.constant 0 : index
    %c0_2 = arith.constant 0 : index
    %0 = vector.load %arg1[%c0, %c0_0, %c0_1, %c0_2] : memref<1x16x16x16xbf16, #tpu.memory_space<vmem>>, vector<1x16x16x16xbf16>
    %1 = vector.shape_cast %0 : vector<1x16x16x16xbf16> to vector<256x16xbf16>
    %c0_3 = arith.constant 0 : index
    %c0_4 = arith.constant 0 : index
    %2 = vector.load %arg2[%c0_3, %c0_4] : memref<16x128xbf16, #tpu.memory_space<vmem>>, vector<16x128xbf16>
    %cst = arith.constant dense<0.000000e+00> : vector<256x128xf32>
    %3 = tpu.matmul %1, %2, %cst {dimension_numbers = #tpu.dot_dimension_numbers<[1], [0], [0], [1], [0, 0, 1, 1], [], []>} : vector<256x16xbf16>, vector<16x128xbf16>, vector<256x128xf32> -> vector<256x128xf32>
    %c0_5 = arith.constant 0 : index
    %c0_6 = arith.constant 0 : index
    %4 = vector.load %arg3[%c0_5, %c0_6] : memref<1x128xf32, #tpu.memory_space<vmem>>, vector<1x128xf32>
    %5 = vector.broadcast %4 : vector<1x128xf32> to vector<256x128xf32>
    %6 = arith.addf %3, %5 : vector<256x128xf32>
    %cst_7 = arith.constant 0.000000e+00 : f32
    %7 = vector.broadcast %cst_7 : f32 to vector<256x128xf32>
    %8 = arith.cmpf ogt, %6, %7 : vector<256x128xf32>
    %cst_8 = arith.constant 0.00999999977 : f32
    %9 = vector.broadcast %cst_8 : f32 to vector<256x128xf32>
    %10 = arith.mulf %9, %6 : vector<256x128xf32>
    %11 = arith.select %8, %6, %10 : vector<256x128xi1>, vector<256x128xf32>
    %12 = arith.truncf %11 : vector<256x128xf32> to vector<256x128xbf16>
    %13 = vector.shape_cast %12 : vector<256x128xbf16> to vector<1x16x16x128xbf16>
    %cst_9 = arith.constant 0.000000e+00 : bf16
    %14 = vector.broadcast %cst_9 : bf16 to vector<1x1x16x384xbf16>
    %c0_10 = arith.constant 0 : index
    %c0_11 = arith.constant 0 : index
    %c0_12 = arith.constant 0 : index
    %c0_13 = arith.constant 0 : index
    %15 = vector.load %arg9[%c0_10, %c0_11, %c0_12, %c0_13] : memref<1x18x16x384xbf16, #tpu.memory_space<vmem>>, vector<1x1x16x384xbf16>
    tpu.vector_store %arg9[%c0_10, %c0_11, %c0_12, %c0_13], %14 {strides = array<i32>} : memref<1x18x16x384xbf16, #tpu.memory_space<vmem>>, vector<1x1x16x384xbf16>,
    %c0_14 = arith.constant 0 : index
    %c17 = arith.constant 17 : index
    %c0_15 = arith.constant 0 : index
    %c0_16 = arith.constant 0 : index
    %16 = vector.load %arg9[%c0_14, %c17, %c0_15, %c0_16] : memref<1x18x16x384xbf16, #tpu.memory_space<vmem>>, vector<1x1x16x384xbf16>
    tpu.vector_store %arg9[%c0_14, %c17, %c0_15, %c0_16], %14 {strides = array<i32>} : memref<1x18x16x384xbf16, #tpu.memory_space<vmem>>, vector<1x1x16x384xbf16>,
    %cst_17 = arith.constant 0.000000e+00 : bf16
    %17 = vector.broadcast %cst_17 : bf16 to vector<1x18x1x128xbf16>
    %c0_18 = arith.constant 0 : index
    %c0_19 = arith.constant 0 : index
    %c0_20 = arith.constant 0 : index
    %c0_21 = arith.constant 0 : index
    %18 = vector.load %arg9[%c0_18, %c0_19, %c0_20, %c0_21] : memref<1x18x16x384xbf16, #tpu.memory_space<vmem>>, vector<1x18x1x128xbf16>
    tpu.vector_store %arg9[%c0_18, %c0_19, %c0_20, %c0_21], %17 {strides = array<i32>} : memref<1x18x16x384xbf16, #tpu.memory_space<vmem>>, vector<1x18x1x128xbf16>,
    %c0_22 = arith.constant 0 : index
    %c0_23 = arith.constant 0 : index
    %c15 = arith.constant 15 : index
    %c256 = arith.constant 256 : index
    %19 = vector.load %arg9[%c0_22, %c0_23, %c15, %c256] : memref<1x18x16x384xbf16, #tpu.memory_space<vmem>>, vector<1x18x1x128xbf16>
    tpu.vector_store %arg9[%c0_22, %c0_23, %c15, %c256], %17 {strides = array<i32>} : memref<1x18x16x384xbf16, #tpu.memory_space<vmem>>, vector<1x18x1x128xbf16>,
    %20 = vector.extract_strided_slice %13 {offsets = [0, 0, 0, 0], sizes = [1, 16, 15, 128], strides = [1, 1, 1, 1]} : vector<1x16x16x128xbf16> to vector<1x16x15x128xbf16>
    %c0_24 = arith.constant 0 : index
    %c1 = arith.constant 1 : index
    %c1_25 = arith.constant 1 : index
    %c0_26 = arith.constant 0 : index
    %21 = vector.load %arg9[%c0_24, %c1, %c1_25, %c0_26] : memref<1x18x16x384xbf16, #tpu.memory_space<vmem>>, vector<1x16x15x128xbf16>
    tpu.vector_store %arg9[%c0_24, %c1, %c1_25, %c0_26], %20 {strides = array<i32>} : memref<1x18x16x384xbf16, #tpu.memory_space<vmem>>, vector<1x16x15x128xbf16>,
    %c0_27 = arith.constant 0 : index
    %c1_28 = arith.constant 1 : index
    %c0_29 = arith.constant 0 : index
    %c128 = arith.constant 128 : index
    %22 = vector.load %arg9[%c0_27, %c1_28, %c0_29, %c128] : memref<1x18x16x384xbf16, #tpu.memory_space<vmem>>, vector<1x16x16x128xbf16>
    tpu.vector_store %arg9[%c0_27, %c1_28, %c0_29, %c128], %13 {strides = array<i32>} : memref<1x18x16x384xbf16, #tpu.memory_space<vmem>>, vector<1x16x16x128xbf16>,
    %23 = vector.extract_strided_slice %13 {offsets = [0, 0, 1, 0], sizes = [1, 16, 15, 128], strides = [1, 1, 1, 1]} : vector<1x16x16x128xbf16> to vector<1x16x15x128xbf16>
    %c0_30 = arith.constant 0 : index
    %c1_31 = arith.constant 1 : index
    %c0_32 = arith.constant 0 : index
    %c256_33 = arith.constant 256 : index
    %24 = vector.load %arg9[%c0_30, %c1_31, %c0_32, %c256_33] : memref<1x18x16x384xbf16, #tpu.memory_space<vmem>>, vector<1x16x15x128xbf16>
    tpu.vector_store %arg9[%c0_30, %c1_31, %c0_32, %c256_33], %23 {strides = array<i32>} : memref<1x18x16x384xbf16, #tpu.memory_space<vmem>>, vector<1x16x15x128xbf16>,
    %c0_34 = arith.constant 0 : index
    %c0_35 = arith.constant 0 : index
    %c0_36 = arith.constant 0 : index
    %c0_37 = arith.constant 0 : index
    %25 = vector.load %arg9[%c0_34, %c0_35, %c0_36, %c0_37] : memref<1x18x16x384xbf16, #tpu.memory_space<vmem>>, vector<1x16x16x384xbf16>
    %26 = vector.shape_cast %25 : vector<1x16x16x384xbf16> to vector<256x384xbf16>
    %c0_38 = arith.constant 0 : index
    %c0_39 = arith.constant 0 : index
    %c0_40 = arith.constant 0 : index
    %27 = vector.load %arg4[%c0_38, %c0_39, %c0_40] : memref<3x384x128xbf16, #tpu.memory_space<vmem>>, vector<1x384x128xbf16>
    %28 = vector.shape_cast %27 : vector<1x384x128xbf16> to vector<384x128xbf16>
    %cst_41 = arith.constant dense<0.000000e+00> : vector<256x128xf32>
    %29 = tpu.matmul %26, %28, %cst_41 {dimension_numbers = #tpu.dot_dimension_numbers<[1], [0], [0], [1], [0, 0, 1, 1], [], []>} : vector<256x384xbf16>, vector<384x128xbf16>, vector<256x128xf32> -> vector<256x128xf32>
    %c0_42 = arith.constant 0 : index
    %c0_43 = arith.constant 0 : index
    %30 = vector.load %arg5[%c0_42, %c0_43] : memref<1x128xf32, #tpu.memory_space<vmem>>, vector<1x128xf32>
    %31 = vector.broadcast %30 : vector<1x128xf32> to vector<256x128xf32>
    %32 = arith.addf %29, %31 : vector<256x128xf32>
    %c0_44 = arith.constant 0 : index
    %c1_45 = arith.constant 1 : index
    %c0_46 = arith.constant 0 : index
    %c0_47 = arith.constant 0 : index
    %33 = vector.load %arg9[%c0_44, %c1_45, %c0_46, %c0_47] : memref<1x18x16x384xbf16, #tpu.memory_space<vmem>>, vector<1x16x16x384xbf16>
    %34 = vector.shape_cast %33 : vector<1x16x16x384xbf16> to vector<256x384xbf16>
    %c1_48 = arith.constant 1 : index
    %c0_49 = arith.constant 0 : index
    %c0_50 = arith.constant 0 : index
    %35 = vector.load %arg4[%c1_48, %c0_49, %c0_50] : memref<3x384x128xbf16, #tpu.memory_space<vmem>>, vector<1x384x128xbf16>
    %36 = vector.shape_cast %35 : vector<1x384x128xbf16> to vector<384x128xbf16>
    %cst_51 = arith.constant dense<0.000000e+00> : vector<256x128xf32>
    %37 = tpu.matmul %34, %36, %cst_51 {dimension_numbers = #tpu.dot_dimension_numbers<[1], [0], [0], [1], [0, 0, 1, 1], [], []>} : vector<256x384xbf16>, vector<384x128xbf16>, vector<256x128xf32> -> vector<256x128xf32>
    %38 = arith.addf %32, %37 : vector<256x128xf32>
    %c0_52 = arith.constant 0 : index
    %c2 = arith.constant 2 : index
    %c0_53 = arith.constant 0 : index
    %c0_54 = arith.constant 0 : index
    %39 = vector.load %arg9[%c0_52, %c2, %c0_53, %c0_54] : memref<1x18x16x384xbf16, #tpu.memory_space<vmem>>, vector<1x16x16x384xbf16>
    %40 = vector.shape_cast %39 : vector<1x16x16x384xbf16> to vector<256x384xbf16>
    %c2_55 = arith.constant 2 : index
    %c0_56 = arith.constant 0 : index
    %c0_57 = arith.constant 0 : index
    %41 = vector.load %arg4[%c2_55, %c0_56, %c0_57] : memref<3x384x128xbf16, #tpu.memory_space<vmem>>, vector<1x384x128xbf16>
    %42 = vector.shape_cast %41 : vector<1x384x128xbf16> to vector<384x128xbf16>
    %cst_58 = arith.constant dense<0.000000e+00> : vector<256x128xf32>
    %43 = tpu.matmul %40, %42, %cst_58 {dimension_numbers = #tpu.dot_dimension_numbers<[1], [0], [0], [1], [0, 0, 1, 1], [], []>} : vector<256x384xbf16>, vector<384x128xbf16>, vector<256x128xf32> -> vector<256x128xf32>
    %44 = arith.addf %38, %43 : vector<256x128xf32>
    %cst_59 = arith.constant 0.000000e+00 : f32
    %45 = vector.broadcast %cst_59 : f32 to vector<256x128xf32>
    %46 = arith.cmpf ogt, %44, %45 : vector<256x128xf32>
    %cst_60 = arith.constant 0.00999999977 : f32
    %47 = vector.broadcast %cst_60 : f32 to vector<256x128xf32>
    %48 = arith.mulf %47, %44 : vector<256x128xf32>
    %49 = arith.select %46, %44, %48 : vector<256x128xi1>, vector<256x128xf32>
    %50 = arith.truncf %49 : vector<256x128xf32> to vector<256x128xbf16>
    %c0_61 = arith.constant 0 : index
    %c0_62 = arith.constant 0 : index
    %51 = vector.load %arg6[%c0_61, %c0_62] : memref<128x16xbf16, #tpu.memory_space<vmem>>, vector<128x16xbf16>
    %cst_63 = arith.constant dense<0.000000e+00> : vector<256x16xf32>
    %52 = tpu.matmul %50, %51, %cst_63 {dimension_numbers = #tpu.dot_dimension_numbers<[1], [0], [0], [1], [0, 0, 1, 1], [], []>} : vector<256x128xbf16>, vector<128x16xbf16>, vector<256x16xf32> -> vector<256x16xf32>
    %c0_64 = arith.constant 0 : index
    %c0_65 = arith.constant 0 : index
    %53 = vector.load %arg7[%c0_64, %c0_65] : memref<1x16xf32, #tpu.memory_space<vmem>>, vector<1x16xf32>
    %54 = vector.broadcast %53 : vector<1x16xf32> to vector<256x16xf32>
    %55 = arith.addf %52, %54 : vector<256x16xf32>
    %56 = arith.extf %1 : vector<256x16xbf16> to vector<256x16xf32>
    %57 = arith.addf %55, %56 : vector<256x16xf32>
    %cst_66 = arith.constant 0.000000e+00 : f32
    %58 = vector.broadcast %cst_66 : f32 to vector<256x16xf32>
    %59 = arith.cmpf ogt, %57, %58 : vector<256x16xf32>
    %cst_67 = arith.constant 0.00999999977 : f32
    %60 = vector.broadcast %cst_67 : f32 to vector<256x16xf32>
    %61 = arith.mulf %60, %57 : vector<256x16xf32>
    %62 = arith.select %59, %57, %61 : vector<256x16xi1>, vector<256x16xf32>
    %63 = vector.shape_cast %62 : vector<256x16xf32> to vector<1x16x16x16xf32>
    %c0_68 = arith.constant 0 : index
    %c0_69 = arith.constant 0 : index
    %c0_70 = arith.constant 0 : index
    %c0_71 = arith.constant 0 : index
    %64 = vector.load %arg8[%c0_68, %c0_69, %c0_70, %c0_71] : memref<1x16x16x16xf32, #tpu.memory_space<vmem>>, vector<1x16x16x16xf32>
    tpu.vector_store %arg8[%c0_68, %c0_69, %c0_70, %c0_71], %63 {strides = array<i32>} : memref<1x16x16x16xf32, #tpu.memory_space<vmem>>, vector<1x16x16x16xf32>,
    return
  }
  func.func @transform_0(%arg0: i32) -> (i32, i32, i32, i32) {
    %c0_i32 = arith.constant 0 : i32
    %c0_i32_0 = arith.constant 0 : i32
    %c0_i32_1 = arith.constant 0 : i32
    %c0_i32_2 = arith.constant 0 : i32
    return %arg0, %c0_i32, %c0_i32_0, %c0_i32_1 : i32, i32, i32, i32
  }
  func.func @transform_1(%arg0: i32) -> (i32, i32) {
    %c0_i32 = arith.constant 0 : i32
    %c0_i32_0 = arith.constant 0 : i32
    %c0_i32_1 = arith.constant 0 : i32
    return %c0_i32, %c0_i32_0 : i32, i32
  }
  func.func @transform_2(%arg0: i32) -> (i32, i32) {
    %c0_i32 = arith.constant 0 : i32
    %c0_i32_0 = arith.constant 0 : i32
    %c0_i32_1 = arith.constant 0 : i32
    return %c0_i32, %c0_i32_0 : i32, i32
  }
  func.func @transform_3(%arg0: i32) -> (i32, i32, i32) {
    %c0_i32 = arith.constant 0 : i32
    %c0_i32_0 = arith.constant 0 : i32
    %c0_i32_1 = arith.constant 0 : i32
    %c0_i32_2 = arith.constant 0 : i32
    return %c0_i32, %c0_i32_0, %c0_i32_1 : i32, i32, i32
  }
  func.func @transform_4(%arg0: i32) -> (i32, i32) {
    %c0_i32 = arith.constant 0 : i32
    %c0_i32_0 = arith.constant 0 : i32
    %c0_i32_1 = arith.constant 0 : i32
    return %c0_i32, %c0_i32_0 : i32, i32
  }
  func.func @transform_5(%arg0: i32) -> (i32, i32) {
    %c0_i32 = arith.constant 0 : i32
    %c0_i32_0 = arith.constant 0 : i32
    %c0_i32_1 = arith.constant 0 : i32
    return %c0_i32, %c0_i32_0 : i32, i32
  }
  func.func @transform_6(%arg0: i32) -> (i32, i32) {
    %c0_i32 = arith.constant 0 : i32
    %c0_i32_0 = arith.constant 0 : i32
    %c0_i32_1 = arith.constant 0 : i32
    return %c0_i32, %c0_i32_0 : i32, i32
  }
  func.func @transform_7(%arg0: i32) -> (i32, i32, i32, i32) {
    %c0_i32 = arith.constant 0 : i32
    %c0_i32_0 = arith.constant 0 : i32
    %c0_i32_1 = arith.constant 0 : i32
    %c0_i32_2 = arith.constant 0 : i32
    return %arg0, %c0_i32, %c0_i32_0, %c0_i32_1 : i32, i32, i32, i32
  }
}

</mosaic_0001>

<llo_original>
// kernel: tpu_custom_call.1
$region0: #{tpu_custom_call.1}
  #allocation0 [shape = 'u32[]', space=smem, size = 0x4, offset = 0x4, fixed_abs, tag = 'smem constant byte address 0x4 - core index']
  #allocation1 [shape = 'u32[144,128]{1,0:T(1,128)}', space=vmem, size = 0x12000, scoped, tag = 'internal scratch']
  #allocation2 [shape = 'bf16[1,18,16,384]{3,2,1,0:T(16,128)(2,1)}', space=vmem, size = 0x36000, scoped, tag = 'scratch operand']
  %s0 = inlined_call_operand.hbm [shape: bf16[2,16,16,16], index: 0, kind: input, shape index: {}]
  %s1 = inlined_call_operand.vmem [shape: bf16[16,128], index: 1, kind: input, shape index: {}]
  %s2 = inlined_call_operand.vmem [shape: f32[1,128], index: 2, kind: input, shape index: {}]
  %s3 = inlined_call_operand.hbm [shape: bf16[3,384,128], index: 3, kind: input, shape index: {}]
  %s4 = inlined_call_operand.vmem [shape: f32[1,128], index: 4, kind: input, shape index: {}]
  %s5 = inlined_call_operand.vmem [shape: bf16[128,16], index: 5, kind: input, shape index: {}]
  %s6 = inlined_call_operand.vmem [shape: f32[1,16], index: 6, kind: input, shape index: {}]
  %s7 = inlined_call_operand.hbm [shape: f32[2,16,16,16], index: 7, kind: output, shape index: {}]
  %s8 = sld [smem:[#allocation0]]
  $region69: #{tpu_custom_call.1} parent=0
    _
  %s10 = ssub.s32 1, %s8
  %s11 = scalar_select 0, %s10, %s8
  $region1: #{tpu_custom_call.1} parent=0
    #allocation3 [shape = 'u8[131072]{0}', space=vmem, size = 0x20000, scoped, tag = 'input window, operand 0']
    #allocation4 [shape = 's32[2]{0}', space=sflag, size = 0x8, scoped, tag = 'scoped memory for tpu_custom_call.1']
    #allocation5 [shape = 's32[2]{0}', space=sflag, size = 0x8, scoped, tag = 'scoped memory for tpu_custom_call.1']
    #allocation6 [shape = 'u8[294912]{0}', space=vmem, size = 0x48000, scoped, tag = 'input window, operand 3, single buffered']
    #allocation7 [shape = 's32[1]{0}', space=sflag, size = 0x4, scoped, tag = 'scoped memory for tpu_custom_call.1']
    #allocation8 [shape = 'u8[262144]{0}', space=vmem, size = 0x40000, scoped, tag = 'output window, operand 0']
    %12 = vsyncpa [#allocation4], 0
    %s13 = scalar_lea.sflag [#allocation4], 1
    %14 = vsyncpa %s13, 0
    %15 = vsyncpa [#allocation7], 0
    %16 = vsyncpa [#allocation5], 0
    %s17 = scalar_lea.sflag [#allocation5], 1
    %18 = vsyncpa %s17, 0
    loop: start=0, step=1, limit=4
    $region2: #{tpu_custom_call.1} parent=1 // loop_pre_header
      _
    $region3: #{tpu_custom_call.1} parent=1 // loop_header
      %s20 = sphi 0, %s24
      %p21 = scmp.ge.s32.totalorder %s20, 4
      %s30 = sphi 0, %s32
      %s33 = sphi 0, %s30
      %s34 = sphi 0, %s33
      %s50 = sphi 0, %s34
      %s54 = sphi 0, %s54
      %s56 = sphi 0, %s54
      %s57 = sphi 0, %s56
      %s71 = sphi 0, %s57
      %s75 = sphi 0, %s75
      %s77 = sphi 0, %s75
      %s78 = sphi 0, %s77
      %s92 = sphi 0, %s78
      %s96 = sphi 0, %s96
      %s98 = sphi 0, %s96
      %s99 = sphi 0, %s98
      %s113 = sphi 0, %s99
      %s117 = sphi 0, %s117
      %s119 = sphi 0, %s117
      %s120 = sphi 0, %s119
      %s134 = sphi 0, %s120
      %s138 = sphi 0, %s138
      %s140 = sphi 0, %s138
      %s141 = sphi 0, %s140
      %s155 = sphi 0, %s141
      %s159 = sphi 0, %s159
      %s161 = sphi 0, %s159
      %s162 = sphi 0, %s161
      %s176 = sphi 0, %s162
      %s182 = sphi 0, %s184
      %s185 = sphi 0, %s182
      %s186 = sphi 0, %s185
      %s202 = sphi 0, %s186
    $region4: #{tpu_custom_call.1} parent=1 // loop_header_branch
      %23 = sbr.rel (%p21) target = $region8
    $region5: #{tpu_custom_call.1} parent=1 // loop_body
      %s25 = ssub.s32 %s20, 1
      %s26 = ssub.s32 %s20, 2
      %s27 = sadd.s32 %s20, 1
      %s28 = ssub.s32 %s20, %s27
      %p29 = scmp.eq.s32.totalorder %s28, 0
      %s31 = sadd.s32 %s30, 1
      %s32 = scalar_select %p29, %s30, %s31
      %p35 = pneg %p29
      %p36 = scmp.eq.s32.totalorder %s20, 1
      %p37 = por %p35, %p36
      %p38 = scmp.ne.s32.totalorder %s30, %s33
      %p39 = scmp.eq.s32.totalorder %s20, 0
      %p40 = por %p38, %p39
      %p41 = scmp.ne.s32.totalorder %s30, %s33
      %p42 = scmp.eq.s32.totalorder %s25, 1
      %p43 = por %p41, %p42
      %p44 = scmp.ne.s32.totalorder %s33, %s34
      %p45 = scmp.eq.s32.totalorder %s25, 0
      %p46 = por %p44, %p45
      %p47 = scmp.ne.s32.totalorder %s33, %s34
      %p48 = scmp.eq.s32.totalorder %s26, 1
      %p49 = por %p47, %p48
      %p51 = scmp.ne.s32.totalorder %s34, %s50
      %p52 = scmp.eq.s32.totalorder %s26, 0
      %p53 = por %p51, %p52
      %s55 = sadd.s32 %s54, 1
      %p58 = scmp.eq.s32.totalorder %s20, 1
      %p59 = scmp.ne.s32.totalorder %s54, %s56
      %p60 = scmp.eq.s32.totalorder %s20, 0
      %p61 = por %p59, %p60
      %p62 = scmp.ne.s32.totalorder %s54, %s56
      %p63 = scmp.eq.s32.totalorder %s25, 1
      %p64 = por %p62, %p63
      %p65 = scmp.ne.s32.totalorder %s56, %s57
      %p66 = scmp.eq.s32.totalorder %s25, 0
      %p67 = por %p65, %p66
      %p68 = scmp.ne.s32.totalorder %s56, %s57
      %p69 = scmp.eq.s32.totalorder %s26, 1
      %p70 = por %p68, %p69
      %p72 = scmp.ne.s32.totalorder %s57, %s71
      %p73 = scmp.eq.s32.totalorder %s26, 0
      %p74 = por %p72, %p73
      %s76 = sadd.s32 %s75, 1
      %p79 = scmp.eq.s32.totalorder %s20, 1
      %p80 = scmp.ne.s32.totalorder %s75, %s77
      %p81 = scmp.eq.s32.totalorder %s20, 0
      %p82 = por %p80, %p81
      %p83 = scmp.ne.s32.totalorder %s75, %s77
      %p84 = scmp.eq.s32.totalorder %s25, 1
      %p85 = por %p83, %p84
      %p86 = scmp.ne.s32.totalorder %s77, %s78
      %p87 = scmp.eq.s32.totalorder %s25, 0
      %p88 = por %p86, %p87
      %p89 = scmp.ne.s32.totalorder %s77, %s78
      %p90 = scmp.eq.s32.totalorder %s26, 1
      %p91 = por %p89, %p90
      %p93 = scmp.ne.s32.totalorder %s78, %s92
      %p94 = scmp.eq.s32.totalorder %s26, 0
      %p95 = por %p93, %p94
      %s97 = sadd.s32 %s96, 1
      %p100 = scmp.eq.s32.totalorder %s20, 1
      %p101 = scmp.ne.s32.totalorder %s96, %s98
      %p102 = scmp.eq.s32.totalorder %s20, 0
      %p103 = por %p101, %p102
      %p104 = scmp.ne.s32.totalorder %s96, %s98
      %p105 = scmp.eq.s32.totalorder %s25, 1
      %p106 = por %p104, %p105
      %p107 = scmp.ne.s32.totalorder %s98, %s99
      %p108 = scmp.eq.s32.totalorder %s25, 0
      %p109 = por %p107, %p108
      %p110 = scmp.ne.s32.totalorder %s98, %s99
      %p111 = scmp.eq.s32.totalorder %s26, 1
      %p112 = por %p110, %p111
      %p114 = scmp.ne.s32.totalorder %s99, %s113
      %p115 = scmp.eq.s32.totalorder %s26, 0
      %p116 = por %p114, %p115
      %s118 = sadd.s32 %s117, 1
      %p121 = scmp.eq.s32.totalorder %s20, 1
      %p122 = scmp.ne.s32.totalorder %s117, %s119
      %p123 = scmp.eq.s32.totalorder %s20, 0
      %p124 = por %p122, %p123
      %p125 = scmp.ne.s32.totalorder %s117, %s119
      %p126 = scmp.eq.s32.totalorder %s25, 1
      %p127 = por %p125, %p126
      %p128 = scmp.ne.s32.totalorder %s119, %s120
      %p129 = scmp.eq.s32.totalorder %s25, 0
      %p130 = por %p128, %p129
      %p131 = scmp.ne.s32.totalorder %s119, %s120
      %p132 = scmp.eq.s32.totalorder %s26, 1
      %p133 = por %p131, %p132
      %p135 = scmp.ne.s32.totalorder %s120, %s134
      %p136 = scmp.eq.s32.totalorder %s26, 0
      %p137 = por %p135, %p136
      %s139 = sadd.s32 %s138, 1
      %p142 = scmp.eq.s32.totalorder %s20, 1
      %p143 = scmp.ne.s32.totalorder %s138, %s140
      %p144 = scmp.eq.s32.totalorder %s20, 0
      %p145 = por %p143, %p144
      %p146 = scmp.ne.s32.totalorder %s138, %s140
      %p147 = scmp.eq.s32.totalorder %s25, 1
      %p148 = por %p146, %p147
      %p149 = scmp.ne.s32.totalorder %s140, %s141
      %p150 = scmp.eq.s32.totalorder %s25, 0
      %p151 = por %p149, %p150
      %p152 = scmp.ne.s32.totalorder %s140, %s141
      %p153 = scmp.eq.s32.totalorder %s26, 1
      %p154 = por %p152, %p153
      %p156 = scmp.ne.s32.totalorder %s141, %s155
      %p157 = scmp.eq.s32.totalorder %s26, 0
      %p158 = por %p156, %p157
      %s160 = sadd.s32 %s159, 1
      %p163 = scmp.eq.s32.totalorder %s20, 1
      %p164 = scmp.ne.s32.totalorder %s159, %s161
      %p165 = scmp.eq.s32.totalorder %s20, 0
      %p166 = por %p164, %p165
      %p167 = scmp.ne.s32.totalorder %s159, %s161
      %p168 = scmp.eq.s32.totalorder %s25, 1
      %p169 = por %p167, %p168
      %p170 = scmp.ne.s32.totalorder %s161, %s162
      %p171 = scmp.eq.s32.totalorder %s25, 0
      %p172 = por %p170, %p171
      %p173 = scmp.ne.s32.totalorder %s161, %s162
      %p174 = scmp.eq.s32.totalorder %s26, 1
      %p175 = por %p173, %p174
      %p177 = scmp.ne.s32.totalorder %s162, %s176
      %p178 = scmp.eq.s32.totalorder %s26, 0
      %p179 = por %p177, %p178
      %s180 = ssub.s32 %s20, %s27
      %p181 = scmp.eq.s32.totalorder %s180, 0
      %s183 = sadd.s32 %s182, 1
      %s184 = scalar_select %p181, %s182, %s183
      %p187 = pneg %p181
      %p188 = scmp.eq.s32.totalorder %s20, 1
      %p189 = por %p187, %p188
      %p190 = scmp.ne.s32.totalorder %s182, %s185
      %p191 = scmp.eq.s32.totalorder %s20, 0
      %p192 = por %p190, %p191
      %p193 = scmp.ne.s32.totalorder %s182, %s185
      %p194 = scmp.eq.s32.totalorder %s25, 1
      %p195 = por %p193, %p194
      %p196 = scmp.ne.s32.totalorder %s185, %s186
      %p197 = scmp.eq.s32.totalorder %s25, 0
      %p198 = por %p196, %p197
      %p199 = scmp.ne.s32.totalorder %s185, %s186
      %p200 = scmp.eq.s32.totalorder %s26, 1
      %p201 = por %p199, %p200
      %p203 = scmp.ne.s32.totalorder %s186, %s202
      %p204 = scmp.eq.s32.totalorder %s26, 0
      %p205 = por %p203, %p204
      %p206 = scmp.le.s32.totalorder 1, %s20
      %p207 = scmp.lt.s32.totalorder %s20, 3
      %p208 = pnand %p206, %p207
      %p209 = pneg %p208
      // Predicated region
      $region9: #{tpu_custom_call.1} parent=5 // pred_check
        _
      $region10: #{tpu_custom_call.1} parent=5 // pred_check_branch
        %211 = sbr.rel (%p208) target = $region12
      $region11: #{tpu_custom_call.1} parent=5 // pred_region
        %s212 = ssub.s32 %s20, 1
        // Predicated region
        $region13: #{tpu_custom_call.1} parent=11 // pred_check
          %p213 = pneg %p67
        $region14: #{tpu_custom_call.1} parent=11 // pred_check_branch
          %215 = sbr.rel (%p213) target = $region16
        $region15: #{tpu_custom_call.1} parent=11 // pred_region
          _
        $region16: #{tpu_custom_call.1} parent=11 // pred_fallthru
          _
        // Predicated region
        $region17: #{tpu_custom_call.1} parent=11 // pred_check
          %p216 = pneg %p88
        $region18: #{tpu_custom_call.1} parent=11 // pred_check_branch
          %218 = sbr.rel (%p216) target = $region20
        $region19: #{tpu_custom_call.1} parent=11 // pred_region
          _
        $region20: #{tpu_custom_call.1} parent=11 // pred_fallthru
          _
        // Predicated region
        $region21: #{tpu_custom_call.1} parent=11 // pred_check
          %p219 = pneg %p109
        $region22: #{tpu_custom_call.1} parent=11 // pred_check_branch
          %221 = sbr.rel (%p219) target = $region24
        $region23: #{tpu_custom_call.1} parent=11 // pred_region
          %s223 = ssub.s32 9216, 9216
          %224 = vsyncadd [#allocation7], %s223
          %s225 = sshll.u32 [#allocation6], 4
          %s226 = int_to_ptr.vmem [resolvable:$true] %s225
          %231 = dma.hbm_to_vmem [thread:$0]  %s3, 9216, %s226, [#allocation7], 64, 64, 4
        $region24: #{tpu_custom_call.1} parent=11 // pred_fallthru
          _
        // Predicated region
        $region25: #{tpu_custom_call.1} parent=11 // pred_check
          %p232 = pneg %p130
        $region26: #{tpu_custom_call.1} parent=11 // pred_check_branch
          %234 = sbr.rel (%p232) target = $region28
        $region27: #{tpu_custom_call.1} parent=11 // pred_region
          _
        $region28: #{tpu_custom_call.1} parent=11 // pred_fallthru
          _
        // Predicated region
        $region29: #{tpu_custom_call.1} parent=11 // pred_check
          %p235 = pneg %p151
        $region30: #{tpu_custom_call.1} parent=11 // pred_check_branch
          %237 = sbr.rel (%p235) target = $region32
        $region31: #{tpu_custom_call.1} parent=11 // pred_region
          _
        $region32: #{tpu_custom_call.1} parent=11 // pred_fallthru
          _
        // Predicated region
        $region33: #{tpu_custom_call.1} parent=11 // pred_check
          %p238 = pneg %p172
        $region34: #{tpu_custom_call.1} parent=11 // pred_check_branch
          %240 = sbr.rel (%p238) target = $region36
        $region35: #{tpu_custom_call.1} parent=11 // pred_region
          _
        $region36: #{tpu_custom_call.1} parent=11 // pred_fallthru
          _
      $region12: #{tpu_custom_call.1} parent=5 // pred_fallthru
        _
      %p241 = scmp.lt.s32.totalorder %s20, 2
      // Predicated region
      $region37: #{tpu_custom_call.1} parent=5 // pred_check
        %p242 = pneg %p241
      $region38: #{tpu_custom_call.1} parent=5 // pred_check_branch
        %244 = sbr.rel (%p242) target = $region40
      $region39: #{tpu_custom_call.1} parent=5 // pred_region
        // Predicated region
        $region41: #{tpu_custom_call.1} parent=39 // pred_check
          %p245 = pneg %p40
        $region42: #{tpu_custom_call.1} parent=39 // pred_check_branch
          %247 = sbr.rel (%p245) target = $region44
        $region43: #{tpu_custom_call.1} parent=39 // pred_region
          %s248 = sand.u32 %s30, 1
          %s249 = scalar_lea.sflag [#allocation4], %s248
          %s250 = sand.u32 %s30, 1
          %s251 = smul.addr %s250, 128
          %s252 = scalar_lea.vmem [#allocation3], %s251
          %s254 = ssub.s32 2048, 2048
          %255 = vsyncadd %s249, %s254
          %s256 = smul.addr %s20, 32
          %s257 = smul.addr %s256, 64
          %s258 = scalar_lea.hbm %s0, %s257
          %s259 = sshll.u32 %s252, 4
          %s260 = int_to_ptr.vmem [resolvable:$true] %s259
          %265 = dma.hbm_to_vmem [thread:$0]  %s258, 2048, %s260, %s249, 64, 64, 4
        $region44: #{tpu_custom_call.1} parent=39 // pred_fallthru
          _
      $region40: #{tpu_custom_call.1} parent=5 // pred_fallthru
        _
      %p266 = scmp.le.s32.totalorder 1, %s20
      %p267 = scmp.lt.s32.totalorder %s20, 3
      %p268 = pnand %p266, %p267
      %p269 = pneg %p268
      // Predicated region
      $region45: #{tpu_custom_call.1} parent=5 // pred_check
        _
      $region46: #{tpu_custom_call.1} parent=5 // pred_check_branch
        %271 = sbr.rel (%p268) target = $region48
      $region47: #{tpu_custom_call.1} parent=5 // pred_region
        %s272 = ssub.s32 %s20, 1
        %s273 = sand.u32 %s33, 1
        %s274 = scalar_lea.sflag [#allocation4], %s273
        %s275 = sand.u32 %s33, 1
        %s276 = smul.addr %s275, 128
        %s277 = scalar_lea.vmem [#allocation3], %s276
        // Predicated region
        $region49: #{tpu_custom_call.1} parent=47 // pred_check
          %p278 = pneg %p46
        $region50: #{tpu_custom_call.1} parent=47 // pred_check_branch
          %280 = sbr.rel (%p278) target = $region52
        $region51: #{tpu_custom_call.1} parent=47 // pred_region
          %281 = dma.done %s274, 2048
        $region52: #{tpu_custom_call.1} parent=47 // pred_fallthru
          _
        // Predicated region
        $region53: #{tpu_custom_call.1} parent=47 // pred_check
          %p282 = pneg %p109
        $region54: #{tpu_custom_call.1} parent=47 // pred_check_branch
          %284 = sbr.rel (%p282) target = $region56
        $region55: #{tpu_custom_call.1} parent=47 // pred_region
          %285 = dma.done [#allocation7], 9216
        $region56: #{tpu_custom_call.1} parent=47 // pred_fallthru
          _
        %s286 = sand.u32 %s33, 1
        %s287 = scalar_lea.sflag [#allocation4], %s286
        %s288 = sand.u32 %s33, 1
        %s289 = smul.addr %s288, 128
        %s290 = scalar_lea.vmem [#allocation3], %s289
        %p291 = pneg %p46
        %p292 = pneg %p43
        %p293 = pneg %p67
        %p294 = pneg %p64
        %p295 = pneg %p88
        %p296 = pneg %p85
        %p297 = pneg %p109
        %p298 = pneg %p106
        %p299 = pneg %p130
        %p300 = pneg %p127
        %p301 = pneg %p151
        %p302 = pneg %p148
        %p303 = pneg %p172
        %p304 = pneg %p169
        %p305 = pneg %p198
        %p306 = pneg %p195
        %s307 = sand.u32 %s185, 1
        %s308 = scalar_lea.sflag [#allocation5], %s307
        %s309 = sand.u32 %s185, 1
        %s310 = smul.addr %s309, 256
        %s311 = scalar_lea.vmem [#allocation8], %s310
        %v313 = vld [vmem:[%s277] sm:$0xf]
        %v314 = vld [vmem:[%s277 + $0x4] sm:$0xf]
        %v315 = vld [vmem:[%s277 + $0x8] sm:$0xf]
        %v316 = vld [vmem:[%s277 + $0xc] sm:$0xf]
        %v317 = vld [vmem:[%s277 + $0x10] sm:$0xf]
        %v318 = vld [vmem:[%s277 + $0x14] sm:$0xf]
        %v319 = vld [vmem:[%s277 + $0x18] sm:$0xf]
        %v320 = vld [vmem:[%s277 + $0x1c] sm:$0xf]
        %v321 = vld [vmem:[%s277 + $0x20] sm:$0xf]
        %v322 = vld [vmem:[%s277 + $0x24] sm:$0xf]
        %v323 = vld [vmem:[%s277 + $0x28] sm:$0xf]
        %v324 = vld [vmem:[%s277 + $0x2c] sm:$0xf]
        %v325 = vld [vmem:[%s277 + $0x30] sm:$0xf]
        %v326 = vld [vmem:[%s277 + $0x34] sm:$0xf]
        %v327 = vld [vmem:[%s277 + $0x38] sm:$0xf]
        %v328 = vld [vmem:[%s277 + $0x3c] sm:$0xf]
        %v329 = vld [vmem:[%s277 + $0x40] sm:$0xf]
        %v330 = vld [vmem:[%s277 + $0x44] sm:$0xf]
        %v331 = vld [vmem:[%s277 + $0x48] sm:$0xf]
        %v332 = vld [vmem:[%s277 + $0x4c] sm:$0xf]
        %v333 = vld [vmem:[%s277 + $0x50] sm:$0xf]
        %v334 = vld [vmem:[%s277 + $0x54] sm:$0xf]
        %v335 = vld [vmem:[%s277 + $0x58] sm:$0xf]
        %v336 = vld [vmem:[%s277 + $0x5c] sm:$0xf]
        %v337 = vld [vmem:[%s277 + $0x60] sm:$0xf]
        %v338 = vld [vmem:[%s277 + $0x64] sm:$0xf]
        %v339 = vld [vmem:[%s277 + $0x68] sm:$0xf]
        %v340 = vld [vmem:[%s277 + $0x6c] sm:$0xf]
        %v341 = vld [vmem:[%s277 + $0x70] sm:$0xf]
        %v342 = vld [vmem:[%s277 + $0x74] sm:$0xf]
        %v343 = vld [vmem:[%s277 + $0x78] sm:$0xf]
        %v344 = vld [vmem:[%s277 + $0x7c] sm:$0xf]
        %v345 = vld [vmem:[%s1] sm:$0xf]
        %v346 = vld [vmem:[%s1 + $0x4] sm:$0xf]
        %v347 = vld [vmem:[%s2] sm:$0x1]
        %v349 = vlaneseq
        %v350 = vshrl.u32 %v349, 7
        %v351 = vsub.s32 0, %v350
        %v352 = vrot.slane %v347, %v351
        %v386 = vunpack.c.l.b16 %v313
        %v387 = vunpack.c.l.b16 %v314
        %v388 = vunpack.c.l.b16 %v315
        %v389 = vunpack.c.l.b16 %v316
        %v390 = vunpack.c.l.b16 %v317
        %v391 = vunpack.c.l.b16 %v318
        %v392 = vunpack.c.l.b16 %v319
        %v393 = vunpack.c.l.b16 %v320
        %v394 = vunpack.c.l.b16 %v321
        %v395 = vunpack.c.l.b16 %v322
        %v396 = vunpack.c.l.b16 %v323
        %v397 = vunpack.c.l.b16 %v324
        %v398 = vunpack.c.l.b16 %v325
        %v399 = vunpack.c.l.b16 %v326
        %v400 = vunpack.c.l.b16 %v327
        %v401 = vunpack.c.l.b16 %v328
        %v402 = vunpack.c.l.b16 %v329
        %v403 = vunpack.c.l.b16 %v330
        %v404 = vunpack.c.l.b16 %v331
        %v405 = vunpack.c.l.b16 %v332
        %v406 = vunpack.c.l.b16 %v333
        %v407 = vunpack.c.l.b16 %v334
        %v408 = vunpack.c.l.b16 %v335
        %v409 = vunpack.c.l.b16 %v336
        %v410 = vunpack.c.l.b16 %v337
        %v411 = vunpack.c.l.b16 %v338
        %v412 = vunpack.c.l.b16 %v339
        %v413 = vunpack.c.l.b16 %v340
        %v414 = vunpack.c.l.b16 %v341
        %v415 = vunpack.c.l.b16 %v342
        %v416 = vunpack.c.l.b16 %v343
        %v417 = vunpack.c.l.b16 %v344
        %v418 = vpack.c.b16 %v387, %v386
        %v419 = vpack.c.b16 %v389, %v388
        %v420 = vpack.c.b16 %v391, %v390
        %v421 = vpack.c.b16 %v393, %v392
        %v422 = vpack.c.b16 %v395, %v394
        %v423 = vpack.c.b16 %v397, %v396
        %v424 = vpack.c.b16 %v399, %v398
        %v425 = vpack.c.b16 %v401, %v400
        %v426 = vpack.c.b16 %v403, %v402
        %v427 = vpack.c.b16 %v405, %v404
        %v428 = vpack.c.b16 %v407, %v406
        %v429 = vpack.c.b16 %v409, %v408
        %v430 = vpack.c.b16 %v411, %v410
        %v431 = vpack.c.b16 %v413, %v412
        %v432 = vpack.c.b16 %v415, %v414
        %v433 = vpack.c.b16 %v417, %v416
        %v436 = vunpack.c.l.b16 %v345
        %v437 = vunpack.c.l.b16 %v346
        %v438 = vpack.c.b16 %v437, %v436
        %vm440 = vcmask 130048
        %v442 = vsel %vm440, %v418, 0
        %v445 = vsel %vm440, %v419, 0
        %v448 = vsel %vm440, %v420, 0
        %v451 = vsel %vm440, %v421, 0
        %v454 = vsel %vm440, %v422, 0
        %v457 = vsel %vm440, %v423, 0
        %v460 = vsel %vm440, %v424, 0
        %v463 = vsel %vm440, %v425, 0
        %v466 = vsel %vm440, %v426, 0
        %v469 = vsel %vm440, %v427, 0
        %v472 = vsel %vm440, %v428, 0
        %v475 = vsel %vm440, %v429, 0
        %v478 = vsel %vm440, %v430, 0
        %v481 = vsel %vm440, %v431, 0
        %v484 = vsel %vm440, %v432, 0
        %v487 = vsel %vm440, %v433, 0
        %489 = vmatprep.subr.bf16.mxu0 0
        %490 = vmatpush1.bf16.msra.mxu0 %v438
        %491 = vmatprep.subr.bf16.mxu0 0
        %492 = vmatpush1.bf16.msra.mxu0 0
        %493 = vmatprep.subr.bf16.mxu0 0
        %494 = vmatpush1.bf16.msra.mxu0 0
        %495 = vmatprep.subr.bf16.mxu0 0
        %496 = vmatpush1.bf16.msra.mxu0 0
        %497 = vmatprep.subr.bf16.mxu0 0
        %498 = vmatpush1.bf16.msra.mxu0 0
        %499 = vmatprep.subr.bf16.mxu0 0
        %500 = vmatpush1.bf16.msra.mxu0 0
        %501 = vmatprep.subr.bf16.mxu0 0
        %502 = vmatpush1.bf16.msra.mxu0 0
        %503 = vmatprep.subr.bf16.mxu0 0
        %504 = vmatpush1.bf16.msra.mxu0 0
        %505 = vmatprep.subr.bf16.mxu0 0
        %506 = vmatpush1.bf16.msra.mxu0 0
        %507 = vmatprep.subr.bf16.mxu0 0
        %508 = vmatpush1.bf16.msra.mxu0 0
        %509 = vmatprep.subr.bf16.mxu0 0
        %510 = vmatpush1.bf16.msra.mxu0 0
        %511 = vmatprep.subr.bf16.mxu0 0
        %512 = vmatpush1.bf16.msra.mxu0 0
        %513 = vmatprep.subr.bf16.mxu0 0
        %514 = vmatpush1.bf16.msra.mxu0 0
        %515 = vmatprep.subr.bf16.mxu0 0
        %516 = vmatpush1.bf16.msra.mxu0 0
        %517 = vmatprep.subr.bf16.mxu0 0
        %518 = vmatpush1.bf16.msra.mxu0 0
        %519 = vmatprep.subr.bf16.mxu0 0
        %520 = vmatpush1.bf16.msra.mxu0 0
        %521 = vmatprep.mubr.bf16.mxu0 0
        %522 = vmatmul.mubr.bf16.gmra.mrb[0].mxu0 %v442
        %v523 = vpop.f32.mrb[0].mxu0
        %v524 = vadd.f32 %v352, %v523
        %v525 = vpop.f32.mrb[0].mxu0
        %v526 = vpop.f32.mrb[0].mxu0
        %v527 = vadd.f32 %v352, %v526
        %v528 = vpop.f32.mrb[0].mxu0
        %529 = vmatprep.mubr.bf16.mxu0 0
        %530 = vmatmul.mubr.bf16.gmra.mrb[0].mxu0 %v445
        %v531 = vpop.f32.mrb[0].mxu0
        %v532 = vadd.f32 %v352, %v531
        %v533 = vpop.f32.mrb[0].mxu0
        %v534 = vpop.f32.mrb[0].mxu0
        %v535 = vadd.f32 %v352, %v534
        %v536 = vpop.f32.mrb[0].mxu0
        %537 = vmatprep.mubr.bf16.mxu0 0
        %538 = vmatmul.mubr.bf16.gmra.mrb[0].mxu0 %v448
        %v539 = vpop.f32.mrb[0].mxu0
        %v540 = vadd.f32 %v352, %v539
        %v541 = vpop.f32.mrb[0].mxu0
        %v542 = vpop.f32.mrb[0].mxu0
        %v543 = vadd.f32 %v352, %v542
        %v544 = vpop.f32.mrb[0].mxu0
        %545 = vmatprep.mubr.bf16.mxu0 0
        %546 = vmatmul.mubr.bf16.gmra.mrb[0].mxu0 %v451
        %v547 = vpop.f32.mrb[0].mxu0
        %v548 = vadd.f32 %v352, %v547
        %v549 = vpop.f32.mrb[0].mxu0
        %v550 = vpop.f32.mrb[0].mxu0
        %v551 = vadd.f32 %v352, %v550
        %v552 = vpop.f32.mrb[0].mxu0
        %553 = vmatprep.mubr.bf16.mxu0 0
        %554 = vmatmul.mubr.bf16.gmra.mrb[0].mxu0 %v454
        %v555 = vpop.f32.mrb[0].mxu0
        %v556 = vadd.f32 %v352, %v555
        %v557 = vpop.f32.mrb[0].mxu0
        %v558 = vpop.f32.mrb[0].mxu0
        %v559 = vadd.f32 %v352, %v558
        %v560 = vpop.f32.mrb[0].mxu0
        %561 = vmatprep.mubr.bf16.mxu0 0
        %562 = vmatmul.mubr.bf16.gmra.mrb[0].mxu0 %v457
        %v563 = vpop.f32.mrb[0].mxu0
        %v564 = vadd.f32 %v352, %v563
        %v565 = vpop.f32.mrb[0].mxu0
        %v566 = vpop.f32.mrb[0].mxu0
        %v567 = vadd.f32 %v352, %v566
        %v568 = vpop.f32.mrb[0].mxu0
        %569 = vmatprep.mubr.bf16.mxu0 0
        %570 = vmatmul.mubr.bf16.gmra.mrb[0].mxu0 %v460
        %v571 = vpop.f32.mrb[0].mxu0
        %v572 = vadd.f32 %v352, %v571
        %v573 = vpop.f32.mrb[0].mxu0
        %v574 = vpop.f32.mrb[0].mxu0
        %v575 = vadd.f32 %v352, %v574
        %v576 = vpop.f32.mrb[0].mxu0
        %577 = vmatprep.mubr.bf16.mxu0 0
        %578 = vmatmul.mubr.bf16.gmra.mrb[0].mxu0 %v463
        %v579 = vpop.f32.mrb[0].mxu0
        %v580 = vadd.f32 %v352, %v579
        %v581 = vpop.f32.mrb[0].mxu0
        %v582 = vpop.f32.mrb[0].mxu0
        %v583 = vadd.f32 %v352, %v582
        %v584 = vpop.f32.mrb[0].mxu0
        %585 = vmatprep.mubr.bf16.mxu0 0
        %586 = vmatmul.mubr.bf16.gmra.mrb[0].mxu0 %v466
        %v587 = vpop.f32.mrb[0].mxu0
        %v588 = vadd.f32 %v352, %v587
        %v589 = vpop.f32.mrb[0].mxu0
        %v590 = vpop.f32.mrb[0].mxu0
        %v591 = vadd.f32 %v352, %v590
        %v592 = vpop.f32.mrb[0].mxu0
        %593 = vmatprep.mubr.bf16.mxu0 0
        %594 = vmatmul.mubr.bf16.gmra.mrb[0].mxu0 %v469
        %v595 = vpop.f32.mrb[0].mxu0
        %v596 = vadd.f32 %v352, %v595
        %v597 = vpop.f32.mrb[0].mxu0
        %v598 = vpop.f32.mrb[0].mxu0
        %v599 = vadd.f32 %v352, %v598
        %v600 = vpop.f32.mrb[0].mxu0
        %601 = vmatprep.mubr.bf16.mxu0 0
        %602 = vmatmul.mubr.bf16.gmra.mrb[0].mxu0 %v472
        %v603 = vpop.f32.mrb[0].mxu0
        %v604 = vadd.f32 %v352, %v603
        %v605 = vpop.f32.mrb[0].mxu0
        %v606 = vpop.f32.mrb[0].mxu0
        %v607 = vadd.f32 %v352, %v606
        %v608 = vpop.f32.mrb[0].mxu0
        %609 = vmatprep.mubr.bf16.mxu0 0
        %610 = vmatmul.mubr.bf16.gmra.mrb[0].mxu0 %v475
        %v611 = vpop.f32.mrb[0].mxu0
        %v612 = vadd.f32 %v352, %v611
        %v613 = vpop.f32.mrb[0].mxu0
        %v614 = vpop.f32.mrb[0].mxu0
        %v615 = vadd.f32 %v352, %v614
        %v616 = vpop.f32.mrb[0].mxu0
        %617 = vmatprep.mubr.bf16.mxu0 0
        %618 = vmatmul.mubr.bf16.gmra.mrb[0].mxu0 %v478
        %v619 = vpop.f32.mrb[0].mxu0
        %v620 = vadd.f32 %v352, %v619
        %v621 = vpop.f32.mrb[0].mxu0
        %v622 = vpop.f32.mrb[0].mxu0
        %v623 = vadd.f32 %v352, %v622
        %v624 = vpop.f32.mrb[0].mxu0
        %625 = vmatprep.mubr.bf16.mxu0 0
        %626 = vmatmul.mubr.bf16.gmra.mrb[0].mxu0 %v481
        %v627 = vpop.f32.mrb[0].mxu0
        %v628 = vadd.f32 %v352, %v627
        %v629 = vpop.f32.mrb[0].mxu0
        %v630 = vpop.f32.mrb[0].mxu0
        %v631 = vadd.f32 %v352, %v630
        %v632 = vpop.f32.mrb[0].mxu0
        %633 = vmatprep.mubr.bf16.mxu0 0
        %634 = vmatmul.mubr.bf16.gmra.mrb[0].mxu0 %v484
        %v635 = vpop.f32.mrb[0].mxu0
        %v636 = vadd.f32 %v352, %v635
        %v637 = vpop.f32.mrb[0].mxu0
        %v638 = vpop.f32.mrb[0].mxu0
        %v639 = vadd.f32 %v352, %v638
        %v640 = vpop.f32.mrb[0].mxu0
        %641 = vmatprep.mubr.bf16.mxu0 0
        %642 = vmatmul.mubr.bf16.gmra.mrb[0].mxu0 %v487
        %v643 = vpop.f32.mrb[0].mxu0
        %v644 = vadd.f32 %v352, %v643
        %v645 = vpop.f32.mrb[0].mxu0
        %v646 = vpop.f32.mrb[0].mxu0
        %v647 = vadd.f32 %v352, %v646
        %v648 = vpop.f32.mrb[0].mxu0
        %649 = vdwg.mxu0
        %vm650 = vcmp.gt.f32.partialorder %v524, 0.0
        %vm651 = vcmp.gt.f32.partialorder %v527, 0.0
        %vm652 = vcmp.gt.f32.partialorder %v532, 0.0
        %vm653 = vcmp.gt.f32.partialorder %v535, 0.0
        %vm654 = vcmp.gt.f32.partialorder %v540, 0.0
        %vm655 = vcmp.gt.f32.partialorder %v543, 0.0
        %vm656 = vcmp.gt.f32.partialorder %v548, 0.0
        %vm657 = vcmp.gt.f32.partialorder %v551, 0.0
        %vm658 = vcmp.gt.f32.partialorder %v556, 0.0
        %vm659 = vcmp.gt.f32.partialorder %v559, 0.0
        %vm660 = vcmp.gt.f32.partialorder %v564, 0.0
        %vm661 = vcmp.gt.f32.partialorder %v567, 0.0
        %vm662 = vcmp.gt.f32.partialorder %v572, 0.0
        %vm663 = vcmp.gt.f32.partialorder %v575, 0.0
        %vm664 = vcmp.gt.f32.partialorder %v580, 0.0
        %vm665 = vcmp.gt.f32.partialorder %v583, 0.0
        %vm666 = vcmp.gt.f32.partialorder %v588, 0.0
        %vm667 = vcmp.gt.f32.partialorder %v591, 0.0
        %vm668 = vcmp.gt.f32.partialorder %v596, 0.0
        %vm669 = vcmp.gt.f32.partialorder %v599, 0.0
        %vm670 = vcmp.gt.f32.partialorder %v604, 0.0
        %vm671 = vcmp.gt.f32.partialorder %v607, 0.0
        %vm672 = vcmp.gt.f32.partialorder %v612, 0.0
        %vm673 = vcmp.gt.f32.partialorder %v615, 0.0
        %vm674 = vcmp.gt.f32.partialorder %v620, 0.0
        %vm675 = vcmp.gt.f32.partialorder %v623, 0.0
        %vm676 = vcmp.gt.f32.partialorder %v628, 0.0
        %vm677 = vcmp.gt.f32.partialorder %v631, 0.0
        %vm678 = vcmp.gt.f32.partialorder %v636, 0.0
        %vm679 = vcmp.gt.f32.partialorder %v639, 0.0
        %vm680 = vcmp.gt.f32.partialorder %v644, 0.0
        %vm681 = vcmp.gt.f32.partialorder %v647, 0.0
        %v682 = vmul.f32 %v524, 0.01
        %v683 = vmul.f32 %v527, 0.01
        %v684 = vmul.f32 %v532, 0.01
        %v685 = vmul.f32 %v535, 0.01
        %v686 = vmul.f32 %v540, 0.01
        %v687 = vmul.f32 %v543, 0.01
        %v688 = vmul.f32 %v548, 0.01
        %v689 = vmul.f32 %v551, 0.01
        %v690 = vmul.f32 %v556, 0.01
        %v691 = vmul.f32 %v559, 0.01
        %v692 = vmul.f32 %v564, 0.01
        %v693 = vmul.f32 %v567, 0.01
        %v694 = vmul.f32 %v572, 0.01
        %v695 = vmul.f32 %v575, 0.01
        %v696 = vmul.f32 %v580, 0.01
        %v697 = vmul.f32 %v583, 0.01
        %v698 = vmul.f32 %v588, 0.01
        %v699 = vmul.f32 %v591, 0.01
        %v700 = vmul.f32 %v596, 0.01
        %v701 = vmul.f32 %v599, 0.01
        %v702 = vmul.f32 %v604, 0.01
        %v703 = vmul.f32 %v607, 0.01
        %v704 = vmul.f32 %v612, 0.01
        %v705 = vmul.f32 %v615, 0.01
        %v706 = vmul.f32 %v620, 0.01
        %v707 = vmul.f32 %v623, 0.01
        %v708 = vmul.f32 %v628, 0.01
        %v709 = vmul.f32 %v631, 0.01
        %v710 = vmul.f32 %v636, 0.01
        %v711 = vmul.f32 %v639, 0.01
        %v712 = vmul.f32 %v644, 0.01
        %v713 = vmul.f32 %v647, 0.01
        %v714 = vsel %vm650, %v524, %v682
        %v715 = vsel %vm651, %v527, %v683
        %v716 = vsel %vm652, %v532, %v684
        %v717 = vsel %vm653, %v535, %v685
        %v718 = vsel %vm654, %v540, %v686
        %v719 = vsel %vm655, %v543, %v687
        %v720 = vsel %vm656, %v548, %v688
        %v721 = vsel %vm657, %v551, %v689
        %v722 = vsel %vm658, %v556, %v690
        %v723 = vsel %vm659, %v559, %v691
        %v724 = vsel %vm660, %v564, %v692
        %v725 = vsel %vm661, %v567, %v693
        %v726 = vsel %vm662, %v572, %v694
        %v727 = vsel %vm663, %v575, %v695
        %v728 = vsel %vm664, %v580, %v696
        %v729 = vsel %vm665, %v583, %v697
        %v730 = vsel %vm666, %v588, %v698
        %v731 = vsel %vm667, %v591, %v699
        %v732 = vsel %vm668, %v596, %v700
        %v733 = vsel %vm669, %v599, %v701
        %v734 = vsel %vm670, %v604, %v702
        %v735 = vsel %vm671, %v607, %v703
        %v736 = vsel %vm672, %v612, %v704
        %v737 = vsel %vm673, %v615, %v705
        %v738 = vsel %vm674, %v620, %v706
        %v739 = vsel %vm675, %v623, %v707
        %v740 = vsel %vm676, %v628, %v708
        %v741 = vsel %vm677, %v631, %v709
        %v742 = vsel %vm678, %v636, %v710
        %v743 = vsel %vm679, %v639, %v711
        %v744 = vsel %vm680, %v644, %v712
        %v745 = vsel %vm681, %v647, %v713
        %v746 = vpack.c.bf16 %v715, %v714
        %v747 = vpack.c.bf16 %v717, %v716
        %v748 = vpack.c.bf16 %v719, %v718
        %v749 = vpack.c.bf16 %v721, %v720
        %v750 = vpack.c.bf16 %v723, %v722
        %v751 = vpack.c.bf16 %v725, %v724
        %v752 = vpack.c.bf16 %v727, %v726
        %v753 = vpack.c.bf16 %v729, %v728
        %v754 = vpack.c.bf16 %v731, %v730
        %v755 = vpack.c.bf16 %v733, %v732
        %v756 = vpack.c.bf16 %v735, %v734
        %v757 = vpack.c.bf16 %v737, %v736
        %v758 = vpack.c.bf16 %v739, %v738
        %v759 = vpack.c.bf16 %v741, %v740
        %v760 = vpack.c.bf16 %v743, %v742
        %v761 = vpack.c.bf16 %v745, %v744
        %762 = vst [vmem:[#allocation2] sm:$0xff] 0
        %763 = vst [vmem:[#allocation2 + $0x8] sm:$0xff] 0
        %764 = vst [vmem:[#allocation2 + $0x10] sm:$0xff] 0
        %s765 = scalar_lea.vmem [#allocation2], 408
        %766 = vst [vmem:[%s765] sm:$0xff] 0
        %767 = vst [vmem:[%s765 + $0x8] sm:$0xff] 0
        %768 = vst [vmem:[%s765 + $0x10] sm:$0xff] 0
        %vm769 = vcmask 1040384
        %vm770 = vsmask.f32 256
        %vm771 = vmand %vm769, %vm770
        %v772 = vld [vmem:[#allocation2] sm:$0x1]
        %v773 = vsel %vm771, 0, %v772
        %774 = vst [vmem:[#allocation2] sm:$0x1] %v773
        %v775 = vld [vmem:[#allocation2 + $0x18] sm:$0x1]
        %v776 = vsel %vm771, 0, %v775
        %777 = vst [vmem:[#allocation2 + $0x18] sm:$0x1] %v776
        %v778 = vld [vmem:[#allocation2 + $0x30] sm:$0x1]
        %v779 = vsel %vm771, 0, %v778
        %780 = vst [vmem:[#allocation2 + $0x30] sm:$0x1] %v779
        %v781 = vld [vmem:[#allocation2 + $0x48] sm:$0x1]
        %v782 = vsel %vm771, 0, %v781
        %783 = vst [vmem:[#allocation2 + $0x48] sm:$0x1] %v782
        %v784 = vld [vmem:[#allocation2 + $0x60] sm:$0x1]
        %v785 = vsel %vm771, 0, %v784
        %786 = vst [vmem:[#allocation2 + $0x60] sm:$0x1] %v785
        %v787 = vld [vmem:[#allocation2 + $0x78] sm:$0x1]
        %v788 = vsel %vm771, 0, %v787
        %789 = vst [vmem:[#allocation2 + $0x78] sm:$0x1] %v788
        %v790 = vld [vmem:[#allocation2 + $0x90] sm:$0x1]
        %v791 = vsel %vm771, 0, %v790
        %792 = vst [vmem:[#allocation2 + $0x90] sm:$0x1] %v791
        %v793 = vld [vmem:[#allocation2 + $0xa8] sm:$0x1]
        %v794 = vsel %vm771, 0, %v793
        %795 = vst [vmem:[#allocation2 + $0xa8] sm:$0x1] %v794
        %v796 = vld [vmem:[#allocation2 + $0xc0] sm:$0x1]
        %v797 = vsel %vm771, 0, %v796
        %798 = vst [vmem:[#allocation2 + $0xc0] sm:$0x1] %v797
        %v799 = vld [vmem:[#allocation2 + $0xd8] sm:$0x1]
        %v800 = vsel %vm771, 0, %v799
        %801 = vst [vmem:[#allocation2 + $0xd8] sm:$0x1] %v800
        %v802 = vld [vmem:[#allocation2 + $0xf0] sm:$0x1]
        %v803 = vsel %vm771, 0, %v802
        %804 = vst [vmem:[#allocation2 + $0xf0] sm:$0x1] %v803
        %v805 = vld [vmem:[#allocation2 + $0x108] sm:$0x1]
        %v806 = vsel %vm771, 0, %v805
        %807 = vst [vmem:[#allocation2 + $0x108] sm:$0x1] %v806
        %v808 = vld [vmem:[#allocation2 + $0x120] sm:$0x1]
        %v809 = vsel %vm771, 0, %v808
        %810 = vst [vmem:[#allocation2 + $0x120] sm:$0x1] %v809
        %v811 = vld [vmem:[#allocation2 + $0x138] sm:$0x1]
        %v812 = vsel %vm771, 0, %v811
        %813 = vst [vmem:[#allocation2 + $0x138] sm:$0x1] %v812
        %v814 = vld [vmem:[#allocation2 + $0x150] sm:$0x1]
        %v815 = vsel %vm771, 0, %v814
        %816 = vst [vmem:[#allocation2 + $0x150] sm:$0x1] %v815
        %v817 = vld [vmem:[#allocation2 + $0x168] sm:$0x1]
        %v818 = vsel %vm771, 0, %v817
        %819 = vst [vmem:[#allocation2 + $0x168] sm:$0x1] %v818
        %v820 = vld [vmem:[#allocation2 + $0x180] sm:$0x1]
        %v821 = vsel %vm771, 0, %v820
        %822 = vst [vmem:[#allocation2 + $0x180] sm:$0x1] %v821
        %v823 = vld [vmem:[#allocation2 + $0x198] sm:$0x1]
        %v824 = vsel %vm771, 0, %v823
        %825 = vst [vmem:[#allocation2 + $0x198] sm:$0x1] %v824
        %vm826 = vcmask 1047559
        %vm827 = vsmask.f32 7966
        %vm828 = vmand %vm826, %vm827
        %v829 = vld [vmem:[#allocation2 + $0x10] sm:$0x80]
        %v830 = vsel %vm828, 0, %v829
        %831 = vst [vmem:[#allocation2 + $0x10] sm:$0x80] %v830
        %v832 = vld [vmem:[#allocation2 + $0x28] sm:$0x80]
        %v833 = vsel %vm828, 0, %v832
        %834 = vst [vmem:[#allocation2 + $0x28] sm:$0x80] %v833
        %v835 = vld [vmem:[#allocation2 + $0x40] sm:$0x80]
        %v836 = vsel %vm828, 0, %v835
        %837 = vst [vmem:[#allocation2 + $0x40] sm:$0x80] %v836
        %v838 = vld [vmem:[#allocation2 + $0x58] sm:$0x80]
        %v839 = vsel %vm828, 0, %v838
        %840 = vst [vmem:[#allocation2 + $0x58] sm:$0x80] %v839
        %v841 = vld [vmem:[#allocation2 + $0x70] sm:$0x80]
        %v842 = vsel %vm828, 0, %v841
        %843 = vst [vmem:[#allocation2 + $0x70] sm:$0x80] %v842
        %v844 = vld [vmem:[#allocation2 + $0x88] sm:$0x80]
        %v845 = vsel %vm828, 0, %v844
        %846 = vst [vmem:[#allocation2 + $0x88] sm:$0x80] %v845
        %v847 = vld [vmem:[#allocation2 + $0xa0] sm:$0x80]
        %v848 = vsel %vm828, 0, %v847
        %849 = vst [vmem:[#allocation2 + $0xa0] sm:$0x80] %v848
        %v850 = vld [vmem:[#allocation2 + $0xb8] sm:$0x80]
        %v851 = vsel %vm828, 0, %v850
        %852 = vst [vmem:[#allocation2 + $0xb8] sm:$0x80] %v851
        %v853 = vld [vmem:[#allocation2 + $0xd0] sm:$0x80]
        %v854 = vsel %vm828, 0, %v853
        %855 = vst [vmem:[#allocation2 + $0xd0] sm:$0x80] %v854
        %v856 = vld [vmem:[#allocation2 + $0xe8] sm:$0x80]
        %v857 = vsel %vm828, 0, %v856
        %858 = vst [vmem:[#allocation2 + $0xe8] sm:$0x80] %v857
        %v859 = vld [vmem:[#allocation2 + $0x100] sm:$0x80]
        %v860 = vsel %vm828, 0, %v859
        %861 = vst [vmem:[#allocation2 + $0x100] sm:$0x80] %v860
        %v862 = vld [vmem:[#allocation2 + $0x118] sm:$0x80]
        %v863 = vsel %vm828, 0, %v862
        %864 = vst [vmem:[#allocation2 + $0x118] sm:$0x80] %v863
        %v865 = vld [vmem:[#allocation2 + $0x130] sm:$0x80]
        %v866 = vsel %vm828, 0, %v865
        %867 = vst [vmem:[#allocation2 + $0x130] sm:$0x80] %v866
        %v868 = vld [vmem:[#allocation2 + $0x148] sm:$0x80]
        %v869 = vsel %vm828, 0, %v868
        %870 = vst [vmem:[#allocation2 + $0x148] sm:$0x80] %v869
        %v871 = vld [vmem:[#allocation2 + $0x160] sm:$0x80]
        %v872 = vsel %vm828, 0, %v871
        %873 = vst [vmem:[#allocation2 + $0x160] sm:$0x80] %v872
        %v874 = vld [vmem:[#allocation2 + $0x178] sm:$0x80]
        %v875 = vsel %vm828, 0, %v874
        %876 = vst [vmem:[#allocation2 + $0x178] sm:$0x80] %v875
        %v877 = vld [vmem:[#allocation2 + $0x190] sm:$0x80]
        %v878 = vsel %vm828, 0, %v877
        %879 = vst [vmem:[#allocation2 + $0x190] sm:$0x80] %v878
        %v880 = vld [vmem:[#allocation2 + $0x1a8] sm:$0x80]
        %v881 = vsel %vm828, 0, %v880
        %882 = vst [vmem:[#allocation2 + $0x1a8] sm:$0x80] %v881
        %v884 = vshrl.u32 %v746, 16
        %v886 = vrot.slane %v884, 7
        %v887 = vshll.u32 %v746, 16
        %v889 = vor.u32 %v886, %v887
        %v891 = vshrl.u32 %v747, 16
        %v893 = vrot.slane %v891, 7
        %v894 = vshll.u32 %v747, 16
        %v896 = vor.u32 %v893, %v894
        %v898 = vshrl.u32 %v748, 16
        %v900 = vrot.slane %v898, 7
        %v901 = vshll.u32 %v748, 16
        %v903 = vor.u32 %v900, %v901
        %v905 = vshrl.u32 %v749, 16
        %v907 = vrot.slane %v905, 7
        %v908 = vshll.u32 %v749, 16
        %v910 = vor.u32 %v907, %v908
        %v912 = vshrl.u32 %v750, 16
        %v914 = vrot.slane %v912, 7
        %v915 = vshll.u32 %v750, 16
        %v917 = vor.u32 %v914, %v915
        %v919 = vshrl.u32 %v751, 16
        %v921 = vrot.slane %v919, 7
        %v922 = vshll.u32 %v751, 16
        %v924 = vor.u32 %v921, %v922
        %v926 = vshrl.u32 %v752, 16
        %v928 = vrot.slane %v926, 7
        %v929 = vshll.u32 %v752, 16
        %v931 = vor.u32 %v928, %v929
        %v933 = vshrl.u32 %v753, 16
        %v935 = vrot.slane %v933, 7
        %v936 = vshll.u32 %v753, 16
        %v938 = vor.u32 %v935, %v936
        %v940 = vshrl.u32 %v754, 16
        %v942 = vrot.slane %v940, 7
        %v943 = vshll.u32 %v754, 16
        %v945 = vor.u32 %v942, %v943
        %v947 = vshrl.u32 %v755, 16
        %v949 = vrot.slane %v947, 7
        %v950 = vshll.u32 %v755, 16
        %v952 = vor.u32 %v949, %v950
        %v954 = vshrl.u32 %v756, 16
        %v956 = vrot.slane %v954, 7
        %v957 = vshll.u32 %v756, 16
        %v959 = vor.u32 %v956, %v957
        %v961 = vshrl.u32 %v757, 16
        %v963 = vrot.slane %v961, 7
        %v964 = vshll.u32 %v757, 16
        %v966 = vor.u32 %v963, %v964
        %v968 = vshrl.u32 %v758, 16
        %v970 = vrot.slane %v968, 7
        %v971 = vshll.u32 %v758, 16
        %v973 = vor.u32 %v970, %v971
        %v975 = vshrl.u32 %v759, 16
        %v977 = vrot.slane %v975, 7
        %v978 = vshll.u32 %v759, 16
        %v980 = vor.u32 %v977, %v978
        %v982 = vshrl.u32 %v760, 16
        %v984 = vrot.slane %v982, 7
        %v985 = vshll.u32 %v760, 16
        %v987 = vor.u32 %v984, %v985
        %v989 = vshrl.u32 %v761, 16
        %v991 = vrot.slane %v989, 7
        %v992 = vshll.u32 %v761, 16
        %v994 = vor.u32 %v991, %v992
        %s1011 = scalar_lea.vmem [#allocation2], 24
        %vm1012 = vcmask 1047552
        %vm1013 = vsmask.f32 7938
        %vm1014 = vmand %vm1012, %vm1013
        %v1015 = vld [vmem:[%s1011] sm:$0xff]
        %v1016 = vsel %vm1014, %v889, %v1015
        %1017 = vst [vmem:[%s1011] sm:$0xff] %v1016
        %v1018 = vld [vmem:[%s1011 + $0x18] sm:$0xff]
        %v1019 = vsel %vm1014, %v896, %v1018
        %1020 = vst [vmem:[%s1011 + $0x18] sm:$0xff] %v1019
        %v1021 = vld [vmem:[%s1011 + $0x30] sm:$0xff]
        %v1022 = vsel %vm1014, %v903, %v1021
        %1023 = vst [vmem:[%s1011 + $0x30] sm:$0xff] %v1022
        %v1024 = vld [vmem:[%s1011 + $0x48] sm:$0xff]
        %v1025 = vsel %vm1014, %v910, %v1024
        %1026 = vst [vmem:[%s1011 + $0x48] sm:$0xff] %v1025
        %v1027 = vld [vmem:[%s1011 + $0x60] sm:$0xff]
        %v1028 = vsel %vm1014, %v917, %v1027
        %1029 = vst [vmem:[%s1011 + $0x60] sm:$0xff] %v1028
        %v1030 = vld [vmem:[%s1011 + $0x78] sm:$0xff]
        %v1031 = vsel %vm1014, %v924, %v1030
        %1032 = vst [vmem:[%s1011 + $0x78] sm:$0xff] %v1031
        %v1033 = vld [vmem:[%s1011 + $0x90] sm:$0xff]
        %v1034 = vsel %vm1014, %v931, %v1033
        %1035 = vst [vmem:[%s1011 + $0x90] sm:$0xff] %v1034
        %v1036 = vld [vmem:[%s1011 + $0xa8] sm:$0xff]
        %v1037 = vsel %vm1014, %v938, %v1036
        %1038 = vst [vmem:[%s1011 + $0xa8] sm:$0xff] %v1037
        %v1039 = vld [vmem:[%s1011 + $0xc0] sm:$0xff]
        %v1040 = vsel %vm1014, %v945, %v1039
        %1041 = vst [vmem:[%s1011 + $0xc0] sm:$0xff] %v1040
        %v1042 = vld [vmem:[%s1011 + $0xd8] sm:$0xff]
        %v1043 = vsel %vm1014, %v952, %v1042
        %1044 = vst [vmem:[%s1011 + $0xd8] sm:$0xff] %v1043
        %v1045 = vld [vmem:[%s1011 + $0xf0] sm:$0xff]
        %v1046 = vsel %vm1014, %v959, %v1045
        %1047 = vst [vmem:[%s1011 + $0xf0] sm:$0xff] %v1046
        %v1048 = vld [vmem:[%s1011 + $0x108] sm:$0xff]
        %v1049 = vsel %vm1014, %v966, %v1048
        %1050 = vst [vmem:[%s1011 + $0x108] sm:$0xff] %v1049
        %v1051 = vld [vmem:[%s1011 + $0x120] sm:$0xff]
        %v1052 = vsel %vm1014, %v973, %v1051
        %1053 = vst [vmem:[%s1011 + $0x120] sm:$0xff] %v1052
        %v1054 = vld [vmem:[%s1011 + $0x138] sm:$0xff]
        %v1055 = vsel %vm1014, %v980, %v1054
        %1056 = vst [vmem:[%s1011 + $0x138] sm:$0xff] %v1055
        %v1057 = vld [vmem:[%s1011 + $0x150] sm:$0xff]
        %v1058 = vsel %vm1014, %v987, %v1057
        %1059 = vst [vmem:[%s1011 + $0x150] sm:$0xff] %v1058
        %v1060 = vld [vmem:[%s1011 + $0x168] sm:$0xff]
        %v1061 = vsel %vm1014, %v994, %v1060
        %1062 = vst [vmem:[%s1011 + $0x168] sm:$0xff] %v1061
        %1063 = vst [vmem:[%s1011 + $0x8] sm:$0xff] %v746
        %1064 = vst [vmem:[%s1011 + $0x20] sm:$0xff] %v747
        %1065 = vst [vmem:[%s1011 + $0x38] sm:$0xff] %v748
        %1066 = vst [vmem:[%s1011 + $0x50] sm:$0xff] %v749
        %1067 = vst [vmem:[%s1011 + $0x68] sm:$0xff] %v750
        %1068 = vst [vmem:[%s1011 + $0x80] sm:$0xff] %v751
        %1069 = vst [vmem:[%s1011 + $0x98] sm:$0xff] %v752
        %1070 = vst [vmem:[%s1011 + $0xb0] sm:$0xff] %v753
        %1071 = vst [vmem:[%s1011 + $0xc8] sm:$0xff] %v754
        %1072 = vst [vmem:[%s1011 + $0xe0] sm:$0xff] %v755
        %1073 = vst [vmem:[%s1011 + $0xf8] sm:$0xff] %v756
        %1074 = vst [vmem:[%s1011 + $0x110] sm:$0xff] %v757
        %1075 = vst [vmem:[%s1011 + $0x128] sm:$0xff] %v758
        %1076 = vst [vmem:[%s1011 + $0x140] sm:$0xff] %v759
        %1077 = vst [vmem:[%s1011 + $0x158] sm:$0xff] %v760
        %1078 = vst [vmem:[%s1011 + $0x170] sm:$0xff] %v761
        %v1079 = vrot.slane %v887, 1
        %v1080 = vor.u32 %v884, %v1079
        %v1081 = vrot.slane %v894, 1
        %v1082 = vor.u32 %v891, %v1081
        %v1083 = vrot.slane %v901, 1
        %v1084 = vor.u32 %v898, %v1083
        %v1085 = vrot.slane %v908, 1
        %v1086 = vor.u32 %v905, %v1085
        %v1087 = vrot.slane %v915, 1
        %v1088 = vor.u32 %v912, %v1087
        %v1089 = vrot.slane %v922, 1
        %v1090 = vor.u32 %v919, %v1089
        %v1091 = vrot.slane %v929, 1
        %v1092 = vor.u32 %v926, %v1091
        %v1093 = vrot.slane %v936, 1
        %v1094 = vor.u32 %v933, %v1093
        %v1095 = vrot.slane %v943, 1
        %v1096 = vor.u32 %v940, %v1095
        %v1097 = vrot.slane %v950, 1
        %v1098 = vor.u32 %v947, %v1097
        %v1099 = vrot.slane %v957, 1
        %v1100 = vor.u32 %v954, %v1099
        %v1101 = vrot.slane %v964, 1
        %v1102 = vor.u32 %v961, %v1101
        %v1103 = vrot.slane %v971, 1
        %v1104 = vor.u32 %v968, %v1103
        %v1105 = vrot.slane %v978, 1
        %v1106 = vor.u32 %v975, %v1105
        %v1107 = vrot.slane %v985, 1
        %v1108 = vor.u32 %v982, %v1107
        %v1109 = vrot.slane %v992, 1
        %v1110 = vor.u32 %v989, %v1109
        %vm1127 = vsmask.f32 7424
        %vm1128 = vmand %vm1012, %vm1127
        %v1129 = vld [vmem:[%s1011 + $0x10] sm:$0xff]
        %v1130 = vsel %vm1128, %v1080, %v1129
        %1131 = vst [vmem:[%s1011 + $0x10] sm:$0xff] %v1130
        %v1132 = vld [vmem:[%s1011 + $0x28] sm:$0xff]
        %v1133 = vsel %vm1128, %v1082, %v1132
        %1134 = vst [vmem:[%s1011 + $0x28] sm:$0xff] %v1133
        %v1135 = vld [vmem:[%s1011 + $0x40] sm:$0xff]
        %v1136 = vsel %vm1128, %v1084, %v1135
        %1137 = vst [vmem:[%s1011 + $0x40] sm:$0xff] %v1136
        %v1138 = vld [vmem:[%s1011 + $0x58] sm:$0xff]
        %v1139 = vsel %vm1128, %v1086, %v1138
        %1140 = vst [vmem:[%s1011 + $0x58] sm:$0xff] %v1139
        %v1141 = vld [vmem:[%s1011 + $0x70] sm:$0xff]
        %v1142 = vsel %vm1128, %v1088, %v1141
        %1143 = vst [vmem:[%s1011 + $0x70] sm:$0xff] %v1142
        %v1144 = vld [vmem:[%s1011 + $0x88] sm:$0xff]
        %v1145 = vsel %vm1128, %v1090, %v1144
        %1146 = vst [vmem:[%s1011 + $0x88] sm:$0xff] %v1145
        %v1147 = vld [vmem:[%s1011 + $0xa0] sm:$0xff]
        %v1148 = vsel %vm1128, %v1092, %v1147
        %1149 = vst [vmem:[%s1011 + $0xa0] sm:$0xff] %v1148
        %v1150 = vld [vmem:[%s1011 + $0xb8] sm:$0xff]
        %v1151 = vsel %vm1128, %v1094, %v1150
        %1152 = vst [vmem:[%s1011 + $0xb8] sm:$0xff] %v1151
        %v1153 = vld [vmem:[%s1011 + $0xd0] sm:$0xff]
        %v1154 = vsel %vm1128, %v1096, %v1153
        %1155 = vst [vmem:[%s1011 + $0xd0] sm:$0xff] %v1154
        %v1156 = vld [vmem:[%s1011 + $0xe8] sm:$0xff]
        %v1157 = vsel %vm1128, %v1098, %v1156
        %1158 = vst [vmem:[%s1011 + $0xe8] sm:$0xff] %v1157
        %v1159 = vld [vmem:[%s1011 + $0x100] sm:$0xff]
        %v1160 = vsel %vm1128, %v1100, %v1159
        %1161 = vst [vmem:[%s1011 + $0x100] sm:$0xff] %v1160
        %v1162 = vld [vmem:[%s1011 + $0x118] sm:$0xff]
        %v1163 = vsel %vm1128, %v1102, %v1162
        %1164 = vst [vmem:[%s1011 + $0x118] sm:$0xff] %v1163
        %v1165 = vld [vmem:[%s1011 + $0x130] sm:$0xff]
        %v1166 = vsel %vm1128, %v1104, %v1165
        %1167 = vst [vmem:[%s1011 + $0x130] sm:$0xff] %v1166
        %v1168 = vld [vmem:[%s1011 + $0x148] sm:$0xff]
        %v1169 = vsel %vm1128, %v1106, %v1168
        %1170 = vst [vmem:[%s1011 + $0x148] sm:$0xff] %v1169
        %v1171 = vld [vmem:[%s1011 + $0x160] sm:$0xff]
        %v1172 = vsel %vm1128, %v1108, %v1171
        %1173 = vst [vmem:[%s1011 + $0x160] sm:$0xff] %v1172
        %v1174 = vld [vmem:[%s1011 + $0x178] sm:$0xff]
        %v1175 = vsel %vm1128, %v1110, %v1174
        %1176 = vst [vmem:[%s1011 + $0x178] sm:$0xff] %v1175
        %v1177 = vld [vmem:[#allocation2] sm:$0xff]
        %v1178 = vld [vmem:[#allocation2 + $0x8] sm:$0xff]
        %v1179 = vld [vmem:[#allocation2 + $0x10] sm:$0xff]
        %v1180 = vld [vmem:[#allocation2 + $0x18] sm:$0xff]
        %v1181 = vld [vmem:[#allocation2 + $0x20] sm:$0xff]
        %v1182 = vld [vmem:[#allocation2 + $0x28] sm:$0xff]
        %v1183 = vld [vmem:[#allocation2 + $0x30] sm:$0xff]
        %v1184 = vld [vmem:[#allocation2 + $0x38] sm:$0xff]
        %v1185 = vld [vmem:[#allocation2 + $0x40] sm:$0xff]
        %v1186 = vld [vmem:[#allocation2 + $0x48] sm:$0xff]
        %v1187 = vld [vmem:[#allocation2 + $0x50] sm:$0xff]
        %v1188 = vld [vmem:[#allocation2 + $0x58] sm:$0xff]
        %v1189 = vld [vmem:[#allocation2 + $0x60] sm:$0xff]
        %v1190 = vld [vmem:[#allocation2 + $0x68] sm:$0xff]
        %v1191 = vld [vmem:[#allocation2 + $0x70] sm:$0xff]
        %v1192 = vld [vmem:[#allocation2 + $0x78] sm:$0xff]
        %v1193 = vld [vmem:[#allocation2 + $0x80] sm:$0xff]
        %v1194 = vld [vmem:[#allocation2 + $0x88] sm:$0xff]
        %v1195 = vld [vmem:[#allocation2 + $0x90] sm:$0xff]
        %v1196 = vld [vmem:[#allocation2 + $0x98] sm:$0xff]
        %v1197 = vld [vmem:[#allocation2 + $0xa0] sm:$0xff]
        %v1198 = vld [vmem:[#allocation2 + $0xa8] sm:$0xff]
        %v1199 = vld [vmem:[#allocation2 + $0xb0] sm:$0xff]
        %v1200 = vld [vmem:[#allocation2 + $0xb8] sm:$0xff]
        %v1201 = vld [vmem:[#allocation2 + $0xc0] sm:$0xff]
        %v1202 = vld [vmem:[#allocation2 + $0xc8] sm:$0xff]
        %v1203 = vld [vmem:[#allocation2 + $0xd0] sm:$0xff]
        %v1204 = vld [vmem:[#allocation2 + $0xd8] sm:$0xff]
        %v1205 = vld [vmem:[#allocation2 + $0xe0] sm:$0xff]
        %v1206 = vld [vmem:[#allocation2 + $0xe8] sm:$0xff]
        %v1207 = vld [vmem:[#allocation2 + $0xf0] sm:$0xff]
        %v1208 = vld [vmem:[#allocation2 + $0xf8] sm:$0xff]
        %v1209 = vld [vmem:[#allocation2 + $0x100] sm:$0xff]
        %v1210 = vld [vmem:[#allocation2 + $0x108] sm:$0xff]
        %v1211 = vld [vmem:[#allocation2 + $0x110] sm:$0xff]
        %v1212 = vld [vmem:[#allocation2 + $0x118] sm:$0xff]
        %v1213 = vld [vmem:[#allocation2 + $0x120] sm:$0xff]
        %v1214 = vld [vmem:[#allocation2 + $0x128] sm:$0xff]
        %v1215 = vld [vmem:[#allocation2 + $0x130] sm:$0xff]
        %v1216 = vld [vmem:[#allocation2 + $0x138] sm:$0xff]
        %v1217 = vld [vmem:[#allocation2 + $0x140] sm:$0xff]
        %v1218 = vld [vmem:[#allocation2 + $0x148] sm:$0xff]
        %v1219 = vld [vmem:[#allocation2 + $0x150] sm:$0xff]
        %v1220 = vld [vmem:[#allocation2 + $0x158] sm:$0xff]
        %v1221 = vld [vmem:[#allocation2 + $0x160] sm:$0xff]
        %v1222 = vld [vmem:[#allocation2 + $0x168] sm:$0xff]
        %v1223 = vld [vmem:[#allocation2 + $0x170] sm:$0xff]
        %v1224 = vld [vmem:[#allocation2 + $0x178] sm:$0xff]
        %v1225 = vld [vmem:[#allocation6] sm:$0xf]
        %v1226 = vld [vmem:[#allocation6 + $0x4] sm:$0xf]
        %v1227 = vld [vmem:[#allocation6 + $0x8] sm:$0xf]
        %v1228 = vld [vmem:[#allocation6 + $0xc] sm:$0xf]
        %v1229 = vld [vmem:[#allocation6 + $0x10] sm:$0xf]
        %v1230 = vld [vmem:[#allocation6 + $0x14] sm:$0xf]
        %v1231 = vld [vmem:[#allocation6 + $0x18] sm:$0xf]
        %v1232 = vld [vmem:[#allocation6 + $0x1c] sm:$0xf]
        %v1233 = vld [vmem:[#allocation6 + $0x20] sm:$0xf]
        %v1234 = vld [vmem:[#allocation6 + $0x24] sm:$0xf]
        %v1235 = vld [vmem:[#allocation6 + $0x28] sm:$0xf]
        %v1236 = vld [vmem:[#allocation6 + $0x2c] sm:$0xf]
        %v1237 = vld [vmem:[#allocation6 + $0x30] sm:$0xf]
        %v1238 = vld [vmem:[#allocation6 + $0x34] sm:$0xf]
        %v1239 = vld [vmem:[#allocation6 + $0x38] sm:$0xf]
        %v1240 = vld [vmem:[#allocation6 + $0x3c] sm:$0xf]
        %v1241 = vld [vmem:[#allocation6 + $0x40] sm:$0xf]
        %v1242 = vld [vmem:[#allocation6 + $0x44] sm:$0xf]
        %v1243 = vld [vmem:[#allocation6 + $0x48] sm:$0xf]
        %v1244 = vld [vmem:[#allocation6 + $0x4c] sm:$0xf]
        %v1245 = vld [vmem:[#allocation6 + $0x50] sm:$0xf]
        %v1246 = vld [vmem:[#allocation6 + $0x54] sm:$0xf]
        %v1247 = vld [vmem:[#allocation6 + $0x58] sm:$0xf]
        %v1248 = vld [vmem:[#allocation6 + $0x5c] sm:$0xf]
        %v1249 = vld [vmem:[#allocation6 + $0x60] sm:$0xf]
        %v1250 = vld [vmem:[#allocation6 + $0x64] sm:$0xf]
        %v1251 = vld [vmem:[#allocation6 + $0x68] sm:$0xf]
        %v1252 = vld [vmem:[#allocation6 + $0x6c] sm:$0xf]
        %v1253 = vld [vmem:[#allocation6 + $0x70] sm:$0xf]
        %v1254 = vld [vmem:[#allocation6 + $0x74] sm:$0xf]
        %v1255 = vld [vmem:[#allocation6 + $0x78] sm:$0xf]
        %v1256 = vld [vmem:[#allocation6 + $0x7c] sm:$0xf]
        %v1257 = vld [vmem:[#allocation6 + $0x80] sm:$0xf]
        %v1258 = vld [vmem:[#allocation6 + $0x84] sm:$0xf]
        %v1259 = vld [vmem:[#allocation6 + $0x88] sm:$0xf]
        %v1260 = vld [vmem:[#allocation6 + $0x8c] sm:$0xf]
        %v1261 = vld [vmem:[#allocation6 + $0x90] sm:$0xf]
        %v1262 = vld [vmem:[#allocation6 + $0x94] sm:$0xf]
        %v1263 = vld [vmem:[#allocation6 + $0x98] sm:$0xf]
        %v1264 = vld [vmem:[#allocation6 + $0x9c] sm:$0xf]
        %v1265 = vld [vmem:[#allocation6 + $0xa0] sm:$0xf]
        %v1266 = vld [vmem:[#allocation6 + $0xa4] sm:$0xf]
        %v1267 = vld [vmem:[#allocation6 + $0xa8] sm:$0xf]
        %v1268 = vld [vmem:[#allocation6 + $0xac] sm:$0xf]
        %v1269 = vld [vmem:[#allocation6 + $0xb0] sm:$0xf]
        %v1270 = vld [vmem:[#allocation6 + $0xb4] sm:$0xf]
        %v1271 = vld [vmem:[#allocation6 + $0xb8] sm:$0xf]
        %v1272 = vld [vmem:[#allocation6 + $0xbc] sm:$0xf]
        %v1273 = vld [vmem:[%s4] sm:$0x1]
        %v1275 = vlaneseq
        %v1276 = vshrl.u32 %v1275, 7
        %v1277 = vsub.s32 0, %v1276
        %v1278 = vrot.slane %v1273, %v1277
        %v1328 = vunpack.c.l.b16 %v1225
        %v1329 = vunpack.c.l.b16 %v1226
        %v1330 = vunpack.c.l.b16 %v1227
        %v1331 = vunpack.c.l.b16 %v1228
        %v1332 = vunpack.c.l.b16 %v1229
        %v1333 = vunpack.c.l.b16 %v1230
        %v1334 = vunpack.c.l.b16 %v1231
        %v1335 = vunpack.c.l.b16 %v1232
        %v1336 = vunpack.c.l.b16 %v1233
        %v1337 = vunpack.c.l.b16 %v1234
        %v1338 = vunpack.c.l.b16 %v1235
        %v1339 = vunpack.c.l.b16 %v1236
        %v1340 = vunpack.c.l.b16 %v1237
        %v1341 = vunpack.c.l.b16 %v1238
        %v1342 = vunpack.c.l.b16 %v1239
        %v1343 = vunpack.c.l.b16 %v1240
        %v1344 = vunpack.c.l.b16 %v1241
        %v1345 = vunpack.c.l.b16 %v1242
        %v1346 = vunpack.c.l.b16 %v1243
        %v1347 = vunpack.c.l.b16 %v1244
        %v1348 = vunpack.c.l.b16 %v1245
        %v1349 = vunpack.c.l.b16 %v1246
        %v1350 = vunpack.c.l.b16 %v1247
        %v1351 = vunpack.c.l.b16 %v1248
        %v1352 = vunpack.c.l.b16 %v1249
        %v1353 = vunpack.c.l.b16 %v1250
        %v1354 = vunpack.c.l.b16 %v1251
        %v1355 = vunpack.c.l.b16 %v1252
        %v1356 = vunpack.c.l.b16 %v1253
        %v1357 = vunpack.c.l.b16 %v1254
        %v1358 = vunpack.c.l.b16 %v1255
        %v1359 = vunpack.c.l.b16 %v1256
        %v1360 = vunpack.c.l.b16 %v1257
        %v1361 = vunpack.c.l.b16 %v1258
        %v1362 = vunpack.c.l.b16 %v1259
        %v1363 = vunpack.c.l.b16 %v1260
        %v1364 = vunpack.c.l.b16 %v1261
        %v1365 = vunpack.c.l.b16 %v1262
        %v1366 = vunpack.c.l.b16 %v1263
        %v1367 = vunpack.c.l.b16 %v1264
        %v1368 = vunpack.c.l.b16 %v1265
        %v1369 = vunpack.c.l.b16 %v1266
        %v1370 = vunpack.c.l.b16 %v1267
        %v1371 = vunpack.c.l.b16 %v1268
        %v1372 = vunpack.c.l.b16 %v1269
        %v1373 = vunpack.c.l.b16 %v1270
        %v1374 = vunpack.c.l.b16 %v1271
        %v1375 = vunpack.c.l.b16 %v1272
        %v1376 = vpack.c.b16 %v1329, %v1328
        %v1377 = vpack.c.b16 %v1331, %v1330
        %v1378 = vpack.c.b16 %v1333, %v1332
        %v1379 = vpack.c.b16 %v1335, %v1334
        %v1380 = vpack.c.b16 %v1337, %v1336
        %v1381 = vpack.c.b16 %v1339, %v1338
        %v1382 = vpack.c.b16 %v1341, %v1340
        %v1383 = vpack.c.b16 %v1343, %v1342
        %v1384 = vpack.c.b16 %v1345, %v1344
        %v1385 = vpack.c.b16 %v1347, %v1346
        %v1386 = vpack.c.b16 %v1349, %v1348
        %v1387 = vpack.c.b16 %v1351, %v1350
        %v1388 = vpack.c.b16 %v1353, %v1352
        %v1389 = vpack.c.b16 %v1355, %v1354
        %v1390 = vpack.c.b16 %v1357, %v1356
        %v1391 = vpack.c.b16 %v1359, %v1358
        %v1392 = vpack.c.b16 %v1361, %v1360
        %v1393 = vpack.c.b16 %v1363, %v1362
        %v1394 = vpack.c.b16 %v1365, %v1364
        %v1395 = vpack.c.b16 %v1367, %v1366
        %v1396 = vpack.c.b16 %v1369, %v1368
        %v1397 = vpack.c.b16 %v1371, %v1370
        %v1398 = vpack.c.b16 %v1373, %v1372
        %v1399 = vpack.c.b16 %v1375, %v1374
        %1424 = vmatprep.subr.bf16.mxu0 0
        %1425 = vmatpush1.bf16.msra.mxu0 %v1376
        %1426 = vmatprep.subr.bf16.mxu0 0
        %1427 = vmatpush1.bf16.msra.mxu0 %v1377
        %1428 = vmatprep.subr.bf16.mxu0 0
        %1429 = vmatpush1.bf16.msra.mxu0 %v1378
        %1430 = vmatprep.subr.bf16.mxu0 0
        %1431 = vmatpush1.bf16.msra.mxu0 %v1379
        %1432 = vmatprep.subr.bf16.mxu0 0
        %1433 = vmatpush1.bf16.msra.mxu0 %v1380
        %1434 = vmatprep.subr.bf16.mxu0 0
        %1435 = vmatpush1.bf16.msra.mxu0 %v1381
        %1436 = vmatprep.subr.bf16.mxu0 0
        %1437 = vmatpush1.bf16.msra.mxu0 %v1382
        %1438 = vmatprep.subr.bf16.mxu0 0
        %1439 = vmatpush1.bf16.msra.mxu0 %v1383
        %1440 = vmatprep.subr.bf16.mxu0 0
        %1441 = vmatpush1.bf16.msra.mxu0 %v1384
        %1442 = vmatprep.subr.bf16.mxu0 0
        %1443 = vmatpush1.bf16.msra.mxu0 %v1385
        %1444 = vmatprep.subr.bf16.mxu0 0
        %1445 = vmatpush1.bf16.msra.mxu0 %v1386
        %1446 = vmatprep.subr.bf16.mxu0 0
        %1447 = vmatpush1.bf16.msra.mxu0 %v1387
        %1448 = vmatprep.subr.bf16.mxu0 0
        %1449 = vmatpush1.bf16.msra.mxu0 %v1388
        %1450 = vmatprep.subr.bf16.mxu0 0
        %1451 = vmatpush1.bf16.msra.mxu0 %v1389
        %1452 = vmatprep.subr.bf16.mxu0 0
        %1453 = vmatpush1.bf16.msra.mxu0 %v1390
        %1454 = vmatprep.subr.bf16.mxu0 0
        %1455 = vmatpush1.bf16.msra.mxu0 %v1391
        %1456 = vmatprep.mubr.bf16.mxu0 %v1178
        %1457 = vmatmul.mubr.bf16.gmra.mrb[0].mxu0 %v1177
        %v1458 = vpop.f32.mrb[0].mxu0
        %v1459 = vadd.f32 %v1278, %v1458
        %v1460 = vpop.f32.mrb[0].mxu0
        %v1461 = vpop.f32.mrb[0].mxu0
        %v1462 = vadd.f32 %v1278, %v1461
        %v1463 = vpop.f32.mrb[0].mxu0
        %1464 = vmatprep.mubr.bf16.mxu0 %v1181
        %1465 = vmatmul.mubr.bf16.gmra.mrb[0].mxu0 %v1180
        %v1466 = vpop.f32.mrb[0].mxu0
        %v1467 = vadd.f32 %v1278, %v1466
        %v1468 = vpop.f32.mrb[0].mxu0
        %v1469 = vpop.f32.mrb[0].mxu0
        %v1470 = vadd.f32 %v1278, %v1469
        %v1471 = vpop.f32.mrb[0].mxu0
        %1472 = vmatprep.mubr.bf16.mxu0 %v1184
        %1473 = vmatmul.mubr.bf16.gmra.mrb[0].mxu0 %v1183
        %v1474 = vpop.f32.mrb[0].mxu0
        %v1475 = vadd.f32 %v1278, %v1474
        %v1476 = vpop.f32.mrb[0].mxu0
        %v1477 = vpop.f32.mrb[0].mxu0
        %v1478 = vadd.f32 %v1278, %v1477
        %v1479 = vpop.f32.mrb[0].mxu0
        %1480 = vmatprep.mubr.bf16.mxu0 %v1187
        %1481 = vmatmul.mubr.bf16.gmra.mrb[0].mxu0 %v1186
        %v1482 = vpop.f32.mrb[0].mxu0
        %v1483 = vadd.f32 %v1278, %v1482
        %v1484 = vpop.f32.mrb[0].mxu0
        %v1485 = vpop.f32.mrb[0].mxu0
        %v1486 = vadd.f32 %v1278, %v1485
        %v1487 = vpop.f32.mrb[0].mxu0
        %1488 = vmatprep.mubr.bf16.mxu0 %v1190
        %1489 = vmatmul.mubr.bf16.gmra.mrb[0].mxu0 %v1189
        %v1490 = vpop.f32.mrb[0].mxu0
        %v1491 = vadd.f32 %v1278, %v1490
        %v1492 = vpop.f32.mrb[0].mxu0
        %v1493 = vpop.f32.mrb[0].mxu0
        %v1494 = vadd.f32 %v1278, %v1493
        %v1495 = vpop.f32.mrb[0].mxu0
        %1496 = vmatprep.mubr.bf16.mxu0 %v1193
        %1497 = vmatmul.mubr.bf16.gmra.mrb[0].mxu0 %v1192
        %v1498 = vpop.f32.mrb[0].mxu0
        %v1499 = vadd.f32 %v1278, %v1498
        %v1500 = vpop.f32.mrb[0].mxu0
        %v1501 = vpop.f32.mrb[0].mxu0
        %v1502 = vadd.f32 %v1278, %v1501
        %v1503 = vpop.f32.mrb[0].mxu0
        %1504 = vmatprep.mubr.bf16.mxu0 %v1196
        %1505 = vmatmul.mubr.bf16.gmra.mrb[0].mxu0 %v1195
        %v1506 = vpop.f32.mrb[0].mxu0
        %v1507 = vadd.f32 %v1278, %v1506
        %v1508 = vpop.f32.mrb[0].mxu0
        %v1509 = vpop.f32.mrb[0].mxu0
        %v1510 = vadd.f32 %v1278, %v1509
        %v1511 = vpop.f32.mrb[0].mxu0
        %1512 = vmatprep.mubr.bf16.mxu0 %v1199
        %1513 = vmatmul.mubr.bf16.gmra.mrb[0].mxu0 %v1198
        %v1514 = vpop.f32.mrb[0].mxu0
        %v1515 = vadd.f32 %v1278, %v1514
        %v1516 = vpop.f32.mrb[0].mxu0
        %v1517 = vpop.f32.mrb[0].mxu0
        %v1518 = vadd.f32 %v1278, %v1517
        %v1519 = vpop.f32.mrb[0].mxu0
        %1520 = vmatprep.mubr.bf16.mxu0 %v1202
        %1521 = vmatmul.mubr.bf16.gmra.mrb[0].mxu0 %v1201
        %v1522 = vpop.f32.mrb[0].mxu0
        %v1523 = vadd.f32 %v1278, %v1522
        %v1524 = vpop.f32.mrb[0].mxu0
        %v1525 = vpop.f32.mrb[0].mxu0
        %v1526 = vadd.f32 %v1278, %v1525
        %v1527 = vpop.f32.mrb[0].mxu0
        %1528 = vmatprep.mubr.bf16.mxu0 %v1205
        %1529 = vmatmul.mubr.bf16.gmra.mrb[0].mxu0 %v1204
        %v1530 = vpop.f32.mrb[0].mxu0
        %v1531 = vadd.f32 %v1278, %v1530
        %v1532 = vpop.f32.mrb[0].mxu0
        %v1533 = vpop.f32.mrb[0].mxu0
        %v1534 = vadd.f32 %v1278, %v1533
        %v1535 = vpop.f32.mrb[0].mxu0
        %1536 = vmatprep.mubr.bf16.mxu0 %v1208
        %1537 = vmatmul.mubr.bf16.gmra.mrb[0].mxu0 %v1207
        %v1538 = vpop.f32.mrb[0].mxu0
        %v1539 = vadd.f32 %v1278, %v1538
        %v1540 = vpop.f32.mrb[0].mxu0
        %v1541 = vpop.f32.mrb[0].mxu0
        %v1542 = vadd.f32 %v1278, %v1541
        %v1543 = vpop.f32.mrb[0].mxu0
        %1544 = vmatprep.mubr.bf16.mxu0 %v1211
        %1545 = vmatmul.mubr.bf16.gmra.mrb[0].mxu0 %v1210
        %v1546 = vpop.f32.mrb[0].mxu0
        %v1547 = vadd.f32 %v1278, %v1546
        %v1548 = vpop.f32.mrb[0].mxu0
        %v1549 = vpop.f32.mrb[0].mxu0
        %v1550 = vadd.f32 %v1278, %v1549
        %v1551 = vpop.f32.mrb[0].mxu0
        %1552 = vmatprep.mubr.bf16.mxu0 %v1214
        %1553 = vmatmul.mubr.bf16.gmra.mrb[0].mxu0 %v1213
        %v1554 = vpop.f32.mrb[0].mxu0
        %v1555 = vadd.f32 %v1278, %v1554
        %v1556 = vpop.f32.mrb[0].mxu0
        %v1557 = vpop.f32.mrb[0].mxu0
        %v1558 = vadd.f32 %v1278, %v1557
        %v1559 = vpop.f32.mrb[0].mxu0
        %1560 = vmatprep.mubr.bf16.mxu0 %v1217
        %1561 = vmatmul.mubr.bf16.gmra.mrb[0].mxu0 %v1216
        %v1562 = vpop.f32.mrb[0].mxu0
        %v1563 = vadd.f32 %v1278, %v1562
        %v1564 = vpop.f32.mrb[0].mxu0
        %v1565 = vpop.f32.mrb[0].mxu0
        %v1566 = vadd.f32 %v1278, %v1565
        %v1567 = vpop.f32.mrb[0].mxu0
        %1568 = vmatprep.mubr.bf16.mxu0 %v1220
        %1569 = vmatmul.mubr.bf16.gmra.mrb[0].mxu0 %v1219
        %v1570 = vpop.f32.mrb[0].mxu0
        %v1571 = vadd.f32 %v1278, %v1570
        %v1572 = vpop.f32.mrb[0].mxu0
        %v1573 = vpop.f32.mrb[0].mxu0
        %v1574 = vadd.f32 %v1278, %v1573
        %v1575 = vpop.f32.mrb[0].mxu0
        %1576 = vmatprep.mubr.bf16.mxu0 %v1223
        %1577 = vmatmul.mubr.bf16.gmra.mrb[0].mxu0 %v1222
        %v1578 = vpop.f32.mrb[0].mxu0
        %v1579 = vadd.f32 %v1278, %v1578
        %v1580 = vpop.f32.mrb[0].mxu0
        %v1581 = vpop.f32.mrb[0].mxu0
        %v1582 = vadd.f32 %v1278, %v1581
        %v1583 = vpop.f32.mrb[0].mxu0
        %1584 = vdwg.mxu0
        %1585 = vmatprep.subr.bf16.mxu0 0
        %1586 = vmatpush1.bf16.msra.mxu0 %v1392
        %1587 = vmatprep.subr.bf16.mxu0 0
        %1588 = vmatpush1.bf16.msra.mxu0 %v1393
        %1589 = vmatprep.subr.bf16.mxu0 0
        %1590 = vmatpush1.bf16.msra.mxu0 %v1394
        %1591 = vmatprep.subr.bf16.mxu0 0
        %1592 = vmatpush1.bf16.msra.mxu0 %v1395
        %1593 = vmatprep.subr.bf16.mxu0 0
        %1594 = vmatpush1.bf16.msra.mxu0 %v1396
        %1595 = vmatprep.subr.bf16.mxu0 0
        %1596 = vmatpush1.bf16.msra.mxu0 %v1397
        %1597 = vmatprep.subr.bf16.mxu0 0
        %1598 = vmatpush1.bf16.msra.mxu0 %v1398
        %1599 = vmatprep.subr.bf16.mxu0 0
        %1600 = vmatpush1.bf16.msra.mxu0 %v1399
        %1601 = vmatprep.subr.bf16.mxu0 0
        %1602 = vmatpush1.bf16.msra.mxu0 0
        %1603 = vmatprep.subr.bf16.mxu0 0
        %1604 = vmatpush1.bf16.msra.mxu0 0
        %1605 = vmatprep.subr.bf16.mxu0 0
        %1606 = vmatpush1.bf16.msra.mxu0 0
        %1607 = vmatprep.subr.bf16.mxu0 0
        %1608 = vmatpush1.bf16.msra.mxu0 0
        %1609 = vmatprep.subr.bf16.mxu0 0
        %1610 = vmatpush1.bf16.msra.mxu0 0
        %1611 = vmatprep.subr.bf16.mxu0 0
        %1612 = vmatpush1.bf16.msra.mxu0 0
        %1613 = vmatprep.subr.bf16.mxu0 0
        %1614 = vmatpush1.bf16.msra.mxu0 0
        %1615 = vmatprep.subr.bf16.mxu0 0
        %1616 = vmatpush1.bf16.msra.mxu0 0
        %1617 = vmatprep.mubr.bf16.mxu0 0
        %1618 = vmatmul.mubr.bf16.gmra.mrb[0].mxu0 %v1179
        %v1619 = vpop.f32.mrb[0].mxu0
        %v1620 = vadd.f32 %v1459, %v1619
        %v1621 = vpop.f32.mrb[0].mxu0
        %v1622 = vpop.f32.mrb[0].mxu0
        %v1623 = vadd.f32 %v1462, %v1622
        %v1624 = vpop.f32.mrb[0].mxu0
        %1625 = vmatprep.mubr.bf16.mxu0 0
        %1626 = vmatmul.mubr.bf16.gmra.mrb[0].mxu0 %v1182
        %v1627 = vpop.f32.mrb[0].mxu0
        %v1628 = vadd.f32 %v1467, %v1627
        %v1629 = vpop.f32.mrb[0].mxu0
        %v1630 = vpop.f32.mrb[0].mxu0
        %v1631 = vadd.f32 %v1470, %v1630
        %v1632 = vpop.f32.mrb[0].mxu0
        %1633 = vmatprep.mubr.bf16.mxu0 0
        %1634 = vmatmul.mubr.bf16.gmra.mrb[0].mxu0 %v1185
        %v1635 = vpop.f32.mrb[0].mxu0
        %v1636 = vadd.f32 %v1475, %v1635
        %v1637 = vpop.f32.mrb[0].mxu0
        %v1638 = vpop.f32.mrb[0].mxu0
        %v1639 = vadd.f32 %v1478, %v1638
        %v1640 = vpop.f32.mrb[0].mxu0
        %1641 = vmatprep.mubr.bf16.mxu0 0
        %1642 = vmatmul.mubr.bf16.gmra.mrb[0].mxu0 %v1188
        %v1643 = vpop.f32.mrb[0].mxu0
        %v1644 = vadd.f32 %v1483, %v1643
        %v1645 = vpop.f32.mrb[0].mxu0
        %v1646 = vpop.f32.mrb[0].mxu0
        %v1647 = vadd.f32 %v1486, %v1646
        %v1648 = vpop.f32.mrb[0].mxu0
        %1649 = vmatprep.mubr.bf16.mxu0 0
        %1650 = vmatmul.mubr.bf16.gmra.mrb[0].mxu0 %v1191
        %v1651 = vpop.f32.mrb[0].mxu0
        %v1652 = vadd.f32 %v1491, %v1651
        %v1653 = vpop.f32.mrb[0].mxu0
        %v1654 = vpop.f32.mrb[0].mxu0
        %v1655 = vadd.f32 %v1494, %v1654
        %v1656 = vpop.f32.mrb[0].mxu0
        %1657 = vmatprep.mubr.bf16.mxu0 0
        %1658 = vmatmul.mubr.bf16.gmra.mrb[0].mxu0 %v1194
        %v1659 = vpop.f32.mrb[0].mxu0
        %v1660 = vadd.f32 %v1499, %v1659
        %v1661 = vpop.f32.mrb[0].mxu0
        %v1662 = vpop.f32.mrb[0].mxu0
        %v1663 = vadd.f32 %v1502, %v1662
        %v1664 = vpop.f32.mrb[0].mxu0
        %1665 = vmatprep.mubr.bf16.mxu0 0
        %1666 = vmatmul.mubr.bf16.gmra.mrb[0].mxu0 %v1197
        %v1667 = vpop.f32.mrb[0].mxu0
        %v1668 = vadd.f32 %v1507, %v1667
        %v1669 = vpop.f32.mrb[0].mxu0
        %v1670 = vpop.f32.mrb[0].mxu0
        %v1671 = vadd.f32 %v1510, %v1670
        %v1672 = vpop.f32.mrb[0].mxu0
        %1673 = vmatprep.mubr.bf16.mxu0 0
        %1674 = vmatmul.mubr.bf16.gmra.mrb[0].mxu0 %v1200
        %v1675 = vpop.f32.mrb[0].mxu0
        %v1676 = vadd.f32 %v1515, %v1675
        %v1677 = vpop.f32.mrb[0].mxu0
        %v1678 = vpop.f32.mrb[0].mxu0
        %v1679 = vadd.f32 %v1518, %v1678
        %v1680 = vpop.f32.mrb[0].mxu0
        %1681 = vmatprep.mubr.bf16.mxu0 0
        %1682 = vmatmul.mubr.bf16.gmra.mrb[0].mxu0 %v1203
        %v1683 = vpop.f32.mrb[0].mxu0
        %v1684 = vadd.f32 %v1523, %v1683
        %v1685 = vpop.f32.mrb[0].mxu0
        %v1686 = vpop.f32.mrb[0].mxu0
        %v1687 = vadd.f32 %v1526, %v1686
        %v1688 = vpop.f32.mrb[0].mxu0
        %1689 = vmatprep.mubr.bf16.mxu0 0
        %1690 = vmatmul.mubr.bf16.gmra.mrb[0].mxu0 %v1206
        %v1691 = vpop.f32.mrb[0].mxu0
        %v1692 = vadd.f32 %v1531, %v1691
        %v1693 = vpop.f32.mrb[0].mxu0
        %v1694 = vpop.f32.mrb[0].mxu0
        %v1695 = vadd.f32 %v1534, %v1694
        %v1696 = vpop.f32.mrb[0].mxu0
        %1697 = vmatprep.mubr.bf16.mxu0 0
        %1698 = vmatmul.mubr.bf16.gmra.mrb[0].mxu0 %v1209
        %v1699 = vpop.f32.mrb[0].mxu0
        %v1700 = vadd.f32 %v1539, %v1699
        %v1701 = vpop.f32.mrb[0].mxu0
        %v1702 = vpop.f32.mrb[0].mxu0
        %v1703 = vadd.f32 %v1542, %v1702
        %v1704 = vpop.f32.mrb[0].mxu0
        %1705 = vmatprep.mubr.bf16.mxu0 0
        %1706 = vmatmul.mubr.bf16.gmra.mrb[0].mxu0 %v1212
        %v1707 = vpop.f32.mrb[0].mxu0
        %v1708 = vadd.f32 %v1547, %v1707
        %v1709 = vpop.f32.mrb[0].mxu0
        %v1710 = vpop.f32.mrb[0].mxu0
        %v1711 = vadd.f32 %v1550, %v1710
        %v1712 = vpop.f32.mrb[0].mxu0
        %1713 = vmatprep.mubr.bf16.mxu0 0
        %1714 = vmatmul.mubr.bf16.gmra.mrb[0].mxu0 %v1215
        %v1715 = vpop.f32.mrb[0].mxu0
        %v1716 = vadd.f32 %v1555, %v1715
        %v1717 = vpop.f32.mrb[0].mxu0
        %v1718 = vpop.f32.mrb[0].mxu0
        %v1719 = vadd.f32 %v1558, %v1718
        %v1720 = vpop.f32.mrb[0].mxu0
        %1721 = vmatprep.mubr.bf16.mxu0 0
        %1722 = vmatmul.mubr.bf16.gmra.mrb[0].mxu0 %v1218
        %v1723 = vpop.f32.mrb[0].mxu0
        %v1724 = vadd.f32 %v1563, %v1723
        %v1725 = vpop.f32.mrb[0].mxu0
        %v1726 = vpop.f32.mrb[0].mxu0
        %v1727 = vadd.f32 %v1566, %v1726
        %v1728 = vpop.f32.mrb[0].mxu0
        %1729 = vmatprep.mubr.bf16.mxu0 0
        %1730 = vmatmul.mubr.bf16.gmra.mrb[0].mxu0 %v1221
        %v1731 = vpop.f32.mrb[0].mxu0
        %v1732 = vadd.f32 %v1571, %v1731
        %v1733 = vpop.f32.mrb[0].mxu0
        %v1734 = vpop.f32.mrb[0].mxu0
        %v1735 = vadd.f32 %v1574, %v1734
        %v1736 = vpop.f32.mrb[0].mxu0
        %1737 = vmatprep.mubr.bf16.mxu0 0
        %1738 = vmatmul.mubr.bf16.gmra.mrb[0].mxu0 %v1224
        %v1739 = vpop.f32.mrb[0].mxu0
        %v1740 = vadd.f32 %v1579, %v1739
        %v1741 = vpop.f32.mrb[0].mxu0
        %v1742 = vpop.f32.mrb[0].mxu0
        %v1743 = vadd.f32 %v1582, %v1742
        %v1744 = vpop.f32.mrb[0].mxu0
        %1745 = vdwg.mxu0
        %v1746 = vld [vmem:[%s1011] sm:$0xff]
        %v1747 = vld [vmem:[%s1011 + $0x8] sm:$0xff]
        %v1748 = vld [vmem:[%s1011 + $0x10] sm:$0xff]
        %v1749 = vld [vmem:[%s1011 + $0x18] sm:$0xff]
        %v1750 = vld [vmem:[%s1011 + $0x20] sm:$0xff]
        %v1751 = vld [vmem:[%s1011 + $0x28] sm:$0xff]
        %v1752 = vld [vmem:[%s1011 + $0x30] sm:$0xff]
        %v1753 = vld [vmem:[%s1011 + $0x38] sm:$0xff]
        %v1754 = vld [vmem:[%s1011 + $0x40] sm:$0xff]
        %v1755 = vld [vmem:[%s1011 + $0x48] sm:$0xff]
        %v1756 = vld [vmem:[%s1011 + $0x50] sm:$0xff]
        %v1757 = vld [vmem:[%s1011 + $0x58] sm:$0xff]
        %v1758 = vld [vmem:[%s1011 + $0x60] sm:$0xff]
        %v1759 = vld [vmem:[%s1011 + $0x68] sm:$0xff]
        %v1760 = vld [vmem:[%s1011 + $0x70] sm:$0xff]
        %v1761 = vld [vmem:[%s1011 + $0x78] sm:$0xff]
        %v1762 = vld [vmem:[%s1011 + $0x80] sm:$0xff]
        %v1763 = vld [vmem:[%s1011 + $0x88] sm:$0xff]
        %v1764 = vld [vmem:[%s1011 + $0x90] sm:$0xff]
        %v1765 = vld [vmem:[%s1011 + $0x98] sm:$0xff]
        %v1766 = vld [vmem:[%s1011 + $0xa0] sm:$0xff]
        %v1767 = vld [vmem:[%s1011 + $0xa8] sm:$0xff]
        %v1768 = vld [vmem:[%s1011 + $0xb0] sm:$0xff]
        %v1769 = vld [vmem:[%s1011 + $0xb8] sm:$0xff]
        %v1770 = vld [vmem:[%s1011 + $0xc0] sm:$0xff]
        %v1771 = vld [vmem:[%s1011 + $0xc8] sm:$0xff]
        %v1772 = vld [vmem:[%s1011 + $0xd0] sm:$0xff]
        %v1773 = vld [vmem:[%s1011 + $0xd8] sm:$0xff]
        %v1774 = vld [vmem:[%s1011 + $0xe0] sm:$0xff]
        %v1775 = vld [vmem:[%s1011 + $0xe8] sm:$0xff]
        %v1776 = vld [vmem:[%s1011 + $0xf0] sm:$0xff]
        %v1777 = vld [vmem:[%s1011 + $0xf8] sm:$0xff]
        %v1778 = vld [vmem:[%s1011 + $0x100] sm:$0xff]
        %v1779 = vld [vmem:[%s1011 + $0x108] sm:$0xff]
        %v1780 = vld [vmem:[%s1011 + $0x110] sm:$0xff]
        %v1781 = vld [vmem:[%s1011 + $0x118] sm:$0xff]
        %v1782 = vld [vmem:[%s1011 + $0x120] sm:$0xff]
        %v1783 = vld [vmem:[%s1011 + $0x128] sm:$0xff]
        %v1784 = vld [vmem:[%s1011 + $0x130] sm:$0xff]
        %v1785 = vld [vmem:[%s1011 + $0x138] sm:$0xff]
        %v1786 = vld [vmem:[%s1011 + $0x140] sm:$0xff]
        %v1787 = vld [vmem:[%s1011 + $0x148] sm:$0xff]
        %v1788 = vld [vmem:[%s1011 + $0x150] sm:$0xff]
        %v1789 = vld [vmem:[%s1011 + $0x158] sm:$0xff]
        %v1790 = vld [vmem:[%s1011 + $0x160] sm:$0xff]
        %v1791 = vld [vmem:[%s1011 + $0x168] sm:$0xff]
        %v1792 = vld [vmem:[%s1011 + $0x170] sm:$0xff]
        %v1793 = vld [vmem:[%s1011 + $0x178] sm:$0xff]
        %s1794 = scalar_lea.vmem [#allocation6], 192
        %v1795 = vld [vmem:[%s1794] sm:$0xf]
        %v1796 = vld [vmem:[%s1794 + $0x4] sm:$0xf]
        %v1797 = vld [vmem:[%s1794 + $0x8] sm:$0xf]
        %v1798 = vld [vmem:[%s1794 + $0xc] sm:$0xf]
        %v1799 = vld [vmem:[%s1794 + $0x10] sm:$0xf]
        %v1800 = vld [vmem:[%s1794 + $0x14] sm:$0xf]
        %v1801 = vld [vmem:[%s1794 + $0x18] sm:$0xf]
        %v1802 = vld [vmem:[%s1794 + $0x1c] sm:$0xf]
        %v1803 = vld [vmem:[%s1794 + $0x20] sm:$0xf]
        %v1804 = vld [vmem:[%s1794 + $0x24] sm:$0xf]
        %v1805 = vld [vmem:[%s1794 + $0x28] sm:$0xf]
        %v1806 = vld [vmem:[%s1794 + $0x2c] sm:$0xf]
        %v1807 = vld [vmem:[%s1794 + $0x30] sm:$0xf]
        %v1808 = vld [vmem:[%s1794 + $0x34] sm:$0xf]
        %v1809 = vld [vmem:[%s1794 + $0x38] sm:$0xf]
        %v1810 = vld [vmem:[%s1794 + $0x3c] sm:$0xf]
        %v1811 = vld [vmem:[%s1794 + $0x40] sm:$0xf]
        %v1812 = vld [vmem:[%s1794 + $0x44] sm:$0xf]
        %v1813 = vld [vmem:[%s1794 + $0x48] sm:$0xf]
        %v1814 = vld [vmem:[%s1794 + $0x4c] sm:$0xf]
        %v1815 = vld [vmem:[%s1794 + $0x50] sm:$0xf]
        %v1816 = vld [vmem:[%s1794 + $0x54] sm:$0xf]
        %v1817 = vld [vmem:[%s1794 + $0x58] sm:$0xf]
        %v1818 = vld [vmem:[%s1794 + $0x5c] sm:$0xf]
        %v1819 = vld [vmem:[%s1794 + $0x60] sm:$0xf]
        %v1820 = vld [vmem:[%s1794 + $0x64] sm:$0xf]
        %v1821 = vld [vmem:[%s1794 + $0x68] sm:$0xf]
        %v1822 = vld [vmem:[%s1794 + $0x6c] sm:$0xf]
        %v1823 = vld [vmem:[%s1794 + $0x70] sm:$0xf]
        %v1824 = vld [vmem:[%s1794 + $0x74] sm:$0xf]
        %v1825 = vld [vmem:[%s1794 + $0x78] sm:$0xf]
        %v1826 = vld [vmem:[%s1794 + $0x7c] sm:$0xf]
        %v1827 = vld [vmem:[%s1794 + $0x80] sm:$0xf]
        %v1828 = vld [vmem:[%s1794 + $0x84] sm:$0xf]
        %v1829 = vld [vmem:[%s1794 + $0x88] sm:$0xf]
        %v1830 = vld [vmem:[%s1794 + $0x8c] sm:$0xf]
        %v1831 = vld [vmem:[%s1794 + $0x90] sm:$0xf]
        %v1832 = vld [vmem:[%s1794 + $0x94] sm:$0xf]
        %v1833 = vld [vmem:[%s1794 + $0x98] sm:$0xf]
        %v1834 = vld [vmem:[%s1794 + $0x9c] sm:$0xf]
        %v1835 = vld [vmem:[%s1794 + $0xa0] sm:$0xf]
        %v1836 = vld [vmem:[%s1794 + $0xa4] sm:$0xf]
        %v1837 = vld [vmem:[%s1794 + $0xa8] sm:$0xf]
        %v1838 = vld [vmem:[%s1794 + $0xac] sm:$0xf]
        %v1839 = vld [vmem:[%s1794 + $0xb0] sm:$0xf]
        %v1840 = vld [vmem:[%s1794 + $0xb4] sm:$0xf]
        %v1841 = vld [vmem:[%s1794 + $0xb8] sm:$0xf]
        %v1842 = vld [vmem:[%s1794 + $0xbc] sm:$0xf]
        %v1891 = vunpack.c.l.b16 %v1795
        %v1892 = vunpack.c.l.b16 %v1796
        %v1893 = vunpack.c.l.b16 %v1797
        %v1894 = vunpack.c.l.b16 %v1798
        %v1895 = vunpack.c.l.b16 %v1799
        %v1896 = vunpack.c.l.b16 %v1800
        %v1897 = vunpack.c.l.b16 %v1801
        %v1898 = vunpack.c.l.b16 %v1802
        %v1899 = vunpack.c.l.b16 %v1803
        %v1900 = vunpack.c.l.b16 %v1804
        %v1901 = vunpack.c.l.b16 %v1805
        %v1902 = vunpack.c.l.b16 %v1806
        %v1903 = vunpack.c.l.b16 %v1807
        %v1904 = vunpack.c.l.b16 %v1808
        %v1905 = vunpack.c.l.b16 %v1809
        %v1906 = vunpack.c.l.b16 %v1810
        %v1907 = vunpack.c.l.b16 %v1811
        %v1908 = vunpack.c.l.b16 %v1812
        %v1909 = vunpack.c.l.b16 %v1813
        %v1910 = vunpack.c.l.b16 %v1814
        %v1911 = vunpack.c.l.b16 %v1815
        %v1912 = vunpack.c.l.b16 %v1816
        %v1913 = vunpack.c.l.b16 %v1817
        %v1914 = vunpack.c.l.b16 %v1818
        %v1915 = vunpack.c.l.b16 %v1819
        %v1916 = vunpack.c.l.b16 %v1820
        %v1917 = vunpack.c.l.b16 %v1821
        %v1918 = vunpack.c.l.b16 %v1822
        %v1919 = vunpack.c.l.b16 %v1823
        %v1920 = vunpack.c.l.b16 %v1824
        %v1921 = vunpack.c.l.b16 %v1825
        %v1922 = vunpack.c.l.b16 %v1826
        %v1923 = vunpack.c.l.b16 %v1827
        %v1924 = vunpack.c.l.b16 %v1828
        %v1925 = vunpack.c.l.b16 %v1829
        %v1926 = vunpack.c.l.b16 %v1830
        %v1927 = vunpack.c.l.b16 %v1831
        %v1928 = vunpack.c.l.b16 %v1832
        %v1929 = vunpack.c.l.b16 %v1833
        %v1930 = vunpack.c.l.b16 %v1834
        %v1931 = vunpack.c.l.b16 %v1835
        %v1932 = vunpack.c.l.b16 %v1836
        %v1933 = vunpack.c.l.b16 %v1837
        %v1934 = vunpack.c.l.b16 %v1838
        %v1935 = vunpack.c.l.b16 %v1839
        %v1936 = vunpack.c.l.b16 %v1840
        %v1937 = vunpack.c.l.b16 %v1841
        %v1938 = vunpack.c.l.b16 %v1842
        %v1939 = vpack.c.b16 %v1892, %v1891
        %v1940 = vpack.c.b16 %v1894, %v1893
        %v1941 = vpack.c.b16 %v1896, %v1895
        %v1942 = vpack.c.b16 %v1898, %v1897
        %v1943 = vpack.c.b16 %v1900, %v1899
        %v1944 = vpack.c.b16 %v1902, %v1901
        %v1945 = vpack.c.b16 %v1904, %v1903
        %v1946 = vpack.c.b16 %v1906, %v1905
        %v1947 = vpack.c.b16 %v1908, %v1907
        %v1948 = vpack.c.b16 %v1910, %v1909
        %v1949 = vpack.c.b16 %v1912, %v1911
        %v1950 = vpack.c.b16 %v1914, %v1913
        %v1951 = vpack.c.b16 %v1916, %v1915
        %v1952 = vpack.c.b16 %v1918, %v1917
        %v1953 = vpack.c.b16 %v1920, %v1919
        %v1954 = vpack.c.b16 %v1922, %v1921
        %v1955 = vpack.c.b16 %v1924, %v1923
        %v1956 = vpack.c.b16 %v1926, %v1925
        %v1957 = vpack.c.b16 %v1928, %v1927
        %v1958 = vpack.c.b16 %v1930, %v1929
        %v1959 = vpack.c.b16 %v1932, %v1931
        %v1960 = vpack.c.b16 %v1934, %v1933
        %v1961 = vpack.c.b16 %v1936, %v1935
        %v1962 = vpack.c.b16 %v1938, %v1937
        %1987 = vmatprep.subr.bf16.mxu0 0
        %1988 = vmatpush1.bf16.msra.mxu0 %v1939
        %1989 = vmatprep.subr.bf16.mxu0 0
        %1990 = vmatpush1.bf16.msra.mxu0 %v1940
        %1991 = vmatprep.subr.bf16.mxu0 0
        %1992 = vmatpush1.bf16.msra.mxu0 %v1941
        %1993 = vmatprep.subr.bf16.mxu0 0
        %1994 = vmatpush1.bf16.msra.mxu0 %v1942
        %1995 = vmatprep.subr.bf16.mxu0 0
        %1996 = vmatpush1.bf16.msra.mxu0 %v1943
        %1997 = vmatprep.subr.bf16.mxu0 0
        %1998 = vmatpush1.bf16.msra.mxu0 %v1944
        %1999 = vmatprep.subr.bf16.mxu0 0
        %2000 = vmatpush1.bf16.msra.mxu0 %v1945
        %2001 = vmatprep.subr.bf16.mxu0 0
        %2002 = vmatpush1.bf16.msra.mxu0 %v1946
        %2003 = vmatprep.subr.bf16.mxu0 0
        %2004 = vmatpush1.bf16.msra.mxu0 %v1947
        %2005 = vmatprep.subr.bf16.mxu0 0
        %2006 = vmatpush1.bf16.msra.mxu0 %v1948
        %2007 = vmatprep.subr.bf16.mxu0 0
        %2008 = vmatpush1.bf16.msra.mxu0 %v1949
        %2009 = vmatprep.subr.bf16.mxu0 0
        %2010 = vmatpush1.bf16.msra.mxu0 %v1950
        %2011 = vmatprep.subr.bf16.mxu0 0
        %2012 = vmatpush1.bf16.msra.mxu0 %v1951
        %2013 = vmatprep.subr.bf16.mxu0 0
        %2014 = vmatpush1.bf16.msra.mxu0 %v1952
        %2015 = vmatprep.subr.bf16.mxu0 0
        %2016 = vmatpush1.bf16.msra.mxu0 %v1953
        %2017 = vmatprep.subr.bf16.mxu0 0
        %2018 = vmatpush1.bf16.msra.mxu0 %v1954
        %2019 = vmatprep.mubr.bf16.mxu0 %v1747
        %2020 = vmatmul.mubr.bf16.gmra.mrb[0].mxu0 %v1746
        %v2021 = vpop.f32.mrb[0].mxu0
        %v2022 = vadd.f32 0.0, %v2021
        %v2023 = vpop.f32.mrb[0].mxu0
        %v2024 = vpop.f32.mrb[0].mxu0
        %v2025 = vadd.f32 0.0, %v2024
        %v2026 = vpop.f32.mrb[0].mxu0
        %2027 = vmatprep.mubr.bf16.mxu0 %v1750
        %2028 = vmatmul.mubr.bf16.gmra.mrb[0].mxu0 %v1749
        %v2029 = vpop.f32.mrb[0].mxu0
        %v2030 = vadd.f32 0.0, %v2029
        %v2031 = vpop.f32.mrb[0].mxu0
        %v2032 = vpop.f32.mrb[0].mxu0
        %v2033 = vadd.f32 0.0, %v2032
        %v2034 = vpop.f32.mrb[0].mxu0
        %2035 = vmatprep.mubr.bf16.mxu0 %v1753
        %2036 = vmatmul.mubr.bf16.gmra.mrb[0].mxu0 %v1752
        %v2037 = vpop.f32.mrb[0].mxu0
        %v2038 = vadd.f32 0.0, %v2037
        %v2039 = vpop.f32.mrb[0].mxu0
        %v2040 = vpop.f32.mrb[0].mxu0
        %v2041 = vadd.f32 0.0, %v2040
        %v2042 = vpop.f32.mrb[0].mxu0
        %2043 = vmatprep.mubr.bf16.mxu0 %v1756
        %2044 = vmatmul.mubr.bf16.gmra.mrb[0].mxu0 %v1755
        %v2045 = vpop.f32.mrb[0].mxu0
        %v2046 = vadd.f32 0.0, %v2045
        %v2047 = vpop.f32.mrb[0].mxu0
        %v2048 = vpop.f32.mrb[0].mxu0
        %v2049 = vadd.f32 0.0, %v2048
        %v2050 = vpop.f32.mrb[0].mxu0
        %2051 = vmatprep.mubr.bf16.mxu0 %v1759
        %2052 = vmatmul.mubr.bf16.gmra.mrb[0].mxu0 %v1758
        %v2053 = vpop.f32.mrb[0].mxu0
        %v2054 = vadd.f32 0.0, %v2053
        %v2055 = vpop.f32.mrb[0].mxu0
        %v2056 = vpop.f32.mrb[0].mxu0
        %v2057 = vadd.f32 0.0, %v2056
        %v2058 = vpop.f32.mrb[0].mxu0
        %2059 = vmatprep.mubr.bf16.mxu0 %v1762
        %2060 = vmatmul.mubr.bf16.gmra.mrb[0].mxu0 %v1761
        %v2061 = vpop.f32.mrb[0].mxu0
        %v2062 = vadd.f32 0.0, %v2061
        %v2063 = vpop.f32.mrb[0].mxu0
        %v2064 = vpop.f32.mrb[0].mxu0
        %v2065 = vadd.f32 0.0, %v2064
        %v2066 = vpop.f32.mrb[0].mxu0
        %2067 = vmatprep.mubr.bf16.mxu0 %v1765
        %2068 = vmatmul.mubr.bf16.gmra.mrb[0].mxu0 %v1764
        %v2069 = vpop.f32.mrb[0].mxu0
        %v2070 = vadd.f32 0.0, %v2069
        %v2071 = vpop.f32.mrb[0].mxu0
        %v2072 = vpop.f32.mrb[0].mxu0
        %v2073 = vadd.f32 0.0, %v2072
        %v2074 = vpop.f32.mrb[0].mxu0
        %2075 = vmatprep.mubr.bf16.mxu0 %v1768
        %2076 = vmatmul.mubr.bf16.gmra.mrb[0].mxu0 %v1767
        %v2077 = vpop.f32.mrb[0].mxu0
        %v2078 = vadd.f32 0.0, %v2077
        %v2079 = vpop.f32.mrb[0].mxu0
        %v2080 = vpop.f32.mrb[0].mxu0
        %v2081 = vadd.f32 0.0, %v2080
        %v2082 = vpop.f32.mrb[0].mxu0
        %2083 = vmatprep.mubr.bf16.mxu0 %v1771
        %2084 = vmatmul.mubr.bf16.gmra.mrb[0].mxu0 %v1770
        %v2085 = vpop.f32.mrb[0].mxu0
        %v2086 = vadd.f32 0.0, %v2085
        %v2087 = vpop.f32.mrb[0].mxu0
        %v2088 = vpop.f32.mrb[0].mxu0
        %v2089 = vadd.f32 0.0, %v2088
        %v2090 = vpop.f32.mrb[0].mxu0
        %2091 = vmatprep.mubr.bf16.mxu0 %v1774
        %2092 = vmatmul.mubr.bf16.gmra.mrb[0].mxu0 %v1773
        %v2093 = vpop.f32.mrb[0].mxu0
        %v2094 = vadd.f32 0.0, %v2093
        %v2095 = vpop.f32.mrb[0].mxu0
        %v2096 = vpop.f32.mrb[0].mxu0
        %v2097 = vadd.f32 0.0, %v2096
        %v2098 = vpop.f32.mrb[0].mxu0
        %2099 = vmatprep.mubr.bf16.mxu0 %v1777
        %2100 = vmatmul.mubr.bf16.gmra.mrb[0].mxu0 %v1776
        %v2101 = vpop.f32.mrb[0].mxu0
        %v2102 = vadd.f32 0.0, %v2101
        %v2103 = vpop.f32.mrb[0].mxu0
        %v2104 = vpop.f32.mrb[0].mxu0
        %v2105 = vadd.f32 0.0, %v2104
        %v2106 = vpop.f32.mrb[0].mxu0
        %2107 = vmatprep.mubr.bf16.mxu0 %v1780
        %2108 = vmatmul.mubr.bf16.gmra.mrb[0].mxu0 %v1779
        %v2109 = vpop.f32.mrb[0].mxu0
        %v2110 = vadd.f32 0.0, %v2109
        %v2111 = vpop.f32.mrb[0].mxu0
        %v2112 = vpop.f32.mrb[0].mxu0
        %v2113 = vadd.f32 0.0, %v2112
        %v2114 = vpop.f32.mrb[0].mxu0
        %2115 = vmatprep.mubr.bf16.mxu0 %v1783
        %2116 = vmatmul.mubr.bf16.gmra.mrb[0].mxu0 %v1782
        %v2117 = vpop.f32.mrb[0].mxu0
        %v2118 = vadd.f32 0.0, %v2117
        %v2119 = vpop.f32.mrb[0].mxu0
        %v2120 = vpop.f32.mrb[0].mxu0
        %v2121 = vadd.f32 0.0, %v2120
        %v2122 = vpop.f32.mrb[0].mxu0
        %2123 = vmatprep.mubr.bf16.mxu0 %v1786
        %2124 = vmatmul.mubr.bf16.gmra.mrb[0].mxu0 %v1785
        %v2125 = vpop.f32.mrb[0].mxu0
        %v2126 = vadd.f32 0.0, %v2125
        %v2127 = vpop.f32.mrb[0].mxu0
        %v2128 = vpop.f32.mrb[0].mxu0
        %v2129 = vadd.f32 0.0, %v2128
        %v2130 = vpop.f32.mrb[0].mxu0
        %2131 = vmatprep.mubr.bf16.mxu0 %v1789
        %2132 = vmatmul.mubr.bf16.gmra.mrb[0].mxu0 %v1788
        %v2133 = vpop.f32.mrb[0].mxu0
        %v2134 = vadd.f32 0.0, %v2133
        %v2135 = vpop.f32.mrb[0].mxu0
        %v2136 = vpop.f32.mrb[0].mxu0
        %v2137 = vadd.f32 0.0, %v2136
        %v2138 = vpop.f32.mrb[0].mxu0
        %2139 = vmatprep.mubr.bf16.mxu0 %v1792
        %2140 = vmatmul.mubr.bf16.gmra.mrb[0].mxu0 %v1791
        %v2141 = vpop.f32.mrb[0].mxu0
        %v2142 = vadd.f32 0.0, %v2141
        %v2143 = vpop.f32.mrb[0].mxu0
        %v2144 = vpop.f32.mrb[0].mxu0
        %v2145 = vadd.f32 0.0, %v2144
        %v2146 = vpop.f32.mrb[0].mxu0
        %2147 = vdwg.mxu0
        %2148 = vmatprep.subr.bf16.mxu0 0
        %2149 = vmatpush1.bf16.msra.mxu0 %v1955
        %2150 = vmatprep.subr.bf16.mxu0 0
        %2151 = vmatpush1.bf16.msra.mxu0 %v1956
        %2152 = vmatprep.subr.bf16.mxu0 0
        %2153 = vmatpush1.bf16.msra.mxu0 %v1957
        %2154 = vmatprep.subr.bf16.mxu0 0
        %2155 = vmatpush1.bf16.msra.mxu0 %v1958
        %2156 = vmatprep.subr.bf16.mxu0 0
        %2157 = vmatpush1.bf16.msra.mxu0 %v1959
        %2158 = vmatprep.subr.bf16.mxu0 0
        %2159 = vmatpush1.bf16.msra.mxu0 %v1960
        %2160 = vmatprep.subr.bf16.mxu0 0
        %2161 = vmatpush1.bf16.msra.mxu0 %v1961
        %2162 = vmatprep.subr.bf16.mxu0 0
        %2163 = vmatpush1.bf16.msra.mxu0 %v1962
        %2164 = vmatprep.subr.bf16.mxu0 0
        %2165 = vmatpush1.bf16.msra.mxu0 0
        %2166 = vmatprep.subr.bf16.mxu0 0
        %2167 = vmatpush1.bf16.msra.mxu0 0
        %2168 = vmatprep.subr.bf16.mxu0 0
        %2169 = vmatpush1.bf16.msra.mxu0 0
        %2170 = vmatprep.subr.bf16.mxu0 0
        %2171 = vmatpush1.bf16.msra.mxu0 0
        %2172 = vmatprep.subr.bf16.mxu0 0
        %2173 = vmatpush1.bf16.msra.mxu0 0
        %2174 = vmatprep.subr.bf16.mxu0 0
        %2175 = vmatpush1.bf16.msra.mxu0 0
        %2176 = vmatprep.subr.bf16.mxu0 0
        %2177 = vmatpush1.bf16.msra.mxu0 0
        %2178 = vmatprep.subr.bf16.mxu0 0
        %2179 = vmatpush1.bf16.msra.mxu0 0
        %2180 = vmatprep.mubr.bf16.mxu0 0
        %2181 = vmatmul.mubr.bf16.gmra.mrb[0].mxu0 %v1748
        %v2182 = vpop.f32.mrb[0].mxu0
        %v2183 = vadd.f32 %v2022, %v2182
        %v2184 = vpop.f32.mrb[0].mxu0
        %v2185 = vpop.f32.mrb[0].mxu0
        %v2186 = vadd.f32 %v2025, %v2185
        %v2187 = vpop.f32.mrb[0].mxu0
        %2188 = vmatprep.mubr.bf16.mxu0 0
        %2189 = vmatmul.mubr.bf16.gmra.mrb[0].mxu0 %v1751
        %v2190 = vpop.f32.mrb[0].mxu0
        %v2191 = vadd.f32 %v2030, %v2190
        %v2192 = vpop.f32.mrb[0].mxu0
        %v2193 = vpop.f32.mrb[0].mxu0
        %v2194 = vadd.f32 %v2033, %v2193
        %v2195 = vpop.f32.mrb[0].mxu0
        %2196 = vmatprep.mubr.bf16.mxu0 0
        %2197 = vmatmul.mubr.bf16.gmra.mrb[0].mxu0 %v1754
        %v2198 = vpop.f32.mrb[0].mxu0
        %v2199 = vadd.f32 %v2038, %v2198
        %v2200 = vpop.f32.mrb[0].mxu0
        %v2201 = vpop.f32.mrb[0].mxu0
        %v2202 = vadd.f32 %v2041, %v2201
        %v2203 = vpop.f32.mrb[0].mxu0
        %2204 = vmatprep.mubr.bf16.mxu0 0
        %2205 = vmatmul.mubr.bf16.gmra.mrb[0].mxu0 %v1757
        %v2206 = vpop.f32.mrb[0].mxu0
        %v2207 = vadd.f32 %v2046, %v2206
        %v2208 = vpop.f32.mrb[0].mxu0
        %v2209 = vpop.f32.mrb[0].mxu0
        %v2210 = vadd.f32 %v2049, %v2209
        %v2211 = vpop.f32.mrb[0].mxu0
        %2212 = vmatprep.mubr.bf16.mxu0 0
        %2213 = vmatmul.mubr.bf16.gmra.mrb[0].mxu0 %v1760
        %v2214 = vpop.f32.mrb[0].mxu0
        %v2215 = vadd.f32 %v2054, %v2214
        %v2216 = vpop.f32.mrb[0].mxu0
        %v2217 = vpop.f32.mrb[0].mxu0
        %v2218 = vadd.f32 %v2057, %v2217
        %v2219 = vpop.f32.mrb[0].mxu0
        %2220 = vmatprep.mubr.bf16.mxu0 0
        %2221 = vmatmul.mubr.bf16.gmra.mrb[0].mxu0 %v1763
        %v2222 = vpop.f32.mrb[0].mxu0
        %v2223 = vadd.f32 %v2062, %v2222
        %v2224 = vpop.f32.mrb[0].mxu0
        %v2225 = vpop.f32.mrb[0].mxu0
        %v2226 = vadd.f32 %v2065, %v2225
        %v2227 = vpop.f32.mrb[0].mxu0
        %2228 = vmatprep.mubr.bf16.mxu0 0
        %2229 = vmatmul.mubr.bf16.gmra.mrb[0].mxu0 %v1766
        %v2230 = vpop.f32.mrb[0].mxu0
        %v2231 = vadd.f32 %v2070, %v2230
        %v2232 = vpop.f32.mrb[0].mxu0
        %v2233 = vpop.f32.mrb[0].mxu0
        %v2234 = vadd.f32 %v2073, %v2233
        %v2235 = vpop.f32.mrb[0].mxu0
        %2236 = vmatprep.mubr.bf16.mxu0 0
        %2237 = vmatmul.mubr.bf16.gmra.mrb[0].mxu0 %v1769
        %v2238 = vpop.f32.mrb[0].mxu0
        %v2239 = vadd.f32 %v2078, %v2238
        %v2240 = vpop.f32.mrb[0].mxu0
        %v2241 = vpop.f32.mrb[0].mxu0
        %v2242 = vadd.f32 %v2081, %v2241
        %v2243 = vpop.f32.mrb[0].mxu0
        %2244 = vmatprep.mubr.bf16.mxu0 0
        %2245 = vmatmul.mubr.bf16.gmra.mrb[0].mxu0 %v1772
        %v2246 = vpop.f32.mrb[0].mxu0
        %v2247 = vadd.f32 %v2086, %v2246
        %v2248 = vpop.f32.mrb[0].mxu0
        %v2249 = vpop.f32.mrb[0].mxu0
        %v2250 = vadd.f32 %v2089, %v2249
        %v2251 = vpop.f32.mrb[0].mxu0
        %2252 = vmatprep.mubr.bf16.mxu0 0
        %2253 = vmatmul.mubr.bf16.gmra.mrb[0].mxu0 %v1775
        %v2254 = vpop.f32.mrb[0].mxu0
        %v2255 = vadd.f32 %v2094, %v2254
        %v2256 = vpop.f32.mrb[0].mxu0
        %v2257 = vpop.f32.mrb[0].mxu0
        %v2258 = vadd.f32 %v2097, %v2257
        %v2259 = vpop.f32.mrb[0].mxu0
        %2260 = vmatprep.mubr.bf16.mxu0 0
        %2261 = vmatmul.mubr.bf16.gmra.mrb[0].mxu0 %v1778
        %v2262 = vpop.f32.mrb[0].mxu0
        %v2263 = vadd.f32 %v2102, %v2262
        %v2264 = vpop.f32.mrb[0].mxu0
        %v2265 = vpop.f32.mrb[0].mxu0
        %v2266 = vadd.f32 %v2105, %v2265
        %v2267 = vpop.f32.mrb[0].mxu0
        %2268 = vmatprep.mubr.bf16.mxu0 0
        %2269 = vmatmul.mubr.bf16.gmra.mrb[0].mxu0 %v1781
        %v2270 = vpop.f32.mrb[0].mxu0
        %v2271 = vadd.f32 %v2110, %v2270
        %v2272 = vpop.f32.mrb[0].mxu0
        %v2273 = vpop.f32.mrb[0].mxu0
        %v2274 = vadd.f32 %v2113, %v2273
        %v2275 = vpop.f32.mrb[0].mxu0
        %2276 = vmatprep.mubr.bf16.mxu0 0
        %2277 = vmatmul.mubr.bf16.gmra.mrb[0].mxu0 %v1784
        %v2278 = vpop.f32.mrb[0].mxu0
        %v2279 = vadd.f32 %v2118, %v2278
        %v2280 = vpop.f32.mrb[0].mxu0
        %v2281 = vpop.f32.mrb[0].mxu0
        %v2282 = vadd.f32 %v2121, %v2281
        %v2283 = vpop.f32.mrb[0].mxu0
        %2284 = vmatprep.mubr.bf16.mxu0 0
        %2285 = vmatmul.mubr.bf16.gmra.mrb[0].mxu0 %v1787
        %v2286 = vpop.f32.mrb[0].mxu0
        %v2287 = vadd.f32 %v2126, %v2286
        %v2288 = vpop.f32.mrb[0].mxu0
        %v2289 = vpop.f32.mrb[0].mxu0
        %v2290 = vadd.f32 %v2129, %v2289
        %v2291 = vpop.f32.mrb[0].mxu0
        %2292 = vmatprep.mubr.bf16.mxu0 0
        %2293 = vmatmul.mubr.bf16.gmra.mrb[0].mxu0 %v1790
        %v2294 = vpop.f32.mrb[0].mxu0
        %v2295 = vadd.f32 %v2134, %v2294
        %v2296 = vpop.f32.mrb[0].mxu0
        %v2297 = vpop.f32.mrb[0].mxu0
        %v2298 = vadd.f32 %v2137, %v2297
        %v2299 = vpop.f32.mrb[0].mxu0
        %2300 = vmatprep.mubr.bf16.mxu0 0
        %2301 = vmatmul.mubr.bf16.gmra.mrb[0].mxu0 %v1793
        %v2302 = vpop.f32.mrb[0].mxu0
        %v2303 = vadd.f32 %v2142, %v2302
        %v2304 = vpop.f32.mrb[0].mxu0
        %v2305 = vpop.f32.mrb[0].mxu0
        %v2306 = vadd.f32 %v2145, %v2305
        %v2307 = vpop.f32.mrb[0].mxu0
        %2308 = vdwg.mxu0
        %v2309 = vadd.f32 %v1620, %v2183
        %v2310 = vadd.f32 %v1623, %v2186
        %v2311 = vadd.f32 %v1628, %v2191
        %v2312 = vadd.f32 %v1631, %v2194
        %v2313 = vadd.f32 %v1636, %v2199
        %v2314 = vadd.f32 %v1639, %v2202
        %v2315 = vadd.f32 %v1644, %v2207
        %v2316 = vadd.f32 %v1647, %v2210
        %v2317 = vadd.f32 %v1652, %v2215
        %v2318 = vadd.f32 %v1655, %v2218
        %v2319 = vadd.f32 %v1660, %v2223
        %v2320 = vadd.f32 %v1663, %v2226
        %v2321 = vadd.f32 %v1668, %v2231
        %v2322 = vadd.f32 %v1671, %v2234
        %v2323 = vadd.f32 %v1676, %v2239
        %v2324 = vadd.f32 %v1679, %v2242
        %v2325 = vadd.f32 %v1684, %v2247
        %v2326 = vadd.f32 %v1687, %v2250
        %v2327 = vadd.f32 %v1692, %v2255
        %v2328 = vadd.f32 %v1695, %v2258
        %v2329 = vadd.f32 %v1700, %v2263
        %v2330 = vadd.f32 %v1703, %v2266
        %v2331 = vadd.f32 %v1708, %v2271
        %v2332 = vadd.f32 %v1711, %v2274
        %v2333 = vadd.f32 %v1716, %v2279
        %v2334 = vadd.f32 %v1719, %v2282
        %v2335 = vadd.f32 %v1724, %v2287
        %v2336 = vadd.f32 %v1727, %v2290
        %v2337 = vadd.f32 %v1732, %v2295
        %v2338 = vadd.f32 %v1735, %v2298
        %v2339 = vadd.f32 %v1740, %v2303
        %v2340 = vadd.f32 %v1743, %v2306
        %s2341 = scalar_lea.vmem [#allocation2], 48
        %v2342 = vld [vmem:[%s2341] sm:$0xff]
        %v2343 = vld [vmem:[%s2341 + $0x8] sm:$0xff]
        %v2344 = vld [vmem:[%s2341 + $0x10] sm:$0xff]
        %v2345 = vld [vmem:[%s2341 + $0x18] sm:$0xff]
        %v2346 = vld [vmem:[%s2341 + $0x20] sm:$0xff]
        %v2347 = vld [vmem:[%s2341 + $0x28] sm:$0xff]
        %v2348 = vld [vmem:[%s2341 + $0x30] sm:$0xff]
        %v2349 = vld [vmem:[%s2341 + $0x38] sm:$0xff]
        %v2350 = vld [vmem:[%s2341 + $0x40] sm:$0xff]
        %v2351 = vld [vmem:[%s2341 + $0x48] sm:$0xff]
        %v2352 = vld [vmem:[%s2341 + $0x50] sm:$0xff]
        %v2353 = vld [vmem:[%s2341 + $0x58] sm:$0xff]
        %v2354 = vld [vmem:[%s2341 + $0x60] sm:$0xff]
        %v2355 = vld [vmem:[%s2341 + $0x68] sm:$0xff]
        %v2356 = vld [vmem:[%s2341 + $0x70] sm:$0xff]
        %v2357 = vld [vmem:[%s2341 + $0x78] sm:$0xff]
        %v2358 = vld [vmem:[%s2341 + $0x80] sm:$0xff]
        %v2359 = vld [vmem:[%s2341 + $0x88] sm:$0xff]
        %v2360 = vld [vmem:[%s2341 + $0x90] sm:$0xff]
        %v2361 = vld [vmem:[%s2341 + $0x98] sm:$0xff]
        %v2362 = vld [vmem:[%s2341 + $0xa0] sm:$0xff]
        %v2363 = vld [vmem:[%s2341 + $0xa8] sm:$0xff]
        %v2364 = vld [vmem:[%s2341 + $0xb0] sm:$0xff]
        %v2365 = vld [vmem:[%s2341 + $0xb8] sm:$0xff]
        %v2366 = vld [vmem:[%s2341 + $0xc0] sm:$0xff]
        %v2367 = vld [vmem:[%s2341 + $0xc8] sm:$0xff]
        %v2368 = vld [vmem:[%s2341 + $0xd0] sm:$0xff]
        %v2369 = vld [vmem:[%s2341 + $0xd8] sm:$0xff]
        %v2370 = vld [vmem:[%s2341 + $0xe0] sm:$0xff]
        %v2371 = vld [vmem:[%s2341 + $0xe8] sm:$0xff]
        %v2372 = vld [vmem:[%s2341 + $0xf0] sm:$0xff]
        %v2373 = vld [vmem:[%s2341 + $0xf8] sm:$0xff]
        %v2374 = vld [vmem:[%s2341 + $0x100] sm:$0xff]
        %v2375 = vld [vmem:[%s2341 + $0x108] sm:$0xff]
        %v2376 = vld [vmem:[%s2341 + $0x110] sm:$0xff]
        %v2377 = vld [vmem:[%s2341 + $0x118] sm:$0xff]
        %v2378 = vld [vmem:[%s2341 + $0x120] sm:$0xff]
        %v2379 = vld [vmem:[%s2341 + $0x128] sm:$0xff]
        %v2380 = vld [vmem:[%s2341 + $0x130] sm:$0xff]
        %v2381 = vld [vmem:[%s2341 + $0x138] sm:$0xff]
        %v2382 = vld [vmem:[%s2341 + $0x140] sm:$0xff]
        %v2383 = vld [vmem:[%s2341 + $0x148] sm:$0xff]
        %v2384 = vld [vmem:[%s2341 + $0x150] sm:$0xff]
        %v2385 = vld [vmem:[%s2341 + $0x158] sm:$0xff]
        %v2386 = vld [vmem:[%s2341 + $0x160] sm:$0xff]
        %v2387 = vld [vmem:[%s2341 + $0x168] sm:$0xff]
        %v2388 = vld [vmem:[%s2341 + $0x170] sm:$0xff]
        %v2389 = vld [vmem:[%s2341 + $0x178] sm:$0xff]
        %s2390 = scalar_lea.vmem [#allocation6], 384
        %v2391 = vld [vmem:[%s2390] sm:$0xf]
        %v2392 = vld [vmem:[%s2390 + $0x4] sm:$0xf]
        %v2393 = vld [vmem:[%s2390 + $0x8] sm:$0xf]
        %v2394 = vld [vmem:[%s2390 + $0xc] sm:$0xf]
        %v2395 = vld [vmem:[%s2390 + $0x10] sm:$0xf]
        %v2396 = vld [vmem:[%s2390 + $0x14] sm:$0xf]
        %v2397 = vld [vmem:[%s2390 + $0x18] sm:$0xf]
        %v2398 = vld [vmem:[%s2390 + $0x1c] sm:$0xf]
        %v2399 = vld [vmem:[%s2390 + $0x20] sm:$0xf]
        %v2400 = vld [vmem:[%s2390 + $0x24] sm:$0xf]
        %v2401 = vld [vmem:[%s2390 + $0x28] sm:$0xf]
        %v2402 = vld [vmem:[%s2390 + $0x2c] sm:$0xf]
        %v2403 = vld [vmem:[%s2390 + $0x30] sm:$0xf]
        %v2404 = vld [vmem:[%s2390 + $0x34] sm:$0xf]
        %v2405 = vld [vmem:[%s2390 + $0x38] sm:$0xf]
        %v2406 = vld [vmem:[%s2390 + $0x3c] sm:$0xf]
        %v2407 = vld [vmem:[%s2390 + $0x40] sm:$0xf]
        %v2408 = vld [vmem:[%s2390 + $0x44] sm:$0xf]
        %v2409 = vld [vmem:[%s2390 + $0x48] sm:$0xf]
        %v2410 = vld [vmem:[%s2390 + $0x4c] sm:$0xf]
        %v2411 = vld [vmem:[%s2390 + $0x50] sm:$0xf]
        %v2412 = vld [vmem:[%s2390 + $0x54] sm:$0xf]
        %v2413 = vld [vmem:[%s2390 + $0x58] sm:$0xf]
        %v2414 = vld [vmem:[%s2390 + $0x5c] sm:$0xf]
        %v2415 = vld [vmem:[%s2390 + $0x60] sm:$0xf]
        %v2416 = vld [vmem:[%s2390 + $0x64] sm:$0xf]
        %v2417 = vld [vmem:[%s2390 + $0x68] sm:$0xf]
        %v2418 = vld [vmem:[%s2390 + $0x6c] sm:$0xf]
        %v2419 = vld [vmem:[%s2390 + $0x70] sm:$0xf]
        %v2420 = vld [vmem:[%s2390 + $0x74] sm:$0xf]
        %v2421 = vld [vmem:[%s2390 + $0x78] sm:$0xf]
        %v2422 = vld [vmem:[%s2390 + $0x7c] sm:$0xf]
        %v2423 = vld [vmem:[%s2390 + $0x80] sm:$0xf]
        %v2424 = vld [vmem:[%s2390 + $0x84] sm:$0xf]
        %v2425 = vld [vmem:[%s2390 + $0x88] sm:$0xf]
        %v2426 = vld [vmem:[%s2390 + $0x8c] sm:$0xf]
        %v2427 = vld [vmem:[%s2390 + $0x90] sm:$0xf]
        %v2428 = vld [vmem:[%s2390 + $0x94] sm:$0xf]
        %v2429 = vld [vmem:[%s2390 + $0x98] sm:$0xf]
        %v2430 = vld [vmem:[%s2390 + $0x9c] sm:$0xf]
        %v2431 = vld [vmem:[%s2390 + $0xa0] sm:$0xf]
        %v2432 = vld [vmem:[%s2390 + $0xa4] sm:$0xf]
        %v2433 = vld [vmem:[%s2390 + $0xa8] sm:$0xf]
        %v2434 = vld [vmem:[%s2390 + $0xac] sm:$0xf]
        %v2435 = vld [vmem:[%s2390 + $0xb0] sm:$0xf]
        %v2436 = vld [vmem:[%s2390 + $0xb4] sm:$0xf]
        %v2437 = vld [vmem:[%s2390 + $0xb8] sm:$0xf]
        %v2438 = vld [vmem:[%s2390 + $0xbc] sm:$0xf]
        %v2487 = vunpack.c.l.b16 %v2391
        %v2488 = vunpack.c.l.b16 %v2392
        %v2489 = vunpack.c.l.b16 %v2393
        %v2490 = vunpack.c.l.b16 %v2394
        %v2491 = vunpack.c.l.b16 %v2395
        %v2492 = vunpack.c.l.b16 %v2396
        %v2493 = vunpack.c.l.b16 %v2397
        %v2494 = vunpack.c.l.b16 %v2398
        %v2495 = vunpack.c.l.b16 %v2399
        %v2496 = vunpack.c.l.b16 %v2400
        %v2497 = vunpack.c.l.b16 %v2401
        %v2498 = vunpack.c.l.b16 %v2402
        %v2499 = vunpack.c.l.b16 %v2403
        %v2500 = vunpack.c.l.b16 %v2404
        %v2501 = vunpack.c.l.b16 %v2405
        %v2502 = vunpack.c.l.b16 %v2406
        %v2503 = vunpack.c.l.b16 %v2407
        %v2504 = vunpack.c.l.b16 %v2408
        %v2505 = vunpack.c.l.b16 %v2409
        %v2506 = vunpack.c.l.b16 %v2410
        %v2507 = vunpack.c.l.b16 %v2411
        %v2508 = vunpack.c.l.b16 %v2412
        %v2509 = vunpack.c.l.b16 %v2413
        %v2510 = vunpack.c.l.b16 %v2414
        %v2511 = vunpack.c.l.b16 %v2415
        %v2512 = vunpack.c.l.b16 %v2416
        %v2513 = vunpack.c.l.b16 %v2417
        %v2514 = vunpack.c.l.b16 %v2418
        %v2515 = vunpack.c.l.b16 %v2419
        %v2516 = vunpack.c.l.b16 %v2420
        %v2517 = vunpack.c.l.b16 %v2421
        %v2518 = vunpack.c.l.b16 %v2422
        %v2519 = vunpack.c.l.b16 %v2423
        %v2520 = vunpack.c.l.b16 %v2424
        %v2521 = vunpack.c.l.b16 %v2425
        %v2522 = vunpack.c.l.b16 %v2426
        %v2523 = vunpack.c.l.b16 %v2427
        %v2524 = vunpack.c.l.b16 %v2428
        %v2525 = vunpack.c.l.b16 %v2429
        %v2526 = vunpack.c.l.b16 %v2430
        %v2527 = vunpack.c.l.b16 %v2431
        %v2528 = vunpack.c.l.b16 %v2432
        %v2529 = vunpack.c.l.b16 %v2433
        %v2530 = vunpack.c.l.b16 %v2434
        %v2531 = vunpack.c.l.b16 %v2435
        %v2532 = vunpack.c.l.b16 %v2436
        %v2533 = vunpack.c.l.b16 %v2437
        %v2534 = vunpack.c.l.b16 %v2438
        %v2535 = vpack.c.b16 %v2488, %v2487
        %v2536 = vpack.c.b16 %v2490, %v2489
        %v2537 = vpack.c.b16 %v2492, %v2491
        %v2538 = vpack.c.b16 %v2494, %v2493
        %v2539 = vpack.c.b16 %v2496, %v2495
        %v2540 = vpack.c.b16 %v2498, %v2497
        %v2541 = vpack.c.b16 %v2500, %v2499
        %v2542 = vpack.c.b16 %v2502, %v2501
        %v2543 = vpack.c.b16 %v2504, %v2503
        %v2544 = vpack.c.b16 %v2506, %v2505
        %v2545 = vpack.c.b16 %v2508, %v2507
        %v2546 = vpack.c.b16 %v2510, %v2509
        %v2547 = vpack.c.b16 %v2512, %v2511
        %v2548 = vpack.c.b16 %v2514, %v2513
        %v2549 = vpack.c.b16 %v2516, %v2515
        %v2550 = vpack.c.b16 %v2518, %v2517
        %v2551 = vpack.c.b16 %v2520, %v2519
        %v2552 = vpack.c.b16 %v2522, %v2521
        %v2553 = vpack.c.b16 %v2524, %v2523
        %v2554 = vpack.c.b16 %v2526, %v2525
        %v2555 = vpack.c.b16 %v2528, %v2527
        %v2556 = vpack.c.b16 %v2530, %v2529
        %v2557 = vpack.c.b16 %v2532, %v2531
        %v2558 = vpack.c.b16 %v2534, %v2533
        %2583 = vmatprep.subr.bf16.mxu0 0
        %2584 = vmatpush1.bf16.msra.mxu0 %v2535
        %2585 = vmatprep.subr.bf16.mxu0 0
        %2586 = vmatpush1.bf16.msra.mxu0 %v2536
        %2587 = vmatprep.subr.bf16.mxu0 0
        %2588 = vmatpush1.bf16.msra.mxu0 %v2537
        %2589 = vmatprep.subr.bf16.mxu0 0
        %2590 = vmatpush1.bf16.msra.mxu0 %v2538
        %2591 = vmatprep.subr.bf16.mxu0 0
        %2592 = vmatpush1.bf16.msra.mxu0 %v2539
        %2593 = vmatprep.subr.bf16.mxu0 0
        %2594 = vmatpush1.bf16.msra.mxu0 %v2540
        %2595 = vmatprep.subr.bf16.mxu0 0
        %2596 = vmatpush1.bf16.msra.mxu0 %v2541
        %2597 = vmatprep.subr.bf16.mxu0 0
        %2598 = vmatpush1.bf16.msra.mxu0 %v2542
        %2599 = vmatprep.subr.bf16.mxu0 0
        %2600 = vmatpush1.bf16.msra.mxu0 %v2543
        %2601 = vmatprep.subr.bf16.mxu0 0
        %2602 = vmatpush1.bf16.msra.mxu0 %v2544
        %2603 = vmatprep.subr.bf16.mxu0 0
        %2604 = vmatpush1.bf16.msra.mxu0 %v2545
        %2605 = vmatprep.subr.bf16.mxu0 0
        %2606 = vmatpush1.bf16.msra.mxu0 %v2546
        %2607 = vmatprep.subr.bf16.mxu0 0
        %2608 = vmatpush1.bf16.msra.mxu0 %v2547
        %2609 = vmatprep.subr.bf16.mxu0 0
        %2610 = vmatpush1.bf16.msra.mxu0 %v2548
        %2611 = vmatprep.subr.bf16.mxu0 0
        %2612 = vmatpush1.bf16.msra.mxu0 %v2549
        %2613 = vmatprep.subr.bf16.mxu0 0
        %2614 = vmatpush1.bf16.msra.mxu0 %v2550
        %2615 = vmatprep.mubr.bf16.mxu0 %v2343
        %2616 = vmatmul.mubr.bf16.gmra.mrb[0].mxu0 %v2342
        %v2617 = vpop.f32.mrb[0].mxu0
        %v2618 = vadd.f32 0.0, %v2617
        %v2619 = vpop.f32.mrb[0].mxu0
        %v2620 = vpop.f32.mrb[0].mxu0
        %v2621 = vadd.f32 0.0, %v2620
        %v2622 = vpop.f32.mrb[0].mxu0
        %2623 = vmatprep.mubr.bf16.mxu0 %v2346
        %2624 = vmatmul.mubr.bf16.gmra.mrb[0].mxu0 %v2345
        %v2625 = vpop.f32.mrb[0].mxu0
        %v2626 = vadd.f32 0.0, %v2625
        %v2627 = vpop.f32.mrb[0].mxu0
        %v2628 = vpop.f32.mrb[0].mxu0
        %v2629 = vadd.f32 0.0, %v2628
        %v2630 = vpop.f32.mrb[0].mxu0
        %2631 = vmatprep.mubr.bf16.mxu0 %v2349
        %2632 = vmatmul.mubr.bf16.gmra.mrb[0].mxu0 %v2348
        %v2633 = vpop.f32.mrb[0].mxu0
        %v2634 = vadd.f32 0.0, %v2633
        %v2635 = vpop.f32.mrb[0].mxu0
        %v2636 = vpop.f32.mrb[0].mxu0
        %v2637 = vadd.f32 0.0, %v2636
        %v2638 = vpop.f32.mrb[0].mxu0
        %2639 = vmatprep.mubr.bf16.mxu0 %v2352
        %2640 = vmatmul.mubr.bf16.gmra.mrb[0].mxu0 %v2351
        %v2641 = vpop.f32.mrb[0].mxu0
        %v2642 = vadd.f32 0.0, %v2641
        %v2643 = vpop.f32.mrb[0].mxu0
        %v2644 = vpop.f32.mrb[0].mxu0
        %v2645 = vadd.f32 0.0, %v2644
        %v2646 = vpop.f32.mrb[0].mxu0
        %2647 = vmatprep.mubr.bf16.mxu0 %v2355
        %2648 = vmatmul.mubr.bf16.gmra.mrb[0].mxu0 %v2354
        %v2649 = vpop.f32.mrb[0].mxu0
        %v2650 = vadd.f32 0.0, %v2649
        %v2651 = vpop.f32.mrb[0].mxu0
        %v2652 = vpop.f32.mrb[0].mxu0
        %v2653 = vadd.f32 0.0, %v2652
        %v2654 = vpop.f32.mrb[0].mxu0
        %2655 = vmatprep.mubr.bf16.mxu0 %v2358
        %2656 = vmatmul.mubr.bf16.gmra.mrb[0].mxu0 %v2357
        %v2657 = vpop.f32.mrb[0].mxu0
        %v2658 = vadd.f32 0.0, %v2657
        %v2659 = vpop.f32.mrb[0].mxu0
        %v2660 = vpop.f32.mrb[0].mxu0
        %v2661 = vadd.f32 0.0, %v2660
        %v2662 = vpop.f32.mrb[0].mxu0
        %2663 = vmatprep.mubr.bf16.mxu0 %v2361
        %2664 = vmatmul.mubr.bf16.gmra.mrb[0].mxu0 %v2360
        %v2665 = vpop.f32.mrb[0].mxu0
        %v2666 = vadd.f32 0.0, %v2665
        %v2667 = vpop.f32.mrb[0].mxu0
        %v2668 = vpop.f32.mrb[0].mxu0
        %v2669 = vadd.f32 0.0, %v2668
        %v2670 = vpop.f32.mrb[0].mxu0
        %2671 = vmatprep.mubr.bf16.mxu0 %v2364
        %2672 = vmatmul.mubr.bf16.gmra.mrb[0].mxu0 %v2363
        %v2673 = vpop.f32.mrb[0].mxu0
        %v2674 = vadd.f32 0.0, %v2673
        %v2675 = vpop.f32.mrb[0].mxu0
        %v2676 = vpop.f32.mrb[0].mxu0
        %v2677 = vadd.f32 0.0, %v2676
        %v2678 = vpop.f32.mrb[0].mxu0
        %2679 = vmatprep.mubr.bf16.mxu0 %v2367
        %2680 = vmatmul.mubr.bf16.gmra.mrb[0].mxu0 %v2366
        %v2681 = vpop.f32.mrb[0].mxu0
        %v2682 = vadd.f32 0.0, %v2681
        %v2683 = vpop.f32.mrb[0].mxu0
        %v2684 = vpop.f32.mrb[0].mxu0
        %v2685 = vadd.f32 0.0, %v2684
        %v2686 = vpop.f32.mrb[0].mxu0
        %2687 = vmatprep.mubr.bf16.mxu0 %v2370
        %2688 = vmatmul.mubr.bf16.gmra.mrb[0].mxu0 %v2369
        %v2689 = vpop.f32.mrb[0].mxu0
        %v2690 = vadd.f32 0.0, %v2689
        %v2691 = vpop.f32.mrb[0].mxu0
        %v2692 = vpop.f32.mrb[0].mxu0
        %v2693 = vadd.f32 0.0, %v2692
        %v2694 = vpop.f32.mrb[0].mxu0
        %2695 = vmatprep.mubr.bf16.mxu0 %v2373
        %2696 = vmatmul.mubr.bf16.gmra.mrb[0].mxu0 %v2372
        %v2697 = vpop.f32.mrb[0].mxu0
        %v2698 = vadd.f32 0.0, %v2697
        %v2699 = vpop.f32.mrb[0].mxu0
        %v2700 = vpop.f32.mrb[0].mxu0
        %v2701 = vadd.f32 0.0, %v2700
        %v2702 = vpop.f32.mrb[0].mxu0
        %2703 = vmatprep.mubr.bf16.mxu0 %v2376
        %2704 = vmatmul.mubr.bf16.gmra.mrb[0].mxu0 %v2375
        %v2705 = vpop.f32.mrb[0].mxu0
        %v2706 = vadd.f32 0.0, %v2705
        %v2707 = vpop.f32.mrb[0].mxu0
        %v2708 = vpop.f32.mrb[0].mxu0
        %v2709 = vadd.f32 0.0, %v2708
        %v2710 = vpop.f32.mrb[0].mxu0
        %2711 = vmatprep.mubr.bf16.mxu0 %v2379
        %2712 = vmatmul.mubr.bf16.gmra.mrb[0].mxu0 %v2378
        %v2713 = vpop.f32.mrb[0].mxu0
        %v2714 = vadd.f32 0.0, %v2713
        %v2715 = vpop.f32.mrb[0].mxu0
        %v2716 = vpop.f32.mrb[0].mxu0
        %v2717 = vadd.f32 0.0, %v2716
        %v2718 = vpop.f32.mrb[0].mxu0
        %2719 = vmatprep.mubr.bf16.mxu0 %v2382
        %2720 = vmatmul.mubr.bf16.gmra.mrb[0].mxu0 %v2381
        %v2721 = vpop.f32.mrb[0].mxu0
        %v2722 = vadd.f32 0.0, %v2721
        %v2723 = vpop.f32.mrb[0].mxu0
        %v2724 = vpop.f32.mrb[0].mxu0
        %v2725 = vadd.f32 0.0, %v2724
        %v2726 = vpop.f32.mrb[0].mxu0
        %2727 = vmatprep.mubr.bf16.mxu0 %v2385
        %2728 = vmatmul.mubr.bf16.gmra.mrb[0].mxu0 %v2384
        %v2729 = vpop.f32.mrb[0].mxu0
        %v2730 = vadd.f32 0.0, %v2729
        %v2731 = vpop.f32.mrb[0].mxu0
        %v2732 = vpop.f32.mrb[0].mxu0
        %v2733 = vadd.f32 0.0, %v2732
        %v2734 = vpop.f32.mrb[0].mxu0
        %2735 = vmatprep.mubr.bf16.mxu0 %v2388
        %2736 = vmatmul.mubr.bf16.gmra.mrb[0].mxu0 %v2387
        %v2737 = vpop.f32.mrb[0].mxu0
        %v2738 = vadd.f32 0.0, %v2737
        %v2739 = vpop.f32.mrb[0].mxu0
        %v2740 = vpop.f32.mrb[0].mxu0
        %v2741 = vadd.f32 0.0, %v2740
        %v2742 = vpop.f32.mrb[0].mxu0
        %2743 = vdwg.mxu0
        %2744 = vmatprep.subr.bf16.mxu0 0
        %2745 = vmatpush1.bf16.msra.mxu0 %v2551
        %2746 = vmatprep.subr.bf16.mxu0 0
        %2747 = vmatpush1.bf16.msra.mxu0 %v2552
        %2748 = vmatprep.subr.bf16.mxu0 0
        %2749 = vmatpush1.bf16.msra.mxu0 %v2553
        %2750 = vmatprep.subr.bf16.mxu0 0
        %2751 = vmatpush1.bf16.msra.mxu0 %v2554
        %2752 = vmatprep.subr.bf16.mxu0 0
        %2753 = vmatpush1.bf16.msra.mxu0 %v2555
        %2754 = vmatprep.subr.bf16.mxu0 0
        %2755 = vmatpush1.bf16.msra.mxu0 %v2556
        %2756 = vmatprep.subr.bf16.mxu0 0
        %2757 = vmatpush1.bf16.msra.mxu0 %v2557
        %2758 = vmatprep.subr.bf16.mxu0 0
        %2759 = vmatpush1.bf16.msra.mxu0 %v2558
        %2760 = vmatprep.subr.bf16.mxu0 0
        %2761 = vmatpush1.bf16.msra.mxu0 0
        %2762 = vmatprep.subr.bf16.mxu0 0
        %2763 = vmatpush1.bf16.msra.mxu0 0
        %2764 = vmatprep.subr.bf16.mxu0 0
        %2765 = vmatpush1.bf16.msra.mxu0 0
        %2766 = vmatprep.subr.bf16.mxu0 0
        %2767 = vmatpush1.bf16.msra.mxu0 0
        %2768 = vmatprep.subr.bf16.mxu0 0
        %2769 = vmatpush1.bf16.msra.mxu0 0
        %2770 = vmatprep.subr.bf16.mxu0 0
        %2771 = vmatpush1.bf16.msra.mxu0 0
        %2772 = vmatprep.subr.bf16.mxu0 0
        %2773 = vmatpush1.bf16.msra.mxu0 0
        %2774 = vmatprep.subr.bf16.mxu0 0
        %2775 = vmatpush1.bf16.msra.mxu0 0
        %2776 = vmatprep.mubr.bf16.mxu0 0
        %2777 = vmatmul.mubr.bf16.gmra.mrb[0].mxu0 %v2344
        %v2778 = vpop.f32.mrb[0].mxu0
        %v2779 = vadd.f32 %v2618, %v2778
        %v2780 = vpop.f32.mrb[0].mxu0
        %v2781 = vpop.f32.mrb[0].mxu0
        %v2782 = vadd.f32 %v2621, %v2781
        %v2783 = vpop.f32.mrb[0].mxu0
        %2784 = vmatprep.mubr.bf16.mxu0 0
        %2785 = vmatmul.mubr.bf16.gmra.mrb[0].mxu0 %v2347
        %v2786 = vpop.f32.mrb[0].mxu0
        %v2787 = vadd.f32 %v2626, %v2786
        %v2788 = vpop.f32.mrb[0].mxu0
        %v2789 = vpop.f32.mrb[0].mxu0
        %v2790 = vadd.f32 %v2629, %v2789
        %v2791 = vpop.f32.mrb[0].mxu0
        %2792 = vmatprep.mubr.bf16.mxu0 0
        %2793 = vmatmul.mubr.bf16.gmra.mrb[0].mxu0 %v2350
        %v2794 = vpop.f32.mrb[0].mxu0
        %v2795 = vadd.f32 %v2634, %v2794
        %v2796 = vpop.f32.mrb[0].mxu0
        %v2797 = vpop.f32.mrb[0].mxu0
        %v2798 = vadd.f32 %v2637, %v2797
        %v2799 = vpop.f32.mrb[0].mxu0
        %2800 = vmatprep.mubr.bf16.mxu0 0
        %2801 = vmatmul.mubr.bf16.gmra.mrb[0].mxu0 %v2353
        %v2802 = vpop.f32.mrb[0].mxu0
        %v2803 = vadd.f32 %v2642, %v2802
        %v2804 = vpop.f32.mrb[0].mxu0
        %v2805 = vpop.f32.mrb[0].mxu0
        %v2806 = vadd.f32 %v2645, %v2805
        %v2807 = vpop.f32.mrb[0].mxu0
        %2808 = vmatprep.mubr.bf16.mxu0 0
        %2809 = vmatmul.mubr.bf16.gmra.mrb[0].mxu0 %v2356
        %v2810 = vpop.f32.mrb[0].mxu0
        %v2811 = vadd.f32 %v2650, %v2810
        %v2812 = vpop.f32.mrb[0].mxu0
        %v2813 = vpop.f32.mrb[0].mxu0
        %v2814 = vadd.f32 %v2653, %v2813
        %v2815 = vpop.f32.mrb[0].mxu0
        %2816 = vmatprep.mubr.bf16.mxu0 0
        %2817 = vmatmul.mubr.bf16.gmra.mrb[0].mxu0 %v2359
        %v2818 = vpop.f32.mrb[0].mxu0
        %v2819 = vadd.f32 %v2658, %v2818
        %v2820 = vpop.f32.mrb[0].mxu0
        %v2821 = vpop.f32.mrb[0].mxu0
        %v2822 = vadd.f32 %v2661, %v2821
        %v2823 = vpop.f32.mrb[0].mxu0
        %2824 = vmatprep.mubr.bf16.mxu0 0
        %2825 = vmatmul.mubr.bf16.gmra.mrb[0].mxu0 %v2362
        %v2826 = vpop.f32.mrb[0].mxu0
        %v2827 = vadd.f32 %v2666, %v2826
        %v2828 = vpop.f32.mrb[0].mxu0
        %v2829 = vpop.f32.mrb[0].mxu0
        %v2830 = vadd.f32 %v2669, %v2829
        %v2831 = vpop.f32.mrb[0].mxu0
        %2832 = vmatprep.mubr.bf16.mxu0 0
        %2833 = vmatmul.mubr.bf16.gmra.mrb[0].mxu0 %v2365
        %v2834 = vpop.f32.mrb[0].mxu0
        %v2835 = vadd.f32 %v2674, %v2834
        %v2836 = vpop.f32.mrb[0].mxu0
        %v2837 = vpop.f32.mrb[0].mxu0
        %v2838 = vadd.f32 %v2677, %v2837
        %v2839 = vpop.f32.mrb[0].mxu0
        %2840 = vmatprep.mubr.bf16.mxu0 0
        %2841 = vmatmul.mubr.bf16.gmra.mrb[0].mxu0 %v2368
        %v2842 = vpop.f32.mrb[0].mxu0
        %v2843 = vadd.f32 %v2682, %v2842
        %v2844 = vpop.f32.mrb[0].mxu0
        %v2845 = vpop.f32.mrb[0].mxu0
        %v2846 = vadd.f32 %v2685, %v2845
        %v2847 = vpop.f32.mrb[0].mxu0
        %2848 = vmatprep.mubr.bf16.mxu0 0
        %2849 = vmatmul.mubr.bf16.gmra.mrb[0].mxu0 %v2371
        %v2850 = vpop.f32.mrb[0].mxu0
        %v2851 = vadd.f32 %v2690, %v2850
        %v2852 = vpop.f32.mrb[0].mxu0
        %v2853 = vpop.f32.mrb[0].mxu0
        %v2854 = vadd.f32 %v2693, %v2853
        %v2855 = vpop.f32.mrb[0].mxu0
        %2856 = vmatprep.mubr.bf16.mxu0 0
        %2857 = vmatmul.mubr.bf16.gmra.mrb[0].mxu0 %v2374
        %v2858 = vpop.f32.mrb[0].mxu0
        %v2859 = vadd.f32 %v2698, %v2858
        %v2860 = vpop.f32.mrb[0].mxu0
        %v2861 = vpop.f32.mrb[0].mxu0
        %v2862 = vadd.f32 %v2701, %v2861
        %v2863 = vpop.f32.mrb[0].mxu0
        %2864 = vmatprep.mubr.bf16.mxu0 0
        %2865 = vmatmul.mubr.bf16.gmra.mrb[0].mxu0 %v2377
        %v2866 = vpop.f32.mrb[0].mxu0
        %v2867 = vadd.f32 %v2706, %v2866
        %v2868 = vpop.f32.mrb[0].mxu0
        %v2869 = vpop.f32.mrb[0].mxu0
        %v2870 = vadd.f32 %v2709, %v2869
        %v2871 = vpop.f32.mrb[0].mxu0
        %2872 = vmatprep.mubr.bf16.mxu0 0
        %2873 = vmatmul.mubr.bf16.gmra.mrb[0].mxu0 %v2380
        %v2874 = vpop.f32.mrb[0].mxu0
        %v2875 = vadd.f32 %v2714, %v2874
        %v2876 = vpop.f32.mrb[0].mxu0
        %v2877 = vpop.f32.mrb[0].mxu0
        %v2878 = vadd.f32 %v2717, %v2877
        %v2879 = vpop.f32.mrb[0].mxu0
        %2880 = vmatprep.mubr.bf16.mxu0 0
        %2881 = vmatmul.mubr.bf16.gmra.mrb[0].mxu0 %v2383
        %v2882 = vpop.f32.mrb[0].mxu0
        %v2883 = vadd.f32 %v2722, %v2882
        %v2884 = vpop.f32.mrb[0].mxu0
        %v2885 = vpop.f32.mrb[0].mxu0
        %v2886 = vadd.f32 %v2725, %v2885
        %v2887 = vpop.f32.mrb[0].mxu0
        %2888 = vmatprep.mubr.bf16.mxu0 0
        %2889 = vmatmul.mubr.bf16.gmra.mrb[0].mxu0 %v2386
        %v2890 = vpop.f32.mrb[0].mxu0
        %v2891 = vadd.f32 %v2730, %v2890
        %v2892 = vpop.f32.mrb[0].mxu0
        %v2893 = vpop.f32.mrb[0].mxu0
        %v2894 = vadd.f32 %v2733, %v2893
        %v2895 = vpop.f32.mrb[0].mxu0
        %2896 = vmatprep.mubr.bf16.mxu0 0
        %2897 = vmatmul.mubr.bf16.gmra.mrb[0].mxu0 %v2389
        %v2898 = vpop.f32.mrb[0].mxu0
        %v2899 = vadd.f32 %v2738, %v2898
        %v2900 = vpop.f32.mrb[0].mxu0
        %v2901 = vpop.f32.mrb[0].mxu0
        %v2902 = vadd.f32 %v2741, %v2901
        %v2903 = vpop.f32.mrb[0].mxu0
        %2904 = vdwg.mxu0
        %v2905 = vadd.f32 %v2309, %v2779
        %v2906 = vadd.f32 %v2310, %v2782
        %v2907 = vadd.f32 %v2311, %v2787
        %v2908 = vadd.f32 %v2312, %v2790
        %v2909 = vadd.f32 %v2313, %v2795
        %v2910 = vadd.f32 %v2314, %v2798
        %v2911 = vadd.f32 %v2315, %v2803
        %v2912 = vadd.f32 %v2316, %v2806
        %v2913 = vadd.f32 %v2317, %v2811
        %v2914 = vadd.f32 %v2318, %v2814
        %v2915 = vadd.f32 %v2319, %v2819
        %v2916 = vadd.f32 %v2320, %v2822
        %v2917 = vadd.f32 %v2321, %v2827
        %v2918 = vadd.f32 %v2322, %v2830
        %v2919 = vadd.f32 %v2323, %v2835
        %v2920 = vadd.f32 %v2324, %v2838
        %v2921 = vadd.f32 %v2325, %v2843
        %v2922 = vadd.f32 %v2326, %v2846
        %v2923 = vadd.f32 %v2327, %v2851
        %v2924 = vadd.f32 %v2328, %v2854
        %v2925 = vadd.f32 %v2329, %v2859
        %v2926 = vadd.f32 %v2330, %v2862
        %v2927 = vadd.f32 %v2331, %v2867
        %v2928 = vadd.f32 %v2332, %v2870
        %v2929 = vadd.f32 %v2333, %v2875
        %v2930 = vadd.f32 %v2334, %v2878
        %v2931 = vadd.f32 %v2335, %v2883
        %v2932 = vadd.f32 %v2336, %v2886
        %v2933 = vadd.f32 %v2337, %v2891
        %v2934 = vadd.f32 %v2338, %v2894
        %v2935 = vadd.f32 %v2339, %v2899
        %v2936 = vadd.f32 %v2340, %v2902
        %vm2937 = vcmp.gt.f32.partialorder %v2905, 0.0
        %vm2938 = vcmp.gt.f32.partialorder %v2906, 0.0
        %vm2939 = vcmp.gt.f32.partialorder %v2907, 0.0
        %vm2940 = vcmp.gt.f32.partialorder %v2908, 0.0
        %vm2941 = vcmp.gt.f32.partialorder %v2909, 0.0
        %vm2942 = vcmp.gt.f32.partialorder %v2910, 0.0
        %vm2943 = vcmp.gt.f32.partialorder %v2911, 0.0
        %vm2944 = vcmp.gt.f32.partialorder %v2912, 0.0
        %vm2945 = vcmp.gt.f32.partialorder %v2913, 0.0
        %vm2946 = vcmp.gt.f32.partialorder %v2914, 0.0
        %vm2947 = vcmp.gt.f32.partialorder %v2915, 0.0
        %vm2948 = vcmp.gt.f32.partialorder %v2916, 0.0
        %vm2949 = vcmp.gt.f32.partialorder %v2917, 0.0
        %vm2950 = vcmp.gt.f32.partialorder %v2918, 0.0
        %vm2951 = vcmp.gt.f32.partialorder %v2919, 0.0
        %vm2952 = vcmp.gt.f32.partialorder %v2920, 0.0
        %vm2953 = vcmp.gt.f32.partialorder %v2921, 0.0
        %vm2954 = vcmp.gt.f32.partialorder %v2922, 0.0
        %vm2955 = vcmp.gt.f32.partialorder %v2923, 0.0
        %vm2956 = vcmp.gt.f32.partialorder %v2924, 0.0
        %vm2957 = vcmp.gt.f32.partialorder %v2925, 0.0
        %vm2958 = vcmp.gt.f32.partialorder %v2926, 0.0
        %vm2959 = vcmp.gt.f32.partialorder %v2927, 0.0
        %vm2960 = vcmp.gt.f32.partialorder %v2928, 0.0
        %vm2961 = vcmp.gt.f32.partialorder %v2929, 0.0
        %vm2962 = vcmp.gt.f32.partialorder %v2930, 0.0
        %vm2963 = vcmp.gt.f32.partialorder %v2931, 0.0
        %vm2964 = vcmp.gt.f32.partialorder %v2932, 0.0
        %vm2965 = vcmp.gt.f32.partialorder %v2933, 0.0
        %vm2966 = vcmp.gt.f32.partialorder %v2934, 0.0
        %vm2967 = vcmp.gt.f32.partialorder %v2935, 0.0
        %vm2968 = vcmp.gt.f32.partialorder %v2936, 0.0
        %v2969 = vmul.f32 %v2905, 0.01
        %v2970 = vmul.f32 %v2906, 0.01
        %v2971 = vmul.f32 %v2907, 0.01
        %v2972 = vmul.f32 %v2908, 0.01
        %v2973 = vmul.f32 %v2909, 0.01
        %v2974 = vmul.f32 %v2910, 0.01
        %v2975 = vmul.f32 %v2911, 0.01
        %v2976 = vmul.f32 %v2912, 0.01
        %v2977 = vmul.f32 %v2913, 0.01
        %v2978 = vmul.f32 %v2914, 0.01
        %v2979 = vmul.f32 %v2915, 0.01
        %v2980 = vmul.f32 %v2916, 0.01
        %v2981 = vmul.f32 %v2917, 0.01
        %v2982 = vmul.f32 %v2918, 0.01
        %v2983 = vmul.f32 %v2919, 0.01
        %v2984 = vmul.f32 %v2920, 0.01
        %v2985 = vmul.f32 %v2921, 0.01
        %v2986 = vmul.f32 %v2922, 0.01
        %v2987 = vmul.f32 %v2923, 0.01
        %v2988 = vmul.f32 %v2924, 0.01
        %v2989 = vmul.f32 %v2925, 0.01
        %v2990 = vmul.f32 %v2926, 0.01
        %v2991 = vmul.f32 %v2927, 0.01
        %v2992 = vmul.f32 %v2928, 0.01
        %v2993 = vmul.f32 %v2929, 0.01
        %v2994 = vmul.f32 %v2930, 0.01
        %v2995 = vmul.f32 %v2931, 0.01
        %v2996 = vmul.f32 %v2932, 0.01
        %v2997 = vmul.f32 %v2933, 0.01
        %v2998 = vmul.f32 %v2934, 0.01
        %v2999 = vmul.f32 %v2935, 0.01
        %v3000 = vmul.f32 %v2936, 0.01
        %v3001 = vsel %vm2937, %v2905, %v2969
        %v3002 = vsel %vm2938, %v2906, %v2970
        %v3003 = vsel %vm2939, %v2907, %v2971
        %v3004 = vsel %vm2940, %v2908, %v2972
        %v3005 = vsel %vm2941, %v2909, %v2973
        %v3006 = vsel %vm2942, %v2910, %v2974
        %v3007 = vsel %vm2943, %v2911, %v2975
        %v3008 = vsel %vm2944, %v2912, %v2976
        %v3009 = vsel %vm2945, %v2913, %v2977
        %v3010 = vsel %vm2946, %v2914, %v2978
        %v3011 = vsel %vm2947, %v2915, %v2979
        %v3012 = vsel %vm2948, %v2916, %v2980
        %v3013 = vsel %vm2949, %v2917, %v2981
        %v3014 = vsel %vm2950, %v2918, %v2982
        %v3015 = vsel %vm2951, %v2919, %v2983
        %v3016 = vsel %vm2952, %v2920, %v2984
        %v3017 = vsel %vm2953, %v2921, %v2985
        %v3018 = vsel %vm2954, %v2922, %v2986
        %v3019 = vsel %vm2955, %v2923, %v2987
        %v3020 = vsel %vm2956, %v2924, %v2988
        %v3021 = vsel %vm2957, %v2925, %v2989
        %v3022 = vsel %vm2958, %v2926, %v2990
        %v3023 = vsel %vm2959, %v2927, %v2991
        %v3024 = vsel %vm2960, %v2928, %v2992
        %v3025 = vsel %vm2961, %v2929, %v2993
        %v3026 = vsel %vm2962, %v2930, %v2994
        %v3027 = vsel %vm2963, %v2931, %v2995
        %v3028 = vsel %vm2964, %v2932, %v2996
        %v3029 = vsel %vm2965, %v2933, %v2997
        %v3030 = vsel %vm2966, %v2934, %v2998
        %v3031 = vsel %vm2967, %v2935, %v2999
        %v3032 = vsel %vm2968, %v2936, %v3000
        %v3033 = vpack.c.bf16 %v3002, %v3001
        %v3034 = vpack.c.bf16 %v3004, %v3003
        %v3035 = vpack.c.bf16 %v3006, %v3005
        %v3036 = vpack.c.bf16 %v3008, %v3007
        %v3037 = vpack.c.bf16 %v3010, %v3009
        %v3038 = vpack.c.bf16 %v3012, %v3011
        %v3039 = vpack.c.bf16 %v3014, %v3013
        %v3040 = vpack.c.bf16 %v3016, %v3015
        %v3041 = vpack.c.bf16 %v3018, %v3017
        %v3042 = vpack.c.bf16 %v3020, %v3019
        %v3043 = vpack.c.bf16 %v3022, %v3021
        %v3044 = vpack.c.bf16 %v3024, %v3023
        %v3045 = vpack.c.bf16 %v3026, %v3025
        %v3046 = vpack.c.bf16 %v3028, %v3027
        %v3047 = vpack.c.bf16 %v3030, %v3029
        %v3048 = vpack.c.bf16 %v3032, %v3031
        %v3049 = vld [vmem:[%s5] sm:$0xf]
        %v3050 = vld [vmem:[%s5 + $0x4] sm:$0xf]
        %v3051 = vld [vmem:[%s5 + $0x8] sm:$0xf]
        %v3052 = vld [vmem:[%s5 + $0xc] sm:$0xf]
        %v3053 = vld [vmem:[%s5 + $0x10] sm:$0xf]
        %v3054 = vld [vmem:[%s5 + $0x14] sm:$0xf]
        %v3055 = vld [vmem:[%s5 + $0x18] sm:$0xf]
        %v3056 = vld [vmem:[%s5 + $0x1c] sm:$0xf]
        %v3057 = vld [vmem:[%s5 + $0x20] sm:$0xf]
        %v3058 = vld [vmem:[%s5 + $0x24] sm:$0xf]
        %v3059 = vld [vmem:[%s5 + $0x28] sm:$0xf]
        %v3060 = vld [vmem:[%s5 + $0x2c] sm:$0xf]
        %v3061 = vld [vmem:[%s5 + $0x30] sm:$0xf]
        %v3062 = vld [vmem:[%s5 + $0x34] sm:$0xf]
        %v3063 = vld [vmem:[%s5 + $0x38] sm:$0xf]
        %v3064 = vld [vmem:[%s5 + $0x3c] sm:$0xf]
        %v3065 = vld [vmem:[%s6] sm:$0x1]
        %v3067 = vlaneseq
        %v3068 = vshrl.u32 %v3067, 7
        %v3069 = vsub.s32 0, %v3068
        %v3070 = vrot.slane %v3065, %v3069
        %v3088 = vunpack.c.l.b16 %v3049
        %v3089 = vunpack.c.l.b16 %v3050
        %v3090 = vunpack.c.l.b16 %v3051
        %v3091 = vunpack.c.l.b16 %v3052
        %v3092 = vunpack.c.l.b16 %v3053
        %v3093 = vunpack.c.l.b16 %v3054
        %v3094 = vunpack.c.l.b16 %v3055
        %v3095 = vunpack.c.l.b16 %v3056
        %v3096 = vunpack.c.l.b16 %v3057
        %v3097 = vunpack.c.l.b16 %v3058
        %v3098 = vunpack.c.l.b16 %v3059
        %v3099 = vunpack.c.l.b16 %v3060
        %v3100 = vunpack.c.l.b16 %v3061
        %v3101 = vunpack.c.l.b16 %v3062
        %v3102 = vunpack.c.l.b16 %v3063
        %v3103 = vunpack.c.l.b16 %v3064
        %v3104 = vpack.c.b16 %v3089, %v3088
        %v3105 = vpack.c.b16 %v3091, %v3090
        %v3106 = vpack.c.b16 %v3093, %v3092
        %v3107 = vpack.c.b16 %v3095, %v3094
        %v3108 = vpack.c.b16 %v3097, %v3096
        %v3109 = vpack.c.b16 %v3099, %v3098
        %v3110 = vpack.c.b16 %v3101, %v3100
        %v3111 = vpack.c.b16 %v3103, %v3102
        %3120 = vmatprep.subr.bf16.mxu0 0
        %3121 = vmatpush1.bf16.msra.mxu0 %v3104
        %3122 = vmatprep.subr.bf16.mxu0 0
        %3123 = vmatpush1.bf16.msra.mxu0 %v3105
        %3124 = vmatprep.subr.bf16.mxu0 0
        %3125 = vmatpush1.bf16.msra.mxu0 %v3106
        %3126 = vmatprep.subr.bf16.mxu0 0
        %3127 = vmatpush1.bf16.msra.mxu0 %v3107
        %3128 = vmatprep.subr.bf16.mxu0 0
        %3129 = vmatpush1.bf16.msra.mxu0 %v3108
        %3130 = vmatprep.subr.bf16.mxu0 0
        %3131 = vmatpush1.bf16.msra.mxu0 %v3109
        %3132 = vmatprep.subr.bf16.mxu0 0
        %3133 = vmatpush1.bf16.msra.mxu0 %v3110
        %3134 = vmatprep.subr.bf16.mxu0 0
        %3135 = vmatpush1.bf16.msra.mxu0 %v3111
        %3136 = vmatprep.subr.bf16.mxu0 0
        %3137 = vmatpush1.bf16.msra.mxu0 0
        %3138 = vmatprep.subr.bf16.mxu0 0
        %3139 = vmatpush1.bf16.msra.mxu0 0
        %3140 = vmatprep.subr.bf16.mxu0 0
        %3141 = vmatpush1.bf16.msra.mxu0 0
        %3142 = vmatprep.subr.bf16.mxu0 0
        %3143 = vmatpush1.bf16.msra.mxu0 0
        %3144 = vmatprep.subr.bf16.mxu0 0
        %3145 = vmatpush1.bf16.msra.mxu0 0
        %3146 = vmatprep.subr.bf16.mxu0 0
        %3147 = vmatpush1.bf16.msra.mxu0 0
        %3148 = vmatprep.subr.bf16.mxu0 0
        %3149 = vmatpush1.bf16.msra.mxu0 0
        %3150 = vmatprep.subr.bf16.mxu0 0
        %3151 = vmatpush1.bf16.msra.mxu0 0
        %3152 = vmatprep.mubr.bf16.mxu0 0
        %3153 = vmatmul.mubr.bf16.gmra.mrb[0].mxu0 %v3033
        %v3154 = vpop.f32.mrb[0].mxu0
        %v3155 = vadd.f32 %v3070, %v3154
        %v3156 = vpop.f32.mrb[0].mxu0
        %v3157 = vpop.f32.mrb[0].mxu0
        %v3158 = vadd.f32 %v3070, %v3157
        %v3159 = vpop.f32.mrb[0].mxu0
        %3160 = vmatprep.mubr.bf16.mxu0 0
        %3161 = vmatmul.mubr.bf16.gmra.mrb[0].mxu0 %v3034
        %v3162 = vpop.f32.mrb[0].mxu0
        %v3163 = vadd.f32 %v3070, %v3162
        %v3164 = vpop.f32.mrb[0].mxu0
        %v3165 = vpop.f32.mrb[0].mxu0
        %v3166 = vadd.f32 %v3070, %v3165
        %v3167 = vpop.f32.mrb[0].mxu0
        %3168 = vmatprep.mubr.bf16.mxu0 0
        %3169 = vmatmul.mubr.bf16.gmra.mrb[0].mxu0 %v3035
        %v3170 = vpop.f32.mrb[0].mxu0
        %v3171 = vadd.f32 %v3070, %v3170
        %v3172 = vpop.f32.mrb[0].mxu0
        %v3173 = vpop.f32.mrb[0].mxu0
        %v3174 = vadd.f32 %v3070, %v3173
        %v3175 = vpop.f32.mrb[0].mxu0
        %3176 = vmatprep.mubr.bf16.mxu0 0
        %3177 = vmatmul.mubr.bf16.gmra.mrb[0].mxu0 %v3036
        %v3178 = vpop.f32.mrb[0].mxu0
        %v3179 = vadd.f32 %v3070, %v3178
        %v3180 = vpop.f32.mrb[0].mxu0
        %v3181 = vpop.f32.mrb[0].mxu0
        %v3182 = vadd.f32 %v3070, %v3181
        %v3183 = vpop.f32.mrb[0].mxu0
        %3184 = vmatprep.mubr.bf16.mxu0 0
        %3185 = vmatmul.mubr.bf16.gmra.mrb[0].mxu0 %v3037
        %v3186 = vpop.f32.mrb[0].mxu0
        %v3187 = vadd.f32 %v3070, %v3186
        %v3188 = vpop.f32.mrb[0].mxu0
        %v3189 = vpop.f32.mrb[0].mxu0
        %v3190 = vadd.f32 %v3070, %v3189
        %v3191 = vpop.f32.mrb[0].mxu0
        %3192 = vmatprep.mubr.bf16.mxu0 0
        %3193 = vmatmul.mubr.bf16.gmra.mrb[0].mxu0 %v3038
        %v3194 = vpop.f32.mrb[0].mxu0
        %v3195 = vadd.f32 %v3070, %v3194
        %v3196 = vpop.f32.mrb[0].mxu0
        %v3197 = vpop.f32.mrb[0].mxu0
        %v3198 = vadd.f32 %v3070, %v3197
        %v3199 = vpop.f32.mrb[0].mxu0
        %3200 = vmatprep.mubr.bf16.mxu0 0
        %3201 = vmatmul.mubr.bf16.gmra.mrb[0].mxu0 %v3039
        %v3202 = vpop.f32.mrb[0].mxu0
        %v3203 = vadd.f32 %v3070, %v3202
        %v3204 = vpop.f32.mrb[0].mxu0
        %v3205 = vpop.f32.mrb[0].mxu0
        %v3206 = vadd.f32 %v3070, %v3205
        %v3207 = vpop.f32.mrb[0].mxu0
        %3208 = vmatprep.mubr.bf16.mxu0 0
        %3209 = vmatmul.mubr.bf16.gmra.mrb[0].mxu0 %v3040
        %v3210 = vpop.f32.mrb[0].mxu0
        %v3211 = vadd.f32 %v3070, %v3210
        %v3212 = vpop.f32.mrb[0].mxu0
        %v3213 = vpop.f32.mrb[0].mxu0
        %v3214 = vadd.f32 %v3070, %v3213
        %v3215 = vpop.f32.mrb[0].mxu0
        %3216 = vmatprep.mubr.bf16.mxu0 0
        %3217 = vmatmul.mubr.bf16.gmra.mrb[0].mxu0 %v3041
        %v3218 = vpop.f32.mrb[0].mxu0
        %v3219 = vadd.f32 %v3070, %v3218
        %v3220 = vpop.f32.mrb[0].mxu0
        %v3221 = vpop.f32.mrb[0].mxu0
        %v3222 = vadd.f32 %v3070, %v3221
        %v3223 = vpop.f32.mrb[0].mxu0
        %3224 = vmatprep.mubr.bf16.mxu0 0
        %3225 = vmatmul.mubr.bf16.gmra.mrb[0].mxu0 %v3042
        %v3226 = vpop.f32.mrb[0].mxu0
        %v3227 = vadd.f32 %v3070, %v3226
        %v3228 = vpop.f32.mrb[0].mxu0
        %v3229 = vpop.f32.mrb[0].mxu0
        %v3230 = vadd.f32 %v3070, %v3229
        %v3231 = vpop.f32.mrb[0].mxu0
        %3232 = vmatprep.mubr.bf16.mxu0 0
        %3233 = vmatmul.mubr.bf16.gmra.mrb[0].mxu0 %v3043
        %v3234 = vpop.f32.mrb[0].mxu0
        %v3235 = vadd.f32 %v3070, %v3234
        %v3236 = vpop.f32.mrb[0].mxu0
        %v3237 = vpop.f32.mrb[0].mxu0
        %v3238 = vadd.f32 %v3070, %v3237
        %v3239 = vpop.f32.mrb[0].mxu0
        %3240 = vmatprep.mubr.bf16.mxu0 0
        %3241 = vmatmul.mubr.bf16.gmra.mrb[0].mxu0 %v3044
        %v3242 = vpop.f32.mrb[0].mxu0
        %v3243 = vadd.f32 %v3070, %v3242
        %v3244 = vpop.f32.mrb[0].mxu0
        %v3245 = vpop.f32.mrb[0].mxu0
        %v3246 = vadd.f32 %v3070, %v3245
        %v3247 = vpop.f32.mrb[0].mxu0
        %3248 = vmatprep.mubr.bf16.mxu0 0
        %3249 = vmatmul.mubr.bf16.gmra.mrb[0].mxu0 %v3045
        %v3250 = vpop.f32.mrb[0].mxu0
        %v3251 = vadd.f32 %v3070, %v3250
        %v3252 = vpop.f32.mrb[0].mxu0
        %v3253 = vpop.f32.mrb[0].mxu0
        %v3254 = vadd.f32 %v3070, %v3253
        %v3255 = vpop.f32.mrb[0].mxu0
        %3256 = vmatprep.mubr.bf16.mxu0 0
        %3257 = vmatmul.mubr.bf16.gmra.mrb[0].mxu0 %v3046
        %v3258 = vpop.f32.mrb[0].mxu0
        %v3259 = vadd.f32 %v3070, %v3258
        %v3260 = vpop.f32.mrb[0].mxu0
        %v3261 = vpop.f32.mrb[0].mxu0
        %v3262 = vadd.f32 %v3070, %v3261
        %v3263 = vpop.f32.mrb[0].mxu0
        %3264 = vmatprep.mubr.bf16.mxu0 0
        %3265 = vmatmul.mubr.bf16.gmra.mrb[0].mxu0 %v3047
        %v3266 = vpop.f32.mrb[0].mxu0
        %v3267 = vadd.f32 %v3070, %v3266
        %v3268 = vpop.f32.mrb[0].mxu0
        %v3269 = vpop.f32.mrb[0].mxu0
        %v3270 = vadd.f32 %v3070, %v3269
        %v3271 = vpop.f32.mrb[0].mxu0
        %3272 = vmatprep.mubr.bf16.mxu0 0
        %3273 = vmatmul.mubr.bf16.gmra.mrb[0].mxu0 %v3048
        %v3274 = vpop.f32.mrb[0].mxu0
        %v3275 = vadd.f32 %v3070, %v3274
        %v3276 = vpop.f32.mrb[0].mxu0
        %v3277 = vpop.f32.mrb[0].mxu0
        %v3278 = vadd.f32 %v3070, %v3277
        %v3279 = vpop.f32.mrb[0].mxu0
        %3280 = vdwg.mxu0
        %v3281 = vunpack.c.l.bf16 %v313
        %v3282 = vunpack.c.l.bf16 %v314
        %v3283 = vunpack.c.l.bf16 %v315
        %v3284 = vunpack.c.l.bf16 %v316
        %v3285 = vunpack.c.l.bf16 %v317
        %v3286 = vunpack.c.l.bf16 %v318
        %v3287 = vunpack.c.l.bf16 %v319
        %v3288 = vunpack.c.l.bf16 %v320
        %v3289 = vunpack.c.l.bf16 %v321
        %v3290 = vunpack.c.l.bf16 %v322
        %v3291 = vunpack.c.l.bf16 %v323
        %v3292 = vunpack.c.l.bf16 %v324
        %v3293 = vunpack.c.l.bf16 %v325
        %v3294 = vunpack.c.l.bf16 %v326
        %v3295 = vunpack.c.l.bf16 %v327
        %v3296 = vunpack.c.l.bf16 %v328
        %v3297 = vunpack.c.l.bf16 %v329
        %v3298 = vunpack.c.l.bf16 %v330
        %v3299 = vunpack.c.l.bf16 %v331
        %v3300 = vunpack.c.l.bf16 %v332
        %v3301 = vunpack.c.l.bf16 %v333
        %v3302 = vunpack.c.l.bf16 %v334
        %v3303 = vunpack.c.l.bf16 %v335
        %v3304 = vunpack.c.l.bf16 %v336
        %v3305 = vunpack.c.l.bf16 %v337
        %v3306 = vunpack.c.l.bf16 %v338
        %v3307 = vunpack.c.l.bf16 %v339
        %v3308 = vunpack.c.l.bf16 %v340
        %v3309 = vunpack.c.l.bf16 %v341
        %v3310 = vunpack.c.l.bf16 %v342
        %v3311 = vunpack.c.l.bf16 %v343
        %v3312 = vunpack.c.l.bf16 %v344
        %v3313 = vadd.f32 %v3155, %v3281
        %v3314 = vadd.f32 %v3158, %v3282
        %v3315 = vadd.f32 %v3163, %v3283
        %v3316 = vadd.f32 %v3166, %v3284
        %v3317 = vadd.f32 %v3171, %v3285
        %v3318 = vadd.f32 %v3174, %v3286
        %v3319 = vadd.f32 %v3179, %v3287
        %v3320 = vadd.f32 %v3182, %v3288
        %v3321 = vadd.f32 %v3187, %v3289
        %v3322 = vadd.f32 %v3190, %v3290
        %v3323 = vadd.f32 %v3195, %v3291
        %v3324 = vadd.f32 %v3198, %v3292
        %v3325 = vadd.f32 %v3203, %v3293
        %v3326 = vadd.f32 %v3206, %v3294
        %v3327 = vadd.f32 %v3211, %v3295
        %v3328 = vadd.f32 %v3214, %v3296
        %v3329 = vadd.f32 %v3219, %v3297
        %v3330 = vadd.f32 %v3222, %v3298
        %v3331 = vadd.f32 %v3227, %v3299
        %v3332 = vadd.f32 %v3230, %v3300
        %v3333 = vadd.f32 %v3235, %v3301
        %v3334 = vadd.f32 %v3238, %v3302
        %v3335 = vadd.f32 %v3243, %v3303
        %v3336 = vadd.f32 %v3246, %v3304
        %v3337 = vadd.f32 %v3251, %v3305
        %v3338 = vadd.f32 %v3254, %v3306
        %v3339 = vadd.f32 %v3259, %v3307
        %v3340 = vadd.f32 %v3262, %v3308
        %v3341 = vadd.f32 %v3267, %v3309
        %v3342 = vadd.f32 %v3270, %v3310
        %v3343 = vadd.f32 %v3275, %v3311
        %v3344 = vadd.f32 %v3278, %v3312
        %vm3345 = vcmp.gt.f32.partialorder %v3313, 0.0
        %vm3346 = vcmp.gt.f32.partialorder %v3314, 0.0
        %vm3347 = vcmp.gt.f32.partialorder %v3315, 0.0
        %vm3348 = vcmp.gt.f32.partialorder %v3316, 0.0
        %vm3349 = vcmp.gt.f32.partialorder %v3317, 0.0
        %vm3350 = vcmp.gt.f32.partialorder %v3318, 0.0
        %vm3351 = vcmp.gt.f32.partialorder %v3319, 0.0
        %vm3352 = vcmp.gt.f32.partialorder %v3320, 0.0
        %vm3353 = vcmp.gt.f32.partialorder %v3321, 0.0
        %vm3354 = vcmp.gt.f32.partialorder %v3322, 0.0
        %vm3355 = vcmp.gt.f32.partialorder %v3323, 0.0
        %vm3356 = vcmp.gt.f32.partialorder %v3324, 0.0
        %vm3357 = vcmp.gt.f32.partialorder %v3325, 0.0
        %vm3358 = vcmp.gt.f32.partialorder %v3326, 0.0
        %vm3359 = vcmp.gt.f32.partialorder %v3327, 0.0
        %vm3360 = vcmp.gt.f32.partialorder %v3328, 0.0
        %vm3361 = vcmp.gt.f32.partialorder %v3329, 0.0
        %vm3362 = vcmp.gt.f32.partialorder %v3330, 0.0
        %vm3363 = vcmp.gt.f32.partialorder %v3331, 0.0
        %vm3364 = vcmp.gt.f32.partialorder %v3332, 0.0
        %vm3365 = vcmp.gt.f32.partialorder %v3333, 0.0
        %vm3366 = vcmp.gt.f32.partialorder %v3334, 0.0
        %vm3367 = vcmp.gt.f32.partialorder %v3335, 0.0
        %vm3368 = vcmp.gt.f32.partialorder %v3336, 0.0
        %vm3369 = vcmp.gt.f32.partialorder %v3337, 0.0
        %vm3370 = vcmp.gt.f32.partialorder %v3338, 0.0
        %vm3371 = vcmp.gt.f32.partialorder %v3339, 0.0
        %vm3372 = vcmp.gt.f32.partialorder %v3340, 0.0
        %vm3373 = vcmp.gt.f32.partialorder %v3341, 0.0
        %vm3374 = vcmp.gt.f32.partialorder %v3342, 0.0
        %vm3375 = vcmp.gt.f32.partialorder %v3343, 0.0
        %vm3376 = vcmp.gt.f32.partialorder %v3344, 0.0
        %v3377 = vmul.f32 %v3313, 0.01
        %v3378 = vmul.f32 %v3314, 0.01
        %v3379 = vmul.f32 %v3315, 0.01
        %v3380 = vmul.f32 %v3316, 0.01
        %v3381 = vmul.f32 %v3317, 0.01
        %v3382 = vmul.f32 %v3318, 0.01
        %v3383 = vmul.f32 %v3319, 0.01
        %v3384 = vmul.f32 %v3320, 0.01
        %v3385 = vmul.f32 %v3321, 0.01
        %v3386 = vmul.f32 %v3322, 0.01
        %v3387 = vmul.f32 %v3323, 0.01
        %v3388 = vmul.f32 %v3324, 0.01
        %v3389 = vmul.f32 %v3325, 0.01
        %v3390 = vmul.f32 %v3326, 0.01
        %v3391 = vmul.f32 %v3327, 0.01
        %v3392 = vmul.f32 %v3328, 0.01
        %v3393 = vmul.f32 %v3329, 0.01
        %v3394 = vmul.f32 %v3330, 0.01
        %v3395 = vmul.f32 %v3331, 0.01
        %v3396 = vmul.f32 %v3332, 0.01
        %v3397 = vmul.f32 %v3333, 0.01
        %v3398 = vmul.f32 %v3334, 0.01
        %v3399 = vmul.f32 %v3335, 0.01
        %v3400 = vmul.f32 %v3336, 0.01
        %v3401 = vmul.f32 %v3337, 0.01
        %v3402 = vmul.f32 %v3338, 0.01
        %v3403 = vmul.f32 %v3339, 0.01
        %v3404 = vmul.f32 %v3340, 0.01
        %v3405 = vmul.f32 %v3341, 0.01
        %v3406 = vmul.f32 %v3342, 0.01
        %v3407 = vmul.f32 %v3343, 0.01
        %v3408 = vmul.f32 %v3344, 0.01
        %v3409 = vsel %vm3345, %v3313, %v3377
        %v3410 = vsel %vm3346, %v3314, %v3378
        %v3411 = vsel %vm3347, %v3315, %v3379
        %v3412 = vsel %vm3348, %v3316, %v3380
        %v3413 = vsel %vm3349, %v3317, %v3381
        %v3414 = vsel %vm3350, %v3318, %v3382
        %v3415 = vsel %vm3351, %v3319, %v3383
        %v3416 = vsel %vm3352, %v3320, %v3384
        %v3417 = vsel %vm3353, %v3321, %v3385
        %v3418 = vsel %vm3354, %v3322, %v3386
        %v3419 = vsel %vm3355, %v3323, %v3387
        %v3420 = vsel %vm3356, %v3324, %v3388
        %v3421 = vsel %vm3357, %v3325, %v3389
        %v3422 = vsel %vm3358, %v3326, %v3390
        %v3423 = vsel %vm3359, %v3327, %v3391
        %v3424 = vsel %vm3360, %v3328, %v3392
        %v3425 = vsel %vm3361, %v3329, %v3393
        %v3426 = vsel %vm3362, %v3330, %v3394
        %v3427 = vsel %vm3363, %v3331, %v3395
        %v3428 = vsel %vm3364, %v3332, %v3396
        %v3429 = vsel %vm3365, %v3333, %v3397
        %v3430 = vsel %vm3366, %v3334, %v3398
        %v3431 = vsel %vm3367, %v3335, %v3399
        %v3432 = vsel %vm3368, %v3336, %v3400
        %v3433 = vsel %vm3369, %v3337, %v3401
        %v3434 = vsel %vm3370, %v3338, %v3402
        %v3435 = vsel %vm3371, %v3339, %v3403
        %v3436 = vsel %vm3372, %v3340, %v3404
        %v3437 = vsel %vm3373, %v3341, %v3405
        %v3438 = vsel %vm3374, %v3342, %v3406
        %v3439 = vsel %vm3375, %v3343, %v3407
        %v3440 = vsel %vm3376, %v3344, %v3408
        %3441 = vst.msk [vmem:[%s311] sm:$0xff] %vm440, %v3409
        %3442 = vst.msk [vmem:[%s311 + $0x8] sm:$0xff] %vm440, %v3410
        %3443 = vst.msk [vmem:[%s311 + $0x10] sm:$0xff] %vm440, %v3411
        %3444 = vst.msk [vmem:[%s311 + $0x18] sm:$0xff] %vm440, %v3412
        %3445 = vst.msk [vmem:[%s311 + $0x20] sm:$0xff] %vm440, %v3413
        %3446 = vst.msk [vmem:[%s311 + $0x28] sm:$0xff] %vm440, %v3414
        %3447 = vst.msk [vmem:[%s311 + $0x30] sm:$0xff] %vm440, %v3415
        %3448 = vst.msk [vmem:[%s311 + $0x38] sm:$0xff] %vm440, %v3416
        %3449 = vst.msk [vmem:[%s311 + $0x40] sm:$0xff] %vm440, %v3417
        %3450 = vst.msk [vmem:[%s311 + $0x48] sm:$0xff] %vm440, %v3418
        %3451 = vst.msk [vmem:[%s311 + $0x50] sm:$0xff] %vm440, %v3419
        %3452 = vst.msk [vmem:[%s311 + $0x58] sm:$0xff] %vm440, %v3420
        %3453 = vst.msk [vmem:[%s311 + $0x60] sm:$0xff] %vm440, %v3421
        %3454 = vst.msk [vmem:[%s311 + $0x68] sm:$0xff] %vm440, %v3422
        %3455 = vst.msk [vmem:[%s311 + $0x70] sm:$0xff] %vm440, %v3423
        %3456 = vst.msk [vmem:[%s311 + $0x78] sm:$0xff] %vm440, %v3424
        %3457 = vst.msk [vmem:[%s311 + $0x80] sm:$0xff] %vm440, %v3425
        %3458 = vst.msk [vmem:[%s311 + $0x88] sm:$0xff] %vm440, %v3426
        %3459 = vst.msk [vmem:[%s311 + $0x90] sm:$0xff] %vm440, %v3427
        %3460 = vst.msk [vmem:[%s311 + $0x98] sm:$0xff] %vm440, %v3428
        %3461 = vst.msk [vmem:[%s311 + $0xa0] sm:$0xff] %vm440, %v3429
        %3462 = vst.msk [vmem:[%s311 + $0xa8] sm:$0xff] %vm440, %v3430
        %3463 = vst.msk [vmem:[%s311 + $0xb0] sm:$0xff] %vm440, %v3431
        %3464 = vst.msk [vmem:[%s311 + $0xb8] sm:$0xff] %vm440, %v3432
        %3465 = vst.msk [vmem:[%s311 + $0xc0] sm:$0xff] %vm440, %v3433
        %3466 = vst.msk [vmem:[%s311 + $0xc8] sm:$0xff] %vm440, %v3434
        %3467 = vst.msk [vmem:[%s311 + $0xd0] sm:$0xff] %vm440, %v3435
        %3468 = vst.msk [vmem:[%s311 + $0xd8] sm:$0xff] %vm440, %v3436
        %3469 = vst.msk [vmem:[%s311 + $0xe0] sm:$0xff] %vm440, %v3437
        %3470 = vst.msk [vmem:[%s311 + $0xe8] sm:$0xff] %vm440, %v3438
        %3471 = vst.msk [vmem:[%s311 + $0xf0] sm:$0xff] %vm440, %v3439
        %3472 = vst.msk [vmem:[%s311 + $0xf8] sm:$0xff] %vm440, %v3440
        %s3473 = sand.u32 %s185, 1
        %s3474 = scalar_lea.sflag [#allocation5], %s3473
        %s3475 = sand.u32 %s185, 1
        %s3476 = smul.addr %s3475, 256
        %s3477 = scalar_lea.vmem [#allocation8], %s3476
        // Predicated region
        $region57: #{tpu_custom_call.1} parent=47 // pred_check
          %p3478 = pneg %p195
        $region58: #{tpu_custom_call.1} parent=47 // pred_check_branch
          %3480 = sbr.rel (%p3478) target = $region60
        $region59: #{tpu_custom_call.1} parent=47 // pred_region
          %s3482 = ssub.s32 4096, 4096
          %3483 = vsyncadd %s3474, %s3482
          %s3484 = smul.addr %s25, 32
          %s3485 = smul.addr %s3484, 128
          %s3486 = scalar_lea.hbm %s7, %s3485
          %s3487 = sshll.u32 %s3477, 4
          %s3488 = int_to_ptr.vmem [resolvable:$true] %s3487
          %3493 = dma.vmem_to_hbm [thread:$0]  %s3488, 4096, %s3486, %s3474, 128, 128, 8
        $region60: #{tpu_custom_call.1} parent=47 // pred_fallthru
          _
      $region48: #{tpu_custom_call.1} parent=5 // pred_fallthru
        _
      %p3494 = scmp.le.s32.totalorder 2, %s20
      // Predicated region
      $region61: #{tpu_custom_call.1} parent=5 // pred_check
        %p3495 = pneg %p3494
      $region62: #{tpu_custom_call.1} parent=5 // pred_check_branch
        %3497 = sbr.rel (%p3495) target = $region64
      $region63: #{tpu_custom_call.1} parent=5 // pred_region
        %s3498 = ssub.s32 %s20, 2
        // Predicated region
        $region65: #{tpu_custom_call.1} parent=63 // pred_check
          %p3499 = pneg %p201
        $region66: #{tpu_custom_call.1} parent=63 // pred_check_branch
          %3501 = sbr.rel (%p3499) target = $region68
        $region67: #{tpu_custom_call.1} parent=63 // pred_region
          %s3502 = sand.u32 %s186, 1
          %s3503 = scalar_lea.sflag [#allocation5], %s3502
          %s3504 = sand.u32 %s186, 1
          %s3505 = smul.addr %s3504, 256
          %s3506 = scalar_lea.vmem [#allocation8], %s3505
          %3507 = dma.done %s3503, 4096
        $region68: #{tpu_custom_call.1} parent=63 // pred_fallthru
          _
      $region64: #{tpu_custom_call.1} parent=5 // pred_fallthru
        _
    $region6: #{tpu_custom_call.1} parent=1 // loop_footer
      %s24 = sadd.s32 1, %s20
    $region7: #{tpu_custom_call.1} parent=1 // loop_footer_branch
      %19 = sbr.rel target = $region3
    $region8: #{tpu_custom_call.1} parent=1 // loop_exit
      _
    %3508 = vsyncpa [#allocation4], 1
    %s3509 = scalar_lea.sflag [#allocation4], 1
    %3510 = vsyncpa %s3509, 1
    %3511 = vsyncpa [#allocation7], 1
    %3512 = vsyncpa [#allocation5], 1
    %s3513 = scalar_lea.sflag [#allocation5], 1
    %3514 = vsyncpa %s3513, 1

</llo_original>
